<compile_context>
chip_gen: v5e
topology: v5e:2x2
jax: 0.10.0
libtpu: 0.0.40
codegen_flags: <defaults>
</compile_context>

<pallas_src>
import jax
import jax.numpy as jnp
from jax import lax
from jax.experimental import pallas as pl
from jax.experimental.pallas import tpu as pltpu


# -----------------------------------------------------------------------------
# Per-generation VMEM budget (96 MiB on 128-MiB chips, 48 MiB on v7x, 32 MiB
# fallback if the query fails).
# -----------------------------------------------------------------------------
def _pick_vmem_limit():
    default = 32 * 1024 * 1024
    try:
        phys = int(pltpu.get_tpu_info().vmem_capacity_bytes)
    except Exception:  # pragma: no cover - conservative fallback
        return default
    return max(default, min(3 * phys // 4, 96 * 1024 * 1024))


_VMEM_LIMIT = _pick_vmem_limit()


def _largest_divisor(n, target, align):
    """Largest divisor of n that is <= target and a multiple of align."""
    if n <= target:
        return n
    for t in range(target, align - 1, -1):
        if n % t == 0 and t % align == 0:
            return t
    # TODO(synk): pad instead of falling back to the full extent for awkward
    # (e.g. prime) sizes; full-extent tiles can exceed VMEM at huge vocab.
    return n


def _pick_time_chunk(T, B, target=128):
    """Time-chunk length: divides T and keeps (Tc*B) sublane-aligned."""
    if T <= target:
        return T
    for t in range(target, 0, -1):
        if T % t == 0 and (t * B) % 8 == 0:
            return t
    return T


# -----------------------------------------------------------------------------
# Bidirectional LSTM layer kernel.
#
# Grid: (direction in {0: fw, 1: bw}, time chunk).  Direction is "parallel"
# (one direction per TensorCore on v7x); the chunk axis is "arbitrary" and the
# recurrent state lives in the chunk-resident h_n / c_n output blocks.
# -----------------------------------------------------------------------------
def _bilstm_dir_kernel(x_ref, wih_ref, whh_ref, b_ref,
                       hseq_ref, hn_ref, cn_ref, gx_sc):
    """One direction x one time chunk of an LSTM layer.

    x_ref:    (P, Tc*B, Dp)  time-major input rows, P reduction parts (fp32)
    wih_ref:  (P*Dp, 4H)     this direction's W_ih^T (bf16)
    whh_ref:  (H, 4H)        this direction's W_hh^T (bf16)
    b_ref:    (1, 4H)        b_ih + b_hh (fp32)
    hseq_ref: (Tc, B, H)     per-step hidden outputs for this (dir, chunk)
    hn_ref:   (B, H)         recurrent h state (resident across chunks; final h_n)
    cn_ref:   (B, H)         recurrent c state (resident across chunks; final c_n)
    gx_sc:    (Tc*B, 4H)     precomputed input projections for this chunk
    """
    Tc, B, H = hseq_ref.shape
    G = 4 * H
    P = x_ref.shape[0]
    Dp = x_ref.shape[2]

    d = pl.program_id(0)          # 0 = forward, 1 = backward
    c = pl.program_id(1)          # chunk index (per-direction sweep order)

    # --- hoisted chunk input projection: one MXU matmul per reduction part ---
    acc = jnp.zeros((Tc * B, G), jnp.float32)
    for p in range(P):
        acc = acc + jnp.dot(x_ref[p].astype(jnp.bfloat16),
                            wih_ref[p * Dp:(p + 1) * Dp, :],
                            preferred_element_type=jnp.float32)
    gx_sc[...] = acc + b_ref[...]

    # Recurrent weights hoisted out of the time loop.
    whh = whh_ref[...]

    # Zero initial state at the start of each direction's sweep (hidden=None).
    @pl.when(c == 0)
    def _():
        hn_ref[...] = jnp.zeros_like(hn_ref)
        cn_ref[...] = jnp.zeros_like(cn_ref)

    # Full-vreg activations + one hoisted lane-mask select instead of four
    # 32-lane sliced EUP calls per step.
    lane = lax.broadcasted_iota(jnp.int32, (B, G), 1)
    g_mask = (lane >= 2 * H) & (lane < 3 * H)

    def step(s, carry):
        h_prev, c_prev = carry
        # forward: t = s ; backward: t = Tc-1-s (reverse in place, no flips)
        t = s + d * (Tc - 1 - 2 * s)
        gates = gx_sc[pl.ds(t * B, B), :] + jnp.dot(
            h_prev.astype(jnp.bfloat16), whh,
            preferred_element_type=jnp.float32)
        act = jnp.where(g_mask, jnp.tanh(gates), jax.nn.sigmoid(gates))
        i_g = act[:, 0:H]
        f_g = act[:, H:2 * H]
        g_g = act[:, 2 * H:3 * H]
        o_g = act[:, 3 * H:]
        c_new = f_g * c_prev + i_g * g_g
        h_new = o_g * jnp.tanh(c_new)
        hseq_ref[t] = h_new
        return h_new, c_new

    # State carried in vregs across the chunk (no per-step VMEM state I/O);
    # refs are read once before and written once after the loop.
    h_fin, c_fin = lax.fori_loop(0, Tc, step, (hn_ref[...], cn_ref[...]),
                                 unroll=bool(Tc <= 32))
    hn_ref[...] = h_fin
    cn_ref[...] = c_fin


def bidir_lstm_layer(x_parts, lp, T, B):
    """Run both directions of one LSTM layer.

    x_parts: (P, T*B, Dp) fp32 time-major rows (P = 1 for layer 0, 2 afterwards)
    Returns hseq (2, T, B, H), h_n (2, B, H), c_n (2, B, H)   [index 0 fw, 1 bw]
    """
    P, TB, Dp = x_parts.shape
    H = lp["w_hh"].shape[1]
    G = 4 * H
    Tc = _pick_time_chunk(T, B)
    nc = T // Tc

    def chk(d, c):
        # forward sweeps chunks 0..nc-1, backward sweeps nc-1..0
        return c + d * (nc - 1 - 2 * c)

    return pl.pallas_call(
        _bilstm_dir_kernel,
        out_shape=(
            jax.ShapeDtypeStruct((2, T, B, H), jnp.float32),   # hseq, dir-major
            jax.ShapeDtypeStruct((2, B, H), jnp.float32),      # h_n (fw, bw)
            jax.ShapeDtypeStruct((2, B, H), jnp.float32),      # c_n (fw, bw)
        ),
        grid=(2, nc),
        in_specs=[
            pl.BlockSpec((P, Tc * B, Dp), lambda d, c: (0, chk(d, c), 0)),
            pl.BlockSpec((None, P * Dp, G), lambda d, c: (d, 0, 0)),
            pl.BlockSpec((None, H, G), lambda d, c: (d, 0, 0)),
            pl.BlockSpec((None, 1, G), lambda d, c: (d, 0, 0)),
        ],
        out_specs=(
            pl.BlockSpec((None, Tc, B, H), lambda d, c: (d, chk(d, c), 0, 0)),
            pl.BlockSpec((None, B, H), lambda d, c: (d, 0, 0)),
            pl.BlockSpec((None, B, H), lambda d, c: (d, 0, 0)),
        ),
        scratch_shapes=[pltpu.VMEM((Tc * B, G), jnp.float32)],
        compiler_params=pltpu.CompilerParams(
            dimension_semantics=("parallel", "arbitrary"),
            vmem_limit_bytes=_VMEM_LIMIT),
    )(x_parts, lp["w_ih"].astype(jnp.bfloat16),
      lp["w_hh"].astype(jnp.bfloat16), lp["b"])


# -----------------------------------------------------------------------------
# FC + ReLU + log_softmax head.  No (N, V) intermediate is written to HBM.
# -----------------------------------------------------------------------------
def _fc_head_fused_kernel(x_ref, w_ref, b_ref, o_ref):
    """Single pass (whole vocab in one tile): out = log_softmax(relu(xW + b))."""
    z = jnp.dot(x_ref[...].astype(jnp.bfloat16), w_ref[...],
                preferred_element_type=jnp.float32) + b_ref[...]
    z = jnp.maximum(z, 0.0)
    m = jnp.max(z, axis=-1, keepdims=True)
    lse = m + jnp.log(jnp.sum(jnp.exp(z - m), axis=-1, keepdims=True))
    o_ref[...] = (z - lse).astype(o_ref.dtype)


def _fc_head_stats_kernel(x_ref, w_ref, b_ref, lse_ref, m_sc, l_sc):
    """Pass 1 (large vocab): online row logsumexp of relu(xW+b); z is NOT stored."""
    j = pl.program_id(1)

    @pl.when(j == 0)
    def _():
        m_sc[...] = jnp.full(m_sc.shape, -jnp.inf, dtype=m_sc.dtype)
        l_sc[...] = jnp.zeros_like(l_sc)

    z = jnp.dot(x_ref[...].astype(jnp.bfloat16), w_ref[...],
                preferred_element_type=jnp.float32) + b_ref[...]
    z = jnp.maximum(z, 0.0)

    m_prev = m_sc[...]
    m_new = jnp.maximum(m_prev, jnp.max(z, axis=-1, keepdims=True))
    l_sc[...] = (l_sc[...] * jnp.exp(m_prev - m_new)
                 + jnp.sum(jnp.exp(z - m_new), axis=-1, keepdims=True))
    m_sc[...] = m_new

    @pl.when(j == pl.num_programs(1) - 1)
    def _():
        lse_ref[...] = m_sc[...] + jnp.log(l_sc[...])


def _fc_head_finalize_kernel(x_ref, w_ref, b_ref, lse_ref, o_ref):
    """Pass 2 (large vocab): recompute z and write out = z - lse (no z HBM I/O)."""
    z = jnp.dot(x_ref[...].astype(jnp.bfloat16), w_ref[...],
                preferred_element_type=jnp.float32) + b_ref[...]
    z = jnp.maximum(z, 0.0)
    o_ref[...] = (z - lse_ref[...]).astype(o_ref.dtype)


def fc_head(x, w, b):
    """log_softmax(relu(x @ W + b), axis=-1) over (N, H) rows."""
    N, H = x.shape
    V = w.shape[1]
    tn = _largest_divisor(N, 512, 8)       # row tile (sublane aligned)
    tv = _largest_divisor(V, 2048, 128)    # vocab tile (lane aligned)
    w_bf = w.astype(jnp.bfloat16)

    if tv == V:  # whole vocab fits one tile -> single fused kernel
        return pl.pallas_call(
            _fc_head_fused_kernel,
            out_shape=jax.ShapeDtypeStruct((N, V), jnp.float32),
            grid=(N // tn,),
            in_specs=[pl.BlockSpec((tn, H), lambda i: (i, 0)),
                      pl.BlockSpec((H, V), lambda i: (0, 0)),
                      pl.BlockSpec((1, V), lambda i: (0, 0))],
            out_specs=pl.BlockSpec((tn, V), lambda i: (i, 0)),
            compiler_params=pltpu.CompilerParams(
                dimension_semantics=("parallel",),
                vmem_limit_bytes=_VMEM_LIMIT),
        )(x, w_bf, b)

    grid = (N // tn, V // tv)
    lse = pl.pallas_call(
        _fc_head_stats_kernel,
        out_shape=jax.ShapeDtypeStruct((N, 1), jnp.float32),
        grid=grid,
        in_specs=[pl.BlockSpec((tn, H), lambda i, j: (i, 0)),
                  pl.BlockSpec((H, tv), lambda i, j: (0, j)),
                  pl.BlockSpec((1, tv), lambda i, j: (0, j))],
        out_specs=pl.BlockSpec((tn, 1), lambda i, j: (i, 0)),
        scratch_shapes=[pltpu.VMEM((tn, 1), jnp.float32),
                        pltpu.VMEM((tn, 1), jnp.float32)],
        compiler_params=pltpu.CompilerParams(
            dimension_semantics=("parallel", "arbitrary"),
            vmem_limit_bytes=_VMEM_LIMIT),
    )(x, w_bf, b)

    return pl.pallas_call(
        _fc_head_finalize_kernel,
        out_shape=jax.ShapeDtypeStruct((N, V), jnp.float32),
        grid=grid,
        in_specs=[pl.BlockSpec((tn, H), lambda i, j: (i, 0)),
                  pl.BlockSpec((H, tv), lambda i, j: (0, j)),
                  pl.BlockSpec((1, tv), lambda i, j: (0, j)),
                  pl.BlockSpec((tn, 1), lambda i, j: (i, 0))],
        out_specs=pl.BlockSpec((tn, tv), lambda i, j: (i, j)),
        compiler_params=pltpu.CompilerParams(
            dimension_semantics=("parallel", "parallel"),
            vmem_limit_bytes=_VMEM_LIMIT),
    )(x, w_bf, b, lse)


# -----------------------------------------------------------------------------
# BiLM forward (train=False, hidden=None) — matches the PyTorch module
# -----------------------------------------------------------------------------
def bilm_forward(params, x):
    # TODO(synk): dropout path (train=True) not implemented; this is the
    # eval-mode forward (train=False), which applies no dropout.
    B, T, Din = x.shape
    H = params["lstm"][0]["w_hh"].shape[1]
    V = params["fw_w"].shape[1]

    # (B, T, Din) -> time-major flattened rows, one reduction part.
    xp = jnp.transpose(x, (1, 0, 2)).reshape(1, T * B, Din)

    h_list, c_list = [], []
    hseq = None
    for lp in params["lstm"]:
        hseq, h_n, c_n = bidir_lstm_layer(xp, lp, T, B)
        xp = hseq.reshape(2, T * B, H)      # free reshape; dir-major parts
        h_list.append(h_n)
        c_list.append(c_n)

    # Heads consume batch-major rows so the (B, T, V) output reshape is free.
    def head_rows(dir_idx):
        return jnp.transpose(hseq[dir_idx], (1, 0, 2)).reshape(B * T, H)

    out_fw = fc_head(head_rows(0), params["fw_w"], params["fw_b"]).reshape(B, T, V)
    out_bw = fc_head(head_rows(1), params["bw_w"], params["bw_b"]).reshape(B, T, V)

    h_n = jnp.concatenate(h_list, axis=0)   # (num_layers*2, B, H)
    c_n = jnp.concatenate(c_list, axis=0)
    return out_fw, out_bw, (h_n, c_n)


# -----------------------------------------------------------------------------
# Pure-JAX reference (for correctness checking only)
# -----------------------------------------------------------------------------
def _ref_lstm_dir(x_tbd, w_ih, w_hh, b, reverse):
    T, B, _ = x_tbd.shape
    H = w_hh.shape[0]
    xs = jnp.flip(x_tbd, axis=0) if reverse else x_tbd

    def step(carry, x_t):
        h, c = carry
        gates = x_t @ w_ih + h @ w_hh + b
        i = jax.nn.sigmoid(gates[:, 0 * H:1 * H])
        f = jax.nn.sigmoid(gates[:, 1 * H:2 * H])
        g = jnp.tanh(gates[:, 2 * H:3 * H])
        o = jax.nn.sigmoid(gates[:, 3 * H:4 * H])
        c = f * c + i * g
        h = o * jnp.tanh(c)
        return (h, c), h

    init = (jnp.zeros((B, H), jnp.float32), jnp.zeros((B, H), jnp.float32))
    (h, c), hs = lax.scan(step, init, xs)
    if reverse:
        hs = jnp.flip(hs, axis=0)
    return hs, h, c


def bilm_forward_ref(params, x):
    H = params["lstm"][0]["w_hh"].shape[1]
    layer_in = jnp.transpose(x, (1, 0, 2))
    h_parts, c_parts = [], []
    for lp in params["lstm"]:
        hf_seq, hf, cf = _ref_lstm_dir(layer_in, lp["w_ih"][0], lp["w_hh"][0],
                                       lp["b"][0], reverse=False)
        hb_seq, hb, cb = _ref_lstm_dir(layer_in, lp["w_ih"][1], lp["w_hh"][1],
                                       lp["b"][1], reverse=True)
        layer_in = jnp.concatenate([hf_seq, hb_seq], axis=-1)
        h_parts += [hf, hb]
        c_parts += [cf, cb]
    out = jnp.transpose(layer_in, (1, 0, 2))

    def head(xh, w, b):
        z = jnp.maximum(xh @ w + b, 0.0)
        return jax.nn.log_softmax(z, axis=-1)

    of = head(out[:, :, :H], params["fw_w"], params["fw_b"])
    ob = head(out[:, :, H:], params["bw_w"], params["bw_b"])
    return of, ob, (jnp.stack(h_parts, 0), jnp.stack(c_parts, 0))


# -----------------------------------------------------------------------------
# Deterministic parameter init (PyTorch-style uniform(-1/sqrt(H), 1/sqrt(H)))
# -----------------------------------------------------------------------------
def init_params(key, input_size, hidden_size, num_layers, word_number):
    H = hidden_size
    bound = 1.0 / float(H) ** 0.5
    keys = iter(jax.random.split(key, num_layers * 4 + 4))

    def u(shape):
        return jax.random.uniform(next(keys), shape, jnp.float32, -bound, bound)

    lstm = []
    for layer in range(num_layers):
        din = input_size if layer == 0 else 2 * H
        lstm.append({
            "w_ih": u((2, din, 4 * H)),                  # per-direction W_ih^T
            "w_hh": u((2, H, 4 * H)),                    # per-direction W_hh^T
            "b": u((2, 1, 4 * H)) + u((2, 1, 4 * H)),    # b_ih + b_hh
        })

    return {
        "lstm": lstm,
        "fw_w": u((H, word_number)),   # Linear weight, transposed
        "fw_b": u((1, word_number)),
        "bw_w": u((H, word_number)),
        "bw_b": u((1, word_number)),
    }


# -----------------------------------------------------------------------------
if __name__ == "__main__":
    B, T = 2, 8
    input_size, hidden_size, num_layers, word_number = 32, 32, 2, 64

    key = jax.random.PRNGKey(0)
    pkey, xkey = jax.random.split(key)
    params = init_params(pkey, input_size, hidden_size, num_layers, word_number)
    x = jax.random.normal(xkey, (B, T, input_size), jnp.float32)

    fwd = jax.jit(bilm_forward)
    out_fw, out_bw, (h_n, c_n) = fwd(params, x)
    jax.block_until_ready((out_fw, out_bw, h_n, c_n))

    assert out_fw.shape == (B, T, word_number)
    assert out_bw.shape == (B, T, word_number)
    assert h_n.shape == (num_layers * 2, B, hidden_size)
    assert c_n.shape == (num_layers * 2, B, hidden_size)
    # log_softmax rows sum to 1 in prob space
    assert bool(jnp.allclose(jnp.sum(jnp.exp(out_fw), axis=-1), 1.0, atol=1e-4))
    assert bool(jnp.allclose(jnp.sum(jnp.exp(out_bw), axis=-1), 1.0, atol=1e-4))

    # pure-JAX fp32 reference (loose tol: kernel uses bf16 MXU operands)
    rf, rb, (rh, rc) = bilm_forward_ref(params, x)
    assert bool(jnp.allclose(out_fw, rf, atol=1e-1, rtol=1e-1))
    assert bool(jnp.allclose(out_bw, rb, atol=1e-1, rtol=1e-1))
    assert bool(jnp.allclose(h_n, rh, atol=1e-1, rtol=1e-1))
    assert bool(jnp.allclose(c_n, rc, atol=1e-1, rtol=1e-1))

    print("KERNEL_OK")
</pallas_src>

<mosaic_0001>
module attributes {stable_mosaic.version = 11 : i64} {
  func.func @_bilstm_dir_kernel(%arg0: i32, %arg1: i32, %arg2: memref<1x16x32xf32, #tpu.memory_space<vmem>>, %arg3: memref<1x32x128xbf16, #tpu.memory_space<vmem>>, %arg4: memref<1x32x128xbf16, #tpu.memory_space<vmem>>, %arg5: memref<1x1x128xf32, #tpu.memory_space<vmem>>, %arg6: memref<1x8x2x32xf32, #tpu.memory_space<vmem>>, %arg7: memref<1x2x32xf32, #tpu.memory_space<vmem>>, %arg8: memref<1x2x32xf32, #tpu.memory_space<vmem>>, %arg9: memref<16x128xf32, #tpu.memory_space<vmem>>) attributes {dimension_semantics = [#tpu.dimension_semantics<parallel>, #tpu.dimension_semantics<arbitrary>], iteration_bounds = array<i64: 2, 1>, scalar_prefetch = 0 : i64, scratch_operands = 1 : i64, tpu.core_type = #tpu.core_type<tc>, window_params = [{transform_indices = @transform_0, window_bounds = array<i64: 1, 16, 32>}, {transform_indices = @transform_1, window_bounds = array<i64: 1, 32, 128>}, {transform_indices = @transform_2, window_bounds = array<i64: 1, 32, 128>}, {transform_indices = @transform_3, window_bounds = array<i64: 1, 1, 128>}, {transform_indices = @transform_4, window_bounds = array<i64: 1, 8, 2, 32>}, {transform_indices = @transform_5, window_bounds = array<i64: 1, 2, 32>}, {transform_indices = @transform_6, window_bounds = array<i64: 1, 2, 32>}]} {
    %cst = arith.constant 0.000000e+00 : f32
    %0 = vector.broadcast %cst : f32 to vector<16x128xf32>
    %c0 = arith.constant 0 : index
    %c0_0 = arith.constant 0 : index
    %c0_1 = arith.constant 0 : index
    %1 = vector.load %arg2[%c0, %c0_0, %c0_1] : memref<1x16x32xf32, #tpu.memory_space<vmem>>, vector<1x16x32xf32>
    %2 = vector.shape_cast %1 : vector<1x16x32xf32> to vector<16x32xf32>
    %3 = arith.truncf %2 : vector<16x32xf32> to vector<16x32xbf16>
    %c0_2 = arith.constant 0 : index
    %c0_3 = arith.constant 0 : index
    %c0_4 = arith.constant 0 : index
    %4 = vector.load %arg3[%c0_2, %c0_3, %c0_4] : memref<1x32x128xbf16, #tpu.memory_space<vmem>>, vector<1x32x128xbf16>
    %5 = vector.shape_cast %4 : vector<1x32x128xbf16> to vector<32x128xbf16>
    %cst_5 = arith.constant dense<0.000000e+00> : vector<16x128xf32>
    %6 = tpu.matmul %3, %5, %cst_5 {dimension_numbers = #tpu.dot_dimension_numbers<[1], [0], [0], [1], [0, 0, 1, 1], [], []>} : vector<16x32xbf16>, vector<32x128xbf16>, vector<16x128xf32> -> vector<16x128xf32>
    %7 = arith.addf %0, %6 : vector<16x128xf32>
    %c0_6 = arith.constant 0 : index
    %c0_7 = arith.constant 0 : index
    %c0_8 = arith.constant 0 : index
    %8 = vector.load %arg5[%c0_6, %c0_7, %c0_8] : memref<1x1x128xf32, #tpu.memory_space<vmem>>, vector<1x1x128xf32>
    %9 = vector.shape_cast %8 : vector<1x1x128xf32> to vector<1x128xf32>
    %10 = vector.broadcast %9 : vector<1x128xf32> to vector<16x128xf32>
    %11 = arith.addf %7, %10 : vector<16x128xf32>
    %c0_9 = arith.constant 0 : index
    %c0_10 = arith.constant 0 : index
    %12 = vector.load %arg9[%c0_9, %c0_10] : memref<16x128xf32, #tpu.memory_space<vmem>>, vector<16x128xf32>
    tpu.vector_store %arg9[%c0_9, %c0_10], %11 {strides = array<i32>} : memref<16x128xf32, #tpu.memory_space<vmem>>, vector<16x128xf32>,
    %c0_11 = arith.constant 0 : index
    %c0_12 = arith.constant 0 : index
    %c0_13 = arith.constant 0 : index
    %13 = vector.load %arg4[%c0_11, %c0_12, %c0_13] : memref<1x32x128xbf16, #tpu.memory_space<vmem>>, vector<1x32x128xbf16>
    %14 = vector.shape_cast %13 : vector<1x32x128xbf16> to vector<32x128xbf16>
    %c0_i32 = arith.constant 0 : i32
    %15 = arith.cmpi eq, %arg1, %c0_i32 : i32
    %16 = arith.extui %15 : i1 to i32
    %c0_i32_14 = arith.constant 0 : i32
    %17 = arith.cmpi ne, %16, %c0_i32_14 : i32
    scf.if %17 {
      %cst_100 = arith.constant 0.000000e+00 : f32
      %274 = vector.broadcast %cst_100 : f32 to vector<2x32xf32>
      %c0_101 = arith.constant 0 : index
      %c0_102 = arith.constant 0 : index
      %c0_103 = arith.constant 0 : index
      %275 = vector.load %arg7[%c0_101, %c0_102, %c0_103] : memref<1x2x32xf32, #tpu.memory_space<vmem>>, vector<1x2x32xf32>
      %276 = vector.shape_cast %275 : vector<1x2x32xf32> to vector<2x32xf32>
      %277 = vector.shape_cast %274 : vector<2x32xf32> to vector<1x2x32xf32>
      tpu.vector_store %arg7[%c0_101, %c0_102, %c0_103], %277 {strides = array<i32>} : memref<1x2x32xf32, #tpu.memory_space<vmem>>, vector<1x2x32xf32>,
      %cst_104 = arith.constant 0.000000e+00 : f32
      %278 = vector.broadcast %cst_104 : f32 to vector<2x32xf32>
      %c0_105 = arith.constant 0 : index
      %c0_106 = arith.constant 0 : index
      %c0_107 = arith.constant 0 : index
      %279 = vector.load %arg8[%c0_105, %c0_106, %c0_107] : memref<1x2x32xf32, #tpu.memory_space<vmem>>, vector<1x2x32xf32>
      %280 = vector.shape_cast %279 : vector<1x2x32xf32> to vector<2x32xf32>
      %281 = vector.shape_cast %278 : vector<2x32xf32> to vector<1x2x32xf32>
      tpu.vector_store %arg8[%c0_105, %c0_106, %c0_107], %281 {strides = array<i32>} : memref<1x2x32xf32, #tpu.memory_space<vmem>>, vector<1x2x32xf32>,
    } else {
    }
    %18 = tpu.iota {dimensions = array<i32: 1>} : vector<2x128xi32>
    %c64_i32 = arith.constant 64 : i32
    %19 = vector.broadcast %c64_i32 : i32 to vector<2x128xi32>
    %20 = arith.cmpi sge, %18, %19 : vector<2x128xi32>
    %c96_i32 = arith.constant 96 : i32
    %21 = vector.broadcast %c96_i32 : i32 to vector<2x128xi32>
    %22 = arith.cmpi slt, %18, %21 : vector<2x128xi32>
    %23 = arith.andi %20, %22 : vector<2x128xi1>
    %c0_15 = arith.constant 0 : index
    %c0_16 = arith.constant 0 : index
    %c0_17 = arith.constant 0 : index
    %24 = vector.load %arg7[%c0_15, %c0_16, %c0_17] : memref<1x2x32xf32, #tpu.memory_space<vmem>>, vector<1x2x32xf32>
    %25 = vector.shape_cast %24 : vector<1x2x32xf32> to vector<2x32xf32>
    %c0_18 = arith.constant 0 : index
    %c0_19 = arith.constant 0 : index
    %c0_20 = arith.constant 0 : index
    %26 = vector.load %arg8[%c0_18, %c0_19, %c0_20] : memref<1x2x32xf32, #tpu.memory_space<vmem>>, vector<1x2x32xf32>
    %27 = vector.shape_cast %26 : vector<1x2x32xf32> to vector<2x32xf32>
    %c0_i32_21 = arith.constant 0 : i32
    %c2_i32 = arith.constant 2 : i32
    %28 = arith.muli %c2_i32, %c0_i32_21 : i32
    %c7_i32 = arith.constant 7 : i32
    %29 = arith.subi %c7_i32, %28 : i32
    %30 = arith.muli %arg0, %29 : i32
    %31 = arith.addi %c0_i32_21, %30 : i32
    %c2_i32_22 = arith.constant 2 : i32
    %32 = arith.muli %31, %c2_i32_22 : i32
    %33 = arith.index_cast %32 : i32 to index
    %c0_23 = arith.constant 0 : index
    %34 = vector.load %arg9[%33, %c0_23] : memref<16x128xf32, #tpu.memory_space<vmem>>, vector<2x128xf32>
    %35 = arith.truncf %25 : vector<2x32xf32> to vector<2x32xbf16>
    %cst_24 = arith.constant dense<0.000000e+00> : vector<2x128xf32>
    %36 = tpu.matmul %35, %14, %cst_24 {dimension_numbers = #tpu.dot_dimension_numbers<[1], [0], [0], [1], [0, 0, 1, 1], [], []>} : vector<2x32xbf16>, vector<32x128xbf16>, vector<2x128xf32> -> vector<2x128xf32>
    %37 = arith.addf %34, %36 : vector<2x128xf32>
    %38 = math.tanh %37 : vector<2x128xf32>
    %39 = arith.negf %37 : vector<2x128xf32>
    %40 = math.exp %39 : vector<2x128xf32>
    %cst_25 = arith.constant 1.000000e+00 : f32
    %41 = vector.broadcast %cst_25 : f32 to vector<2x128xf32>
    %42 = arith.addf %41, %40 : vector<2x128xf32>
    %43 = arith.divf %41, %42 : vector<2x128xf32>
    %44 = arith.select %23, %38, %43 : vector<2x128xi1>, vector<2x128xf32>
    %45 = vector.extract_strided_slice %44 {offsets = [0, 0], sizes = [2, 32], strides = [1, 1]} : vector<2x128xf32> to vector<2x32xf32>
    %46 = vector.extract_strided_slice %44 {offsets = [0, 32], sizes = [2, 32], strides = [1, 1]} : vector<2x128xf32> to vector<2x32xf32>
    %47 = vector.extract_strided_slice %44 {offsets = [0, 64], sizes = [2, 32], strides = [1, 1]} : vector<2x128xf32> to vector<2x32xf32>
    %48 = vector.extract_strided_slice %44 {offsets = [0, 96], sizes = [2, 32], strides = [1, 1]} : vector<2x128xf32> to vector<2x32xf32>
    %49 = arith.mulf %46, %27 : vector<2x32xf32>
    %50 = arith.mulf %45, %47 : vector<2x32xf32>
    %51 = arith.addf %49, %50 : vector<2x32xf32>
    %52 = math.tanh %51 : vector<2x32xf32>
    %53 = arith.mulf %48, %52 : vector<2x32xf32>
    %c0_26 = arith.constant 0 : index
    %54 = arith.index_cast %31 : i32 to index
    %c0_27 = arith.constant 0 : index
    %c0_28 = arith.constant 0 : index
    %55 = vector.load %arg6[%c0_26, %54, %c0_27, %c0_28] : memref<1x8x2x32xf32, #tpu.memory_space<vmem>>, vector<1x1x2x32xf32>
    %56 = vector.shape_cast %55 : vector<1x1x2x32xf32> to vector<2x32xf32>
    %57 = vector.shape_cast %53 : vector<2x32xf32> to vector<1x1x2x32xf32>
    tpu.vector_store %arg6[%c0_26, %54, %c0_27, %c0_28], %57 {strides = array<i32>} : memref<1x8x2x32xf32, #tpu.memory_space<vmem>>, vector<1x1x2x32xf32>,
    %c1_i32 = arith.constant 1 : i32
    %c2_i32_29 = arith.constant 2 : i32
    %58 = arith.muli %c2_i32_29, %c1_i32 : i32
    %c7_i32_30 = arith.constant 7 : i32
    %59 = arith.subi %c7_i32_30, %58 : i32
    %60 = arith.muli %arg0, %59 : i32
    %61 = arith.addi %c1_i32, %60 : i32
    %c2_i32_31 = arith.constant 2 : i32
    %62 = arith.muli %61, %c2_i32_31 : i32
    %63 = arith.index_cast %62 : i32 to index
    %c0_32 = arith.constant 0 : index
    %64 = vector.load %arg9[%63, %c0_32] : memref<16x128xf32, #tpu.memory_space<vmem>>, vector<2x128xf32>
    %65 = arith.truncf %53 : vector<2x32xf32> to vector<2x32xbf16>
    %cst_33 = arith.constant dense<0.000000e+00> : vector<2x128xf32>
    %66 = tpu.matmul %65, %14, %cst_33 {dimension_numbers = #tpu.dot_dimension_numbers<[1], [0], [0], [1], [0, 0, 1, 1], [], []>} : vector<2x32xbf16>, vector<32x128xbf16>, vector<2x128xf32> -> vector<2x128xf32>
    %67 = arith.addf %64, %66 : vector<2x128xf32>
    %68 = math.tanh %67 : vector<2x128xf32>
    %69 = arith.negf %67 : vector<2x128xf32>
    %70 = math.exp %69 : vector<2x128xf32>
    %cst_34 = arith.constant 1.000000e+00 : f32
    %71 = vector.broadcast %cst_34 : f32 to vector<2x128xf32>
    %72 = arith.addf %71, %70 : vector<2x128xf32>
    %73 = arith.divf %71, %72 : vector<2x128xf32>
    %74 = arith.select %23, %68, %73 : vector<2x128xi1>, vector<2x128xf32>
    %75 = vector.extract_strided_slice %74 {offsets = [0, 0], sizes = [2, 32], strides = [1, 1]} : vector<2x128xf32> to vector<2x32xf32>
    %76 = vector.extract_strided_slice %74 {offsets = [0, 32], sizes = [2, 32], strides = [1, 1]} : vector<2x128xf32> to vector<2x32xf32>
    %77 = vector.extract_strided_slice %74 {offsets = [0, 64], sizes = [2, 32], strides = [1, 1]} : vector<2x128xf32> to vector<2x32xf32>
    %78 = vector.extract_strided_slice %74 {offsets = [0, 96], sizes = [2, 32], strides = [1, 1]} : vector<2x128xf32> to vector<2x32xf32>
    %79 = arith.mulf %76, %51 : vector<2x32xf32>
    %80 = arith.mulf %75, %77 : vector<2x32xf32>
    %81 = arith.addf %79, %80 : vector<2x32xf32>
    %82 = math.tanh %81 : vector<2x32xf32>
    %83 = arith.mulf %78, %82 : vector<2x32xf32>
    %c0_35 = arith.constant 0 : index
    %84 = arith.index_cast %61 : i32 to index
    %c0_36 = arith.constant 0 : index
    %c0_37 = arith.constant 0 : index
    %85 = vector.load %arg6[%c0_35, %84, %c0_36, %c0_37] : memref<1x8x2x32xf32, #tpu.memory_space<vmem>>, vector<1x1x2x32xf32>
    %86 = vector.shape_cast %85 : vector<1x1x2x32xf32> to vector<2x32xf32>
    %87 = vector.shape_cast %83 : vector<2x32xf32> to vector<1x1x2x32xf32>
    tpu.vector_store %arg6[%c0_35, %84, %c0_36, %c0_37], %87 {strides = array<i32>} : memref<1x8x2x32xf32, #tpu.memory_space<vmem>>, vector<1x1x2x32xf32>,
    %c2_i32_38 = arith.constant 2 : i32
    %c2_i32_39 = arith.constant 2 : i32
    %88 = arith.muli %c2_i32_39, %c2_i32_38 : i32
    %c7_i32_40 = arith.constant 7 : i32
    %89 = arith.subi %c7_i32_40, %88 : i32
    %90 = arith.muli %arg0, %89 : i32
    %91 = arith.addi %c2_i32_38, %90 : i32
    %c2_i32_41 = arith.constant 2 : i32
    %92 = arith.muli %91, %c2_i32_41 : i32
    %93 = arith.index_cast %92 : i32 to index
    %c0_42 = arith.constant 0 : index
    %94 = vector.load %arg9[%93, %c0_42] : memref<16x128xf32, #tpu.memory_space<vmem>>, vector<2x128xf32>
    %95 = arith.truncf %83 : vector<2x32xf32> to vector<2x32xbf16>
    %cst_43 = arith.constant dense<0.000000e+00> : vector<2x128xf32>
    %96 = tpu.matmul %95, %14, %cst_43 {dimension_numbers = #tpu.dot_dimension_numbers<[1], [0], [0], [1], [0, 0, 1, 1], [], []>} : vector<2x32xbf16>, vector<32x128xbf16>, vector<2x128xf32> -> vector<2x128xf32>
    %97 = arith.addf %94, %96 : vector<2x128xf32>
    %98 = math.tanh %97 : vector<2x128xf32>
    %99 = arith.negf %97 : vector<2x128xf32>
    %100 = math.exp %99 : vector<2x128xf32>
    %cst_44 = arith.constant 1.000000e+00 : f32
    %101 = vector.broadcast %cst_44 : f32 to vector<2x128xf32>
    %102 = arith.addf %101, %100 : vector<2x128xf32>
    %103 = arith.divf %101, %102 : vector<2x128xf32>
    %104 = arith.select %23, %98, %103 : vector<2x128xi1>, vector<2x128xf32>
    %105 = vector.extract_strided_slice %104 {offsets = [0, 0], sizes = [2, 32], strides = [1, 1]} : vector<2x128xf32> to vector<2x32xf32>
    %106 = vector.extract_strided_slice %104 {offsets = [0, 32], sizes = [2, 32], strides = [1, 1]} : vector<2x128xf32> to vector<2x32xf32>
    %107 = vector.extract_strided_slice %104 {offsets = [0, 64], sizes = [2, 32], strides = [1, 1]} : vector<2x128xf32> to vector<2x32xf32>
    %108 = vector.extract_strided_slice %104 {offsets = [0, 96], sizes = [2, 32], strides = [1, 1]} : vector<2x128xf32> to vector<2x32xf32>
    %109 = arith.mulf %106, %81 : vector<2x32xf32>
    %110 = arith.mulf %105, %107 : vector<2x32xf32>
    %111 = arith.addf %109, %110 : vector<2x32xf32>
    %112 = math.tanh %111 : vector<2x32xf32>
    %113 = arith.mulf %108, %112 : vector<2x32xf32>
    %c0_45 = arith.constant 0 : index
    %114 = arith.index_cast %91 : i32 to index
    %c0_46 = arith.constant 0 : index
    %c0_47 = arith.constant 0 : index
    %115 = vector.load %arg6[%c0_45, %114, %c0_46, %c0_47] : memref<1x8x2x32xf32, #tpu.memory_space<vmem>>, vector<1x1x2x32xf32>
    %116 = vector.shape_cast %115 : vector<1x1x2x32xf32> to vector<2x32xf32>
    %117 = vector.shape_cast %113 : vector<2x32xf32> to vector<1x1x2x32xf32>
    tpu.vector_store %arg6[%c0_45, %114, %c0_46, %c0_47], %117 {strides = array<i32>} : memref<1x8x2x32xf32, #tpu.memory_space<vmem>>, vector<1x1x2x32xf32>,
    %c3_i32 = arith.constant 3 : i32
    %c2_i32_48 = arith.constant 2 : i32
    %118 = arith.muli %c2_i32_48, %c3_i32 : i32
    %c7_i32_49 = arith.constant 7 : i32
    %119 = arith.subi %c7_i32_49, %118 : i32
    %120 = arith.muli %arg0, %119 : i32
    %121 = arith.addi %c3_i32, %120 : i32
    %c2_i32_50 = arith.constant 2 : i32
    %122 = arith.muli %121, %c2_i32_50 : i32
    %123 = arith.index_cast %122 : i32 to index
    %c0_51 = arith.constant 0 : index
    %124 = vector.load %arg9[%123, %c0_51] : memref<16x128xf32, #tpu.memory_space<vmem>>, vector<2x128xf32>
    %125 = arith.truncf %113 : vector<2x32xf32> to vector<2x32xbf16>
    %cst_52 = arith.constant dense<0.000000e+00> : vector<2x128xf32>
    %126 = tpu.matmul %125, %14, %cst_52 {dimension_numbers = #tpu.dot_dimension_numbers<[1], [0], [0], [1], [0, 0, 1, 1], [], []>} : vector<2x32xbf16>, vector<32x128xbf16>, vector<2x128xf32> -> vector<2x128xf32>
    %127 = arith.addf %124, %126 : vector<2x128xf32>
    %128 = math.tanh %127 : vector<2x128xf32>
    %129 = arith.negf %127 : vector<2x128xf32>
    %130 = math.exp %129 : vector<2x128xf32>
    %cst_53 = arith.constant 1.000000e+00 : f32
    %131 = vector.broadcast %cst_53 : f32 to vector<2x128xf32>
    %132 = arith.addf %131, %130 : vector<2x128xf32>
    %133 = arith.divf %131, %132 : vector<2x128xf32>
    %134 = arith.select %23, %128, %133 : vector<2x128xi1>, vector<2x128xf32>
    %135 = vector.extract_strided_slice %134 {offsets = [0, 0], sizes = [2, 32], strides = [1, 1]} : vector<2x128xf32> to vector<2x32xf32>
    %136 = vector.extract_strided_slice %134 {offsets = [0, 32], sizes = [2, 32], strides = [1, 1]} : vector<2x128xf32> to vector<2x32xf32>
    %137 = vector.extract_strided_slice %134 {offsets = [0, 64], sizes = [2, 32], strides = [1, 1]} : vector<2x128xf32> to vector<2x32xf32>
    %138 = vector.extract_strided_slice %134 {offsets = [0, 96], sizes = [2, 32], strides = [1, 1]} : vector<2x128xf32> to vector<2x32xf32>
    %139 = arith.mulf %136, %111 : vector<2x32xf32>
    %140 = arith.mulf %135, %137 : vector<2x32xf32>
    %141 = arith.addf %139, %140 : vector<2x32xf32>
    %142 = math.tanh %141 : vector<2x32xf32>
    %143 = arith.mulf %138, %142 : vector<2x32xf32>
    %c0_54 = arith.constant 0 : index
    %144 = arith.index_cast %121 : i32 to index
    %c0_55 = arith.constant 0 : index
    %c0_56 = arith.constant 0 : index
    %145 = vector.load %arg6[%c0_54, %144, %c0_55, %c0_56] : memref<1x8x2x32xf32, #tpu.memory_space<vmem>>, vector<1x1x2x32xf32>
    %146 = vector.shape_cast %145 : vector<1x1x2x32xf32> to vector<2x32xf32>
    %147 = vector.shape_cast %143 : vector<2x32xf32> to vector<1x1x2x32xf32>
    tpu.vector_store %arg6[%c0_54, %144, %c0_55, %c0_56], %147 {strides = array<i32>} : memref<1x8x2x32xf32, #tpu.memory_space<vmem>>, vector<1x1x2x32xf32>,
    %c4_i32 = arith.constant 4 : i32
    %c2_i32_57 = arith.constant 2 : i32
    %148 = arith.muli %c2_i32_57, %c4_i32 : i32
    %c7_i32_58 = arith.constant 7 : i32
    %149 = arith.subi %c7_i32_58, %148 : i32
    %150 = arith.muli %arg0, %149 : i32
    %151 = arith.addi %c4_i32, %150 : i32
    %c2_i32_59 = arith.constant 2 : i32
    %152 = arith.muli %151, %c2_i32_59 : i32
    %153 = arith.index_cast %152 : i32 to index
    %c0_60 = arith.constant 0 : index
    %154 = vector.load %arg9[%153, %c0_60] : memref<16x128xf32, #tpu.memory_space<vmem>>, vector<2x128xf32>
    %155 = arith.truncf %143 : vector<2x32xf32> to vector<2x32xbf16>
    %cst_61 = arith.constant dense<0.000000e+00> : vector<2x128xf32>
    %156 = tpu.matmul %155, %14, %cst_61 {dimension_numbers = #tpu.dot_dimension_numbers<[1], [0], [0], [1], [0, 0, 1, 1], [], []>} : vector<2x32xbf16>, vector<32x128xbf16>, vector<2x128xf32> -> vector<2x128xf32>
    %157 = arith.addf %154, %156 : vector<2x128xf32>
    %158 = math.tanh %157 : vector<2x128xf32>
    %159 = arith.negf %157 : vector<2x128xf32>
    %160 = math.exp %159 : vector<2x128xf32>
    %cst_62 = arith.constant 1.000000e+00 : f32
    %161 = vector.broadcast %cst_62 : f32 to vector<2x128xf32>
    %162 = arith.addf %161, %160 : vector<2x128xf32>
    %163 = arith.divf %161, %162 : vector<2x128xf32>
    %164 = arith.select %23, %158, %163 : vector<2x128xi1>, vector<2x128xf32>
    %165 = vector.extract_strided_slice %164 {offsets = [0, 0], sizes = [2, 32], strides = [1, 1]} : vector<2x128xf32> to vector<2x32xf32>
    %166 = vector.extract_strided_slice %164 {offsets = [0, 32], sizes = [2, 32], strides = [1, 1]} : vector<2x128xf32> to vector<2x32xf32>
    %167 = vector.extract_strided_slice %164 {offsets = [0, 64], sizes = [2, 32], strides = [1, 1]} : vector<2x128xf32> to vector<2x32xf32>
    %168 = vector.extract_strided_slice %164 {offsets = [0, 96], sizes = [2, 32], strides = [1, 1]} : vector<2x128xf32> to vector<2x32xf32>
    %169 = arith.mulf %166, %141 : vector<2x32xf32>
    %170 = arith.mulf %165, %167 : vector<2x32xf32>
    %171 = arith.addf %169, %170 : vector<2x32xf32>
    %172 = math.tanh %171 : vector<2x32xf32>
    %173 = arith.mulf %168, %172 : vector<2x32xf32>
    %c0_63 = arith.constant 0 : index
    %174 = arith.index_cast %151 : i32 to index
    %c0_64 = arith.constant 0 : index
    %c0_65 = arith.constant 0 : index
    %175 = vector.load %arg6[%c0_63, %174, %c0_64, %c0_65] : memref<1x8x2x32xf32, #tpu.memory_space<vmem>>, vector<1x1x2x32xf32>
    %176 = vector.shape_cast %175 : vector<1x1x2x32xf32> to vector<2x32xf32>
    %177 = vector.shape_cast %173 : vector<2x32xf32> to vector<1x1x2x32xf32>
    tpu.vector_store %arg6[%c0_63, %174, %c0_64, %c0_65], %177 {strides = array<i32>} : memref<1x8x2x32xf32, #tpu.memory_space<vmem>>, vector<1x1x2x32xf32>,
    %c5_i32 = arith.constant 5 : i32
    %c2_i32_66 = arith.constant 2 : i32
    %178 = arith.muli %c2_i32_66, %c5_i32 : i32
    %c7_i32_67 = arith.constant 7 : i32
    %179 = arith.subi %c7_i32_67, %178 : i32
    %180 = arith.muli %arg0, %179 : i32
    %181 = arith.addi %c5_i32, %180 : i32
    %c2_i32_68 = arith.constant 2 : i32
    %182 = arith.muli %181, %c2_i32_68 : i32
    %183 = arith.index_cast %182 : i32 to index
    %c0_69 = arith.constant 0 : index
    %184 = vector.load %arg9[%183, %c0_69] : memref<16x128xf32, #tpu.memory_space<vmem>>, vector<2x128xf32>
    %185 = arith.truncf %173 : vector<2x32xf32> to vector<2x32xbf16>
    %cst_70 = arith.constant dense<0.000000e+00> : vector<2x128xf32>
    %186 = tpu.matmul %185, %14, %cst_70 {dimension_numbers = #tpu.dot_dimension_numbers<[1], [0], [0], [1], [0, 0, 1, 1], [], []>} : vector<2x32xbf16>, vector<32x128xbf16>, vector<2x128xf32> -> vector<2x128xf32>
    %187 = arith.addf %184, %186 : vector<2x128xf32>
    %188 = math.tanh %187 : vector<2x128xf32>
    %189 = arith.negf %187 : vector<2x128xf32>
    %190 = math.exp %189 : vector<2x128xf32>
    %cst_71 = arith.constant 1.000000e+00 : f32
    %191 = vector.broadcast %cst_71 : f32 to vector<2x128xf32>
    %192 = arith.addf %191, %190 : vector<2x128xf32>
    %193 = arith.divf %191, %192 : vector<2x128xf32>
    %194 = arith.select %23, %188, %193 : vector<2x128xi1>, vector<2x128xf32>
    %195 = vector.extract_strided_slice %194 {offsets = [0, 0], sizes = [2, 32], strides = [1, 1]} : vector<2x128xf32> to vector<2x32xf32>
    %196 = vector.extract_strided_slice %194 {offsets = [0, 32], sizes = [2, 32], strides = [1, 1]} : vector<2x128xf32> to vector<2x32xf32>
    %197 = vector.extract_strided_slice %194 {offsets = [0, 64], sizes = [2, 32], strides = [1, 1]} : vector<2x128xf32> to vector<2x32xf32>
    %198 = vector.extract_strided_slice %194 {offsets = [0, 96], sizes = [2, 32], strides = [1, 1]} : vector<2x128xf32> to vector<2x32xf32>
    %199 = arith.mulf %196, %171 : vector<2x32xf32>
    %200 = arith.mulf %195, %197 : vector<2x32xf32>
    %201 = arith.addf %199, %200 : vector<2x32xf32>
    %202 = math.tanh %201 : vector<2x32xf32>
    %203 = arith.mulf %198, %202 : vector<2x32xf32>
    %c0_72 = arith.constant 0 : index
    %204 = arith.index_cast %181 : i32 to index
    %c0_73 = arith.constant 0 : index
    %c0_74 = arith.constant 0 : index
    %205 = vector.load %arg6[%c0_72, %204, %c0_73, %c0_74] : memref<1x8x2x32xf32, #tpu.memory_space<vmem>>, vector<1x1x2x32xf32>
    %206 = vector.shape_cast %205 : vector<1x1x2x32xf32> to vector<2x32xf32>
    %207 = vector.shape_cast %203 : vector<2x32xf32> to vector<1x1x2x32xf32>
    tpu.vector_store %arg6[%c0_72, %204, %c0_73, %c0_74], %207 {strides = array<i32>} : memref<1x8x2x32xf32, #tpu.memory_space<vmem>>, vector<1x1x2x32xf32>,
    %c6_i32 = arith.constant 6 : i32
    %c2_i32_75 = arith.constant 2 : i32
    %208 = arith.muli %c2_i32_75, %c6_i32 : i32
    %c7_i32_76 = arith.constant 7 : i32
    %209 = arith.subi %c7_i32_76, %208 : i32
    %210 = arith.muli %arg0, %209 : i32
    %211 = arith.addi %c6_i32, %210 : i32
    %c2_i32_77 = arith.constant 2 : i32
    %212 = arith.muli %211, %c2_i32_77 : i32
    %213 = arith.index_cast %212 : i32 to index
    %c0_78 = arith.constant 0 : index
    %214 = vector.load %arg9[%213, %c0_78] : memref<16x128xf32, #tpu.memory_space<vmem>>, vector<2x128xf32>
    %215 = arith.truncf %203 : vector<2x32xf32> to vector<2x32xbf16>
    %cst_79 = arith.constant dense<0.000000e+00> : vector<2x128xf32>
    %216 = tpu.matmul %215, %14, %cst_79 {dimension_numbers = #tpu.dot_dimension_numbers<[1], [0], [0], [1], [0, 0, 1, 1], [], []>} : vector<2x32xbf16>, vector<32x128xbf16>, vector<2x128xf32> -> vector<2x128xf32>
    %217 = arith.addf %214, %216 : vector<2x128xf32>
    %218 = math.tanh %217 : vector<2x128xf32>
    %219 = arith.negf %217 : vector<2x128xf32>
    %220 = math.exp %219 : vector<2x128xf32>
    %cst_80 = arith.constant 1.000000e+00 : f32
    %221 = vector.broadcast %cst_80 : f32 to vector<2x128xf32>
    %222 = arith.addf %221, %220 : vector<2x128xf32>
    %223 = arith.divf %221, %222 : vector<2x128xf32>
    %224 = arith.select %23, %218, %223 : vector<2x128xi1>, vector<2x128xf32>
    %225 = vector.extract_strided_slice %224 {offsets = [0, 0], sizes = [2, 32], strides = [1, 1]} : vector<2x128xf32> to vector<2x32xf32>
    %226 = vector.extract_strided_slice %224 {offsets = [0, 32], sizes = [2, 32], strides = [1, 1]} : vector<2x128xf32> to vector<2x32xf32>
    %227 = vector.extract_strided_slice %224 {offsets = [0, 64], sizes = [2, 32], strides = [1, 1]} : vector<2x128xf32> to vector<2x32xf32>
    %228 = vector.extract_strided_slice %224 {offsets = [0, 96], sizes = [2, 32], strides = [1, 1]} : vector<2x128xf32> to vector<2x32xf32>
    %229 = arith.mulf %226, %201 : vector<2x32xf32>
    %230 = arith.mulf %225, %227 : vector<2x32xf32>
    %231 = arith.addf %229, %230 : vector<2x32xf32>
    %232 = math.tanh %231 : vector<2x32xf32>
    %233 = arith.mulf %228, %232 : vector<2x32xf32>
    %c0_81 = arith.constant 0 : index
    %234 = arith.index_cast %211 : i32 to index
    %c0_82 = arith.constant 0 : index
    %c0_83 = arith.constant 0 : index
    %235 = vector.load %arg6[%c0_81, %234, %c0_82, %c0_83] : memref<1x8x2x32xf32, #tpu.memory_space<vmem>>, vector<1x1x2x32xf32>
    %236 = vector.shape_cast %235 : vector<1x1x2x32xf32> to vector<2x32xf32>
    %237 = vector.shape_cast %233 : vector<2x32xf32> to vector<1x1x2x32xf32>
    tpu.vector_store %arg6[%c0_81, %234, %c0_82, %c0_83], %237 {strides = array<i32>} : memref<1x8x2x32xf32, #tpu.memory_space<vmem>>, vector<1x1x2x32xf32>,
    %c7_i32_84 = arith.constant 7 : i32
    %c2_i32_85 = arith.constant 2 : i32
    %238 = arith.muli %c2_i32_85, %c7_i32_84 : i32
    %c7_i32_86 = arith.constant 7 : i32
    %239 = arith.subi %c7_i32_86, %238 : i32
    %240 = arith.muli %arg0, %239 : i32
    %241 = arith.addi %c7_i32_84, %240 : i32
    %c2_i32_87 = arith.constant 2 : i32
    %242 = arith.muli %241, %c2_i32_87 : i32
    %243 = arith.index_cast %242 : i32 to index
    %c0_88 = arith.constant 0 : index
    %244 = vector.load %arg9[%243, %c0_88] : memref<16x128xf32, #tpu.memory_space<vmem>>, vector<2x128xf32>
    %245 = arith.truncf %233 : vector<2x32xf32> to vector<2x32xbf16>
    %cst_89 = arith.constant dense<0.000000e+00> : vector<2x128xf32>
    %246 = tpu.matmul %245, %14, %cst_89 {dimension_numbers = #tpu.dot_dimension_numbers<[1], [0], [0], [1], [0, 0, 1, 1], [], []>} : vector<2x32xbf16>, vector<32x128xbf16>, vector<2x128xf32> -> vector<2x128xf32>
    %247 = arith.addf %244, %246 : vector<2x128xf32>
    %248 = math.tanh %247 : vector<2x128xf32>
    %249 = arith.negf %247 : vector<2x128xf32>
    %250 = math.exp %249 : vector<2x128xf32>
    %cst_90 = arith.constant 1.000000e+00 : f32
    %251 = vector.broadcast %cst_90 : f32 to vector<2x128xf32>
    %252 = arith.addf %251, %250 : vector<2x128xf32>
    %253 = arith.divf %251, %252 : vector<2x128xf32>
    %254 = arith.select %23, %248, %253 : vector<2x128xi1>, vector<2x128xf32>
    %255 = vector.extract_strided_slice %254 {offsets = [0, 0], sizes = [2, 32], strides = [1, 1]} : vector<2x128xf32> to vector<2x32xf32>
    %256 = vector.extract_strided_slice %254 {offsets = [0, 32], sizes = [2, 32], strides = [1, 1]} : vector<2x128xf32> to vector<2x32xf32>
    %257 = vector.extract_strided_slice %254 {offsets = [0, 64], sizes = [2, 32], strides = [1, 1]} : vector<2x128xf32> to vector<2x32xf32>
    %258 = vector.extract_strided_slice %254 {offsets = [0, 96], sizes = [2, 32], strides = [1, 1]} : vector<2x128xf32> to vector<2x32xf32>
    %259 = arith.mulf %256, %231 : vector<2x32xf32>
    %260 = arith.mulf %255, %257 : vector<2x32xf32>
    %261 = arith.addf %259, %260 : vector<2x32xf32>
    %262 = math.tanh %261 : vector<2x32xf32>
    %263 = arith.mulf %258, %262 : vector<2x32xf32>
    %c0_91 = arith.constant 0 : index
    %264 = arith.index_cast %241 : i32 to index
    %c0_92 = arith.constant 0 : index
    %c0_93 = arith.constant 0 : index
    %265 = vector.load %arg6[%c0_91, %264, %c0_92, %c0_93] : memref<1x8x2x32xf32, #tpu.memory_space<vmem>>, vector<1x1x2x32xf32>
    %266 = vector.shape_cast %265 : vector<1x1x2x32xf32> to vector<2x32xf32>
    %267 = vector.shape_cast %263 : vector<2x32xf32> to vector<1x1x2x32xf32>
    tpu.vector_store %arg6[%c0_91, %264, %c0_92, %c0_93], %267 {strides = array<i32>} : memref<1x8x2x32xf32, #tpu.memory_space<vmem>>, vector<1x1x2x32xf32>,
    %c8_i32 = arith.constant 8 : i32
    %c0_94 = arith.constant 0 : index
    %c0_95 = arith.constant 0 : index
    %c0_96 = arith.constant 0 : index
    %268 = vector.load %arg7[%c0_94, %c0_95, %c0_96] : memref<1x2x32xf32, #tpu.memory_space<vmem>>, vector<1x2x32xf32>
    %269 = vector.shape_cast %268 : vector<1x2x32xf32> to vector<2x32xf32>
    %270 = vector.shape_cast %263 : vector<2x32xf32> to vector<1x2x32xf32>
    tpu.vector_store %arg7[%c0_94, %c0_95, %c0_96], %270 {strides = array<i32>} : memref<1x2x32xf32, #tpu.memory_space<vmem>>, vector<1x2x32xf32>,
    %c0_97 = arith.constant 0 : index
    %c0_98 = arith.constant 0 : index
    %c0_99 = arith.constant 0 : index
    %271 = vector.load %arg8[%c0_97, %c0_98, %c0_99] : memref<1x2x32xf32, #tpu.memory_space<vmem>>, vector<1x2x32xf32>
    %272 = vector.shape_cast %271 : vector<1x2x32xf32> to vector<2x32xf32>
    %273 = vector.shape_cast %261 : vector<2x32xf32> to vector<1x2x32xf32>
    tpu.vector_store %arg8[%c0_97, %c0_98, %c0_99], %273 {strides = array<i32>} : memref<1x2x32xf32, #tpu.memory_space<vmem>>, vector<1x2x32xf32>,
    return
  }
  func.func @transform_0(%arg0: i32, %arg1: i32) -> (i32, i32, i32) {
    %c2_i32 = arith.constant 2 : i32
    %0 = arith.muli %c2_i32, %arg1 : i32
    %c0_i32 = arith.constant 0 : i32
    %1 = arith.subi %c0_i32, %0 : i32
    %2 = arith.muli %arg0, %1 : i32
    %3 = arith.addi %arg1, %2 : i32
    %c0_i32_0 = arith.constant 0 : i32
    %c0_i32_1 = arith.constant 0 : i32
    %c0_i32_2 = arith.constant 0 : i32
    return %c0_i32_0, %3, %c0_i32_1 : i32, i32, i32
  }
  func.func @transform_1(%arg0: i32, %arg1: i32) -> (i32, i32, i32) {
    %c0_i32 = arith.constant 0 : i32
    %c0_i32_0 = arith.constant 0 : i32
    %c0_i32_1 = arith.constant 0 : i32
    return %arg0, %c0_i32, %c0_i32_0 : i32, i32, i32
  }
  func.func @transform_2(%arg0: i32, %arg1: i32) -> (i32, i32, i32) {
    %c0_i32 = arith.constant 0 : i32
    %c0_i32_0 = arith.constant 0 : i32
    %c0_i32_1 = arith.constant 0 : i32
    return %arg0, %c0_i32, %c0_i32_0 : i32, i32, i32
  }
  func.func @transform_3(%arg0: i32, %arg1: i32) -> (i32, i32, i32) {
    %c0_i32 = arith.constant 0 : i32
    %c0_i32_0 = arith.constant 0 : i32
    %c0_i32_1 = arith.constant 0 : i32
    return %arg0, %c0_i32, %c0_i32_0 : i32, i32, i32
  }
  func.func @transform_4(%arg0: i32, %arg1: i32) -> (i32, i32, i32, i32) {
    %c2_i32 = arith.constant 2 : i32
    %0 = arith.muli %c2_i32, %arg1 : i32
    %c0_i32 = arith.constant 0 : i32
    %1 = arith.subi %c0_i32, %0 : i32
    %2 = arith.muli %arg0, %1 : i32
    %3 = arith.addi %arg1, %2 : i32
    %c0_i32_0 = arith.constant 0 : i32
    %c0_i32_1 = arith.constant 0 : i32
    %c0_i32_2 = arith.constant 0 : i32
    return %arg0, %3, %c0_i32_0, %c0_i32_1 : i32, i32, i32, i32
  }
  func.func @transform_5(%arg0: i32, %arg1: i32) -> (i32, i32, i32) {
    %c0_i32 = arith.constant 0 : i32
    %c0_i32_0 = arith.constant 0 : i32
    %c0_i32_1 = arith.constant 0 : i32
    return %arg0, %c0_i32, %c0_i32_0 : i32, i32, i32
  }
  func.func @transform_6(%arg0: i32, %arg1: i32) -> (i32, i32, i32) {
    %c0_i32 = arith.constant 0 : i32
    %c0_i32_0 = arith.constant 0 : i32
    %c0_i32_1 = arith.constant 0 : i32
    return %arg0, %c0_i32, %c0_i32_0 : i32, i32, i32
  }
}

module attributes {stable_mosaic.version = 11 : i64} {
  func.func @_bilstm_dir_kernel(%arg0: i32, %arg1: i32, %arg2: memref<2x16x32xf32, #tpu.memory_space<vmem>>, %arg3: memref<1x64x128xbf16, #tpu.memory_space<vmem>>, %arg4: memref<1x32x128xbf16, #tpu.memory_space<vmem>>, %arg5: memref<1x1x128xf32, #tpu.memory_space<vmem>>, %arg6: memref<1x8x2x32xf32, #tpu.memory_space<vmem>>, %arg7: memref<1x2x32xf32, #tpu.memory_space<vmem>>, %arg8: memref<1x2x32xf32, #tpu.memory_space<vmem>>, %arg9: memref<16x128xf32, #tpu.memory_space<vmem>>) attributes {dimension_semantics = [#tpu.dimension_semantics<parallel>, #tpu.dimension_semantics<arbitrary>], iteration_bounds = array<i64: 2, 1>, scalar_prefetch = 0 : i64, scratch_operands = 1 : i64, tpu.core_type = #tpu.core_type<tc>, window_params = [{transform_indices = @transform_0, window_bounds = array<i64: 2, 16, 32>}, {transform_indices = @transform_1, window_bounds = array<i64: 1, 64, 128>}, {transform_indices = @transform_2, window_bounds = array<i64: 1, 32, 128>}, {transform_indices = @transform_3, window_bounds = array<i64: 1, 1, 128>}, {transform_indices = @transform_4, window_bounds = array<i64: 1, 8, 2, 32>}, {transform_indices = @transform_5, window_bounds = array<i64: 1, 2, 32>}, {transform_indices = @transform_6, window_bounds = array<i64: 1, 2, 32>}]} {
    %cst = arith.constant 0.000000e+00 : f32
    %0 = vector.broadcast %cst : f32 to vector<16x128xf32>
    %c0 = arith.constant 0 : index
    %c0_0 = arith.constant 0 : index
    %c0_1 = arith.constant 0 : index
    %1 = vector.load %arg2[%c0, %c0_0, %c0_1] : memref<2x16x32xf32, #tpu.memory_space<vmem>>, vector<1x16x32xf32>
    %2 = vector.shape_cast %1 : vector<1x16x32xf32> to vector<16x32xf32>
    %3 = arith.truncf %2 : vector<16x32xf32> to vector<16x32xbf16>
    %c0_2 = arith.constant 0 : index
    %c0_3 = arith.constant 0 : index
    %c0_4 = arith.constant 0 : index
    %4 = vector.load %arg3[%c0_2, %c0_3, %c0_4] : memref<1x64x128xbf16, #tpu.memory_space<vmem>>, vector<1x32x128xbf16>
    %5 = vector.shape_cast %4 : vector<1x32x128xbf16> to vector<32x128xbf16>
    %cst_5 = arith.constant dense<0.000000e+00> : vector<16x128xf32>
    %6 = tpu.matmul %3, %5, %cst_5 {dimension_numbers = #tpu.dot_dimension_numbers<[1], [0], [0], [1], [0, 0, 1, 1], [], []>} : vector<16x32xbf16>, vector<32x128xbf16>, vector<16x128xf32> -> vector<16x128xf32>
    %7 = arith.addf %0, %6 : vector<16x128xf32>
    %c1 = arith.constant 1 : index
    %c0_6 = arith.constant 0 : index
    %c0_7 = arith.constant 0 : index
    %8 = vector.load %arg2[%c1, %c0_6, %c0_7] : memref<2x16x32xf32, #tpu.memory_space<vmem>>, vector<1x16x32xf32>
    %9 = vector.shape_cast %8 : vector<1x16x32xf32> to vector<16x32xf32>
    %10 = arith.truncf %9 : vector<16x32xf32> to vector<16x32xbf16>
    %c0_8 = arith.constant 0 : index
    %c32 = arith.constant 32 : index
    %c0_9 = arith.constant 0 : index
    %11 = vector.load %arg3[%c0_8, %c32, %c0_9] : memref<1x64x128xbf16, #tpu.memory_space<vmem>>, vector<1x32x128xbf16>
    %12 = vector.shape_cast %11 : vector<1x32x128xbf16> to vector<32x128xbf16>
    %cst_10 = arith.constant dense<0.000000e+00> : vector<16x128xf32>
    %13 = tpu.matmul %10, %12, %cst_10 {dimension_numbers = #tpu.dot_dimension_numbers<[1], [0], [0], [1], [0, 0, 1, 1], [], []>} : vector<16x32xbf16>, vector<32x128xbf16>, vector<16x128xf32> -> vector<16x128xf32>
    %14 = arith.addf %7, %13 : vector<16x128xf32>
    %c0_11 = arith.constant 0 : index
    %c0_12 = arith.constant 0 : index
    %c0_13 = arith.constant 0 : index
    %15 = vector.load %arg5[%c0_11, %c0_12, %c0_13] : memref<1x1x128xf32, #tpu.memory_space<vmem>>, vector<1x1x128xf32>
    %16 = vector.shape_cast %15 : vector<1x1x128xf32> to vector<1x128xf32>
    %17 = vector.broadcast %16 : vector<1x128xf32> to vector<16x128xf32>
    %18 = arith.addf %14, %17 : vector<16x128xf32>
    %c0_14 = arith.constant 0 : index
    %c0_15 = arith.constant 0 : index
    %19 = vector.load %arg9[%c0_14, %c0_15] : memref<16x128xf32, #tpu.memory_space<vmem>>, vector<16x128xf32>
    tpu.vector_store %arg9[%c0_14, %c0_15], %18 {strides = array<i32>} : memref<16x128xf32, #tpu.memory_space<vmem>>, vector<16x128xf32>,
    %c0_16 = arith.constant 0 : index
    %c0_17 = arith.constant 0 : index
    %c0_18 = arith.constant 0 : index
    %20 = vector.load %arg4[%c0_16, %c0_17, %c0_18] : memref<1x32x128xbf16, #tpu.memory_space<vmem>>, vector<1x32x128xbf16>
    %21 = vector.shape_cast %20 : vector<1x32x128xbf16> to vector<32x128xbf16>
    %c0_i32 = arith.constant 0 : i32
    %22 = arith.cmpi eq, %arg1, %c0_i32 : i32
    %23 = arith.extui %22 : i1 to i32
    %c0_i32_19 = arith.constant 0 : i32
    %24 = arith.cmpi ne, %23, %c0_i32_19 : i32
    scf.if %24 {
      %cst_105 = arith.constant 0.000000e+00 : f32
      %281 = vector.broadcast %cst_105 : f32 to vector<2x32xf32>
      %c0_106 = arith.constant 0 : index
      %c0_107 = arith.constant 0 : index
      %c0_108 = arith.constant 0 : index
      %282 = vector.load %arg7[%c0_106, %c0_107, %c0_108] : memref<1x2x32xf32, #tpu.memory_space<vmem>>, vector<1x2x32xf32>
      %283 = vector.shape_cast %282 : vector<1x2x32xf32> to vector<2x32xf32>
      %284 = vector.shape_cast %281 : vector<2x32xf32> to vector<1x2x32xf32>
      tpu.vector_store %arg7[%c0_106, %c0_107, %c0_108], %284 {strides = array<i32>} : memref<1x2x32xf32, #tpu.memory_space<vmem>>, vector<1x2x32xf32>,
      %cst_109 = arith.constant 0.000000e+00 : f32
      %285 = vector.broadcast %cst_109 : f32 to vector<2x32xf32>
      %c0_110 = arith.constant 0 : index
      %c0_111 = arith.constant 0 : index
      %c0_112 = arith.constant 0 : index
      %286 = vector.load %arg8[%c0_110, %c0_111, %c0_112] : memref<1x2x32xf32, #tpu.memory_space<vmem>>, vector<1x2x32xf32>
      %287 = vector.shape_cast %286 : vector<1x2x32xf32> to vector<2x32xf32>
      %288 = vector.shape_cast %285 : vector<2x32xf32> to vector<1x2x32xf32>
      tpu.vector_store %arg8[%c0_110, %c0_111, %c0_112], %288 {strides = array<i32>} : memref<1x2x32xf32, #tpu.memory_space<vmem>>, vector<1x2x32xf32>,
    } else {
    }
    %25 = tpu.iota {dimensions = array<i32: 1>} : vector<2x128xi32>
    %c64_i32 = arith.constant 64 : i32
    %26 = vector.broadcast %c64_i32 : i32 to vector<2x128xi32>
    %27 = arith.cmpi sge, %25, %26 : vector<2x128xi32>
    %c96_i32 = arith.constant 96 : i32
    %28 = vector.broadcast %c96_i32 : i32 to vector<2x128xi32>
    %29 = arith.cmpi slt, %25, %28 : vector<2x128xi32>
    %30 = arith.andi %27, %29 : vector<2x128xi1>
    %c0_20 = arith.constant 0 : index
    %c0_21 = arith.constant 0 : index
    %c0_22 = arith.constant 0 : index
    %31 = vector.load %arg7[%c0_20, %c0_21, %c0_22] : memref<1x2x32xf32, #tpu.memory_space<vmem>>, vector<1x2x32xf32>
    %32 = vector.shape_cast %31 : vector<1x2x32xf32> to vector<2x32xf32>
    %c0_23 = arith.constant 0 : index
    %c0_24 = arith.constant 0 : index
    %c0_25 = arith.constant 0 : index
    %33 = vector.load %arg8[%c0_23, %c0_24, %c0_25] : memref<1x2x32xf32, #tpu.memory_space<vmem>>, vector<1x2x32xf32>
    %34 = vector.shape_cast %33 : vector<1x2x32xf32> to vector<2x32xf32>
    %c0_i32_26 = arith.constant 0 : i32
    %c2_i32 = arith.constant 2 : i32
    %35 = arith.muli %c2_i32, %c0_i32_26 : i32
    %c7_i32 = arith.constant 7 : i32
    %36 = arith.subi %c7_i32, %35 : i32
    %37 = arith.muli %arg0, %36 : i32
    %38 = arith.addi %c0_i32_26, %37 : i32
    %c2_i32_27 = arith.constant 2 : i32
    %39 = arith.muli %38, %c2_i32_27 : i32
    %40 = arith.index_cast %39 : i32 to index
    %c0_28 = arith.constant 0 : index
    %41 = vector.load %arg9[%40, %c0_28] : memref<16x128xf32, #tpu.memory_space<vmem>>, vector<2x128xf32>
    %42 = arith.truncf %32 : vector<2x32xf32> to vector<2x32xbf16>
    %cst_29 = arith.constant dense<0.000000e+00> : vector<2x128xf32>
    %43 = tpu.matmul %42, %21, %cst_29 {dimension_numbers = #tpu.dot_dimension_numbers<[1], [0], [0], [1], [0, 0, 1, 1], [], []>} : vector<2x32xbf16>, vector<32x128xbf16>, vector<2x128xf32> -> vector<2x128xf32>
    %44 = arith.addf %41, %43 : vector<2x128xf32>
    %45 = math.tanh %44 : vector<2x128xf32>
    %46 = arith.negf %44 : vector<2x128xf32>
    %47 = math.exp %46 : vector<2x128xf32>
    %cst_30 = arith.constant 1.000000e+00 : f32
    %48 = vector.broadcast %cst_30 : f32 to vector<2x128xf32>
    %49 = arith.addf %48, %47 : vector<2x128xf32>
    %50 = arith.divf %48, %49 : vector<2x128xf32>
    %51 = arith.select %30, %45, %50 : vector<2x128xi1>, vector<2x128xf32>
    %52 = vector.extract_strided_slice %51 {offsets = [0, 0], sizes = [2, 32], strides = [1, 1]} : vector<2x128xf32> to vector<2x32xf32>
    %53 = vector.extract_strided_slice %51 {offsets = [0, 32], sizes = [2, 32], strides = [1, 1]} : vector<2x128xf32> to vector<2x32xf32>
    %54 = vector.extract_strided_slice %51 {offsets = [0, 64], sizes = [2, 32], strides = [1, 1]} : vector<2x128xf32> to vector<2x32xf32>
    %55 = vector.extract_strided_slice %51 {offsets = [0, 96], sizes = [2, 32], strides = [1, 1]} : vector<2x128xf32> to vector<2x32xf32>
    %56 = arith.mulf %53, %34 : vector<2x32xf32>
    %57 = arith.mulf %52, %54 : vector<2x32xf32>
    %58 = arith.addf %56, %57 : vector<2x32xf32>
    %59 = math.tanh %58 : vector<2x32xf32>
    %60 = arith.mulf %55, %59 : vector<2x32xf32>
    %c0_31 = arith.constant 0 : index
    %61 = arith.index_cast %38 : i32 to index
    %c0_32 = arith.constant 0 : index
    %c0_33 = arith.constant 0 : index
    %62 = vector.load %arg6[%c0_31, %61, %c0_32, %c0_33] : memref<1x8x2x32xf32, #tpu.memory_space<vmem>>, vector<1x1x2x32xf32>
    %63 = vector.shape_cast %62 : vector<1x1x2x32xf32> to vector<2x32xf32>
    %64 = vector.shape_cast %60 : vector<2x32xf32> to vector<1x1x2x32xf32>
    tpu.vector_store %arg6[%c0_31, %61, %c0_32, %c0_33], %64 {strides = array<i32>} : memref<1x8x2x32xf32, #tpu.memory_space<vmem>>, vector<1x1x2x32xf32>,
    %c1_i32 = arith.constant 1 : i32
    %c2_i32_34 = arith.constant 2 : i32
    %65 = arith.muli %c2_i32_34, %c1_i32 : i32
    %c7_i32_35 = arith.constant 7 : i32
    %66 = arith.subi %c7_i32_35, %65 : i32
    %67 = arith.muli %arg0, %66 : i32
    %68 = arith.addi %c1_i32, %67 : i32
    %c2_i32_36 = arith.constant 2 : i32
    %69 = arith.muli %68, %c2_i32_36 : i32
    %70 = arith.index_cast %69 : i32 to index
    %c0_37 = arith.constant 0 : index
    %71 = vector.load %arg9[%70, %c0_37] : memref<16x128xf32, #tpu.memory_space<vmem>>, vector<2x128xf32>
    %72 = arith.truncf %60 : vector<2x32xf32> to vector<2x32xbf16>
    %cst_38 = arith.constant dense<0.000000e+00> : vector<2x128xf32>
    %73 = tpu.matmul %72, %21, %cst_38 {dimension_numbers = #tpu.dot_dimension_numbers<[1], [0], [0], [1], [0, 0, 1, 1], [], []>} : vector<2x32xbf16>, vector<32x128xbf16>, vector<2x128xf32> -> vector<2x128xf32>
    %74 = arith.addf %71, %73 : vector<2x128xf32>
    %75 = math.tanh %74 : vector<2x128xf32>
    %76 = arith.negf %74 : vector<2x128xf32>
    %77 = math.exp %76 : vector<2x128xf32>
    %cst_39 = arith.constant 1.000000e+00 : f32
    %78 = vector.broadcast %cst_39 : f32 to vector<2x128xf32>
    %79 = arith.addf %78, %77 : vector<2x128xf32>
    %80 = arith.divf %78, %79 : vector<2x128xf32>
    %81 = arith.select %30, %75, %80 : vector<2x128xi1>, vector<2x128xf32>
    %82 = vector.extract_strided_slice %81 {offsets = [0, 0], sizes = [2, 32], strides = [1, 1]} : vector<2x128xf32> to vector<2x32xf32>
    %83 = vector.extract_strided_slice %81 {offsets = [0, 32], sizes = [2, 32], strides = [1, 1]} : vector<2x128xf32> to vector<2x32xf32>
    %84 = vector.extract_strided_slice %81 {offsets = [0, 64], sizes = [2, 32], strides = [1, 1]} : vector<2x128xf32> to vector<2x32xf32>
    %85 = vector.extract_strided_slice %81 {offsets = [0, 96], sizes = [2, 32], strides = [1, 1]} : vector<2x128xf32> to vector<2x32xf32>
    %86 = arith.mulf %83, %58 : vector<2x32xf32>
    %87 = arith.mulf %82, %84 : vector<2x32xf32>
    %88 = arith.addf %86, %87 : vector<2x32xf32>
    %89 = math.tanh %88 : vector<2x32xf32>
    %90 = arith.mulf %85, %89 : vector<2x32xf32>
    %c0_40 = arith.constant 0 : index
    %91 = arith.index_cast %68 : i32 to index
    %c0_41 = arith.constant 0 : index
    %c0_42 = arith.constant 0 : index
    %92 = vector.load %arg6[%c0_40, %91, %c0_41, %c0_42] : memref<1x8x2x32xf32, #tpu.memory_space<vmem>>, vector<1x1x2x32xf32>
    %93 = vector.shape_cast %92 : vector<1x1x2x32xf32> to vector<2x32xf32>
    %94 = vector.shape_cast %90 : vector<2x32xf32> to vector<1x1x2x32xf32>
    tpu.vector_store %arg6[%c0_40, %91, %c0_41, %c0_42], %94 {strides = array<i32>} : memref<1x8x2x32xf32, #tpu.memory_space<vmem>>, vector<1x1x2x32xf32>,
    %c2_i32_43 = arith.constant 2 : i32
    %c2_i32_44 = arith.constant 2 : i32
    %95 = arith.muli %c2_i32_44, %c2_i32_43 : i32
    %c7_i32_45 = arith.constant 7 : i32
    %96 = arith.subi %c7_i32_45, %95 : i32
    %97 = arith.muli %arg0, %96 : i32
    %98 = arith.addi %c2_i32_43, %97 : i32
    %c2_i32_46 = arith.constant 2 : i32
    %99 = arith.muli %98, %c2_i32_46 : i32
    %100 = arith.index_cast %99 : i32 to index
    %c0_47 = arith.constant 0 : index
    %101 = vector.load %arg9[%100, %c0_47] : memref<16x128xf32, #tpu.memory_space<vmem>>, vector<2x128xf32>
    %102 = arith.truncf %90 : vector<2x32xf32> to vector<2x32xbf16>
    %cst_48 = arith.constant dense<0.000000e+00> : vector<2x128xf32>
    %103 = tpu.matmul %102, %21, %cst_48 {dimension_numbers = #tpu.dot_dimension_numbers<[1], [0], [0], [1], [0, 0, 1, 1], [], []>} : vector<2x32xbf16>, vector<32x128xbf16>, vector<2x128xf32> -> vector<2x128xf32>
    %104 = arith.addf %101, %103 : vector<2x128xf32>
    %105 = math.tanh %104 : vector<2x128xf32>
    %106 = arith.negf %104 : vector<2x128xf32>
    %107 = math.exp %106 : vector<2x128xf32>
    %cst_49 = arith.constant 1.000000e+00 : f32
    %108 = vector.broadcast %cst_49 : f32 to vector<2x128xf32>
    %109 = arith.addf %108, %107 : vector<2x128xf32>
    %110 = arith.divf %108, %109 : vector<2x128xf32>
    %111 = arith.select %30, %105, %110 : vector<2x128xi1>, vector<2x128xf32>
    %112 = vector.extract_strided_slice %111 {offsets = [0, 0], sizes = [2, 32], strides = [1, 1]} : vector<2x128xf32> to vector<2x32xf32>
    %113 = vector.extract_strided_slice %111 {offsets = [0, 32], sizes = [2, 32], strides = [1, 1]} : vector<2x128xf32> to vector<2x32xf32>
    %114 = vector.extract_strided_slice %111 {offsets = [0, 64], sizes = [2, 32], strides = [1, 1]} : vector<2x128xf32> to vector<2x32xf32>
    %115 = vector.extract_strided_slice %111 {offsets = [0, 96], sizes = [2, 32], strides = [1, 1]} : vector<2x128xf32> to vector<2x32xf32>
    %116 = arith.mulf %113, %88 : vector<2x32xf32>
    %117 = arith.mulf %112, %114 : vector<2x32xf32>
    %118 = arith.addf %116, %117 : vector<2x32xf32>
    %119 = math.tanh %118 : vector<2x32xf32>
    %120 = arith.mulf %115, %119 : vector<2x32xf32>
    %c0_50 = arith.constant 0 : index
    %121 = arith.index_cast %98 : i32 to index
    %c0_51 = arith.constant 0 : index
    %c0_52 = arith.constant 0 : index
    %122 = vector.load %arg6[%c0_50, %121, %c0_51, %c0_52] : memref<1x8x2x32xf32, #tpu.memory_space<vmem>>, vector<1x1x2x32xf32>
    %123 = vector.shape_cast %122 : vector<1x1x2x32xf32> to vector<2x32xf32>
    %124 = vector.shape_cast %120 : vector<2x32xf32> to vector<1x1x2x32xf32>
    tpu.vector_store %arg6[%c0_50, %121, %c0_51, %c0_52], %124 {strides = array<i32>} : memref<1x8x2x32xf32, #tpu.memory_space<vmem>>, vector<1x1x2x32xf32>,
    %c3_i32 = arith.constant 3 : i32
    %c2_i32_53 = arith.constant 2 : i32
    %125 = arith.muli %c2_i32_53, %c3_i32 : i32
    %c7_i32_54 = arith.constant 7 : i32
    %126 = arith.subi %c7_i32_54, %125 : i32
    %127 = arith.muli %arg0, %126 : i32
    %128 = arith.addi %c3_i32, %127 : i32
    %c2_i32_55 = arith.constant 2 : i32
    %129 = arith.muli %128, %c2_i32_55 : i32
    %130 = arith.index_cast %129 : i32 to index
    %c0_56 = arith.constant 0 : index
    %131 = vector.load %arg9[%130, %c0_56] : memref<16x128xf32, #tpu.memory_space<vmem>>, vector<2x128xf32>
    %132 = arith.truncf %120 : vector<2x32xf32> to vector<2x32xbf16>
    %cst_57 = arith.constant dense<0.000000e+00> : vector<2x128xf32>
    %133 = tpu.matmul %132, %21, %cst_57 {dimension_numbers = #tpu.dot_dimension_numbers<[1], [0], [0], [1], [0, 0, 1, 1], [], []>} : vector<2x32xbf16>, vector<32x128xbf16>, vector<2x128xf32> -> vector<2x128xf32>
    %134 = arith.addf %131, %133 : vector<2x128xf32>
    %135 = math.tanh %134 : vector<2x128xf32>
    %136 = arith.negf %134 : vector<2x128xf32>
    %137 = math.exp %136 : vector<2x128xf32>
    %cst_58 = arith.constant 1.000000e+00 : f32
    %138 = vector.broadcast %cst_58 : f32 to vector<2x128xf32>
    %139 = arith.addf %138, %137 : vector<2x128xf32>
    %140 = arith.divf %138, %139 : vector<2x128xf32>
    %141 = arith.select %30, %135, %140 : vector<2x128xi1>, vector<2x128xf32>
    %142 = vector.extract_strided_slice %141 {offsets = [0, 0], sizes = [2, 32], strides = [1, 1]} : vector<2x128xf32> to vector<2x32xf32>
    %143 = vector.extract_strided_slice %141 {offsets = [0, 32], sizes = [2, 32], strides = [1, 1]} : vector<2x128xf32> to vector<2x32xf32>
    %144 = vector.extract_strided_slice %141 {offsets = [0, 64], sizes = [2, 32], strides = [1, 1]} : vector<2x128xf32> to vector<2x32xf32>
    %145 = vector.extract_strided_slice %141 {offsets = [0, 96], sizes = [2, 32], strides = [1, 1]} : vector<2x128xf32> to vector<2x32xf32>
    %146 = arith.mulf %143, %118 : vector<2x32xf32>
    %147 = arith.mulf %142, %144 : vector<2x32xf32>
    %148 = arith.addf %146, %147 : vector<2x32xf32>
    %149 = math.tanh %148 : vector<2x32xf32>
    %150 = arith.mulf %145, %149 : vector<2x32xf32>
    %c0_59 = arith.constant 0 : index
    %151 = arith.index_cast %128 : i32 to index
    %c0_60 = arith.constant 0 : index
    %c0_61 = arith.constant 0 : index
    %152 = vector.load %arg6[%c0_59, %151, %c0_60, %c0_61] : memref<1x8x2x32xf32, #tpu.memory_space<vmem>>, vector<1x1x2x32xf32>
    %153 = vector.shape_cast %152 : vector<1x1x2x32xf32> to vector<2x32xf32>
    %154 = vector.shape_cast %150 : vector<2x32xf32> to vector<1x1x2x32xf32>
    tpu.vector_store %arg6[%c0_59, %151, %c0_60, %c0_61], %154 {strides = array<i32>} : memref<1x8x2x32xf32, #tpu.memory_space<vmem>>, vector<1x1x2x32xf32>,
    %c4_i32 = arith.constant 4 : i32
    %c2_i32_62 = arith.constant 2 : i32
    %155 = arith.muli %c2_i32_62, %c4_i32 : i32
    %c7_i32_63 = arith.constant 7 : i32
    %156 = arith.subi %c7_i32_63, %155 : i32
    %157 = arith.muli %arg0, %156 : i32
    %158 = arith.addi %c4_i32, %157 : i32
    %c2_i32_64 = arith.constant 2 : i32
    %159 = arith.muli %158, %c2_i32_64 : i32
    %160 = arith.index_cast %159 : i32 to index
    %c0_65 = arith.constant 0 : index
    %161 = vector.load %arg9[%160, %c0_65] : memref<16x128xf32, #tpu.memory_space<vmem>>, vector<2x128xf32>
    %162 = arith.truncf %150 : vector<2x32xf32> to vector<2x32xbf16>
    %cst_66 = arith.constant dense<0.000000e+00> : vector<2x128xf32>
    %163 = tpu.matmul %162, %21, %cst_66 {dimension_numbers = #tpu.dot_dimension_numbers<[1], [0], [0], [1], [0, 0, 1, 1], [], []>} : vector<2x32xbf16>, vector<32x128xbf16>, vector<2x128xf32> -> vector<2x128xf32>
    %164 = arith.addf %161, %163 : vector<2x128xf32>
    %165 = math.tanh %164 : vector<2x128xf32>
    %166 = arith.negf %164 : vector<2x128xf32>
    %167 = math.exp %166 : vector<2x128xf32>
    %cst_67 = arith.constant 1.000000e+00 : f32
    %168 = vector.broadcast %cst_67 : f32 to vector<2x128xf32>
    %169 = arith.addf %168, %167 : vector<2x128xf32>
    %170 = arith.divf %168, %169 : vector<2x128xf32>
    %171 = arith.select %30, %165, %170 : vector<2x128xi1>, vector<2x128xf32>
    %172 = vector.extract_strided_slice %171 {offsets = [0, 0], sizes = [2, 32], strides = [1, 1]} : vector<2x128xf32> to vector<2x32xf32>
    %173 = vector.extract_strided_slice %171 {offsets = [0, 32], sizes = [2, 32], strides = [1, 1]} : vector<2x128xf32> to vector<2x32xf32>
    %174 = vector.extract_strided_slice %171 {offsets = [0, 64], sizes = [2, 32], strides = [1, 1]} : vector<2x128xf32> to vector<2x32xf32>
    %175 = vector.extract_strided_slice %171 {offsets = [0, 96], sizes = [2, 32], strides = [1, 1]} : vector<2x128xf32> to vector<2x32xf32>
    %176 = arith.mulf %173, %148 : vector<2x32xf32>
    %177 = arith.mulf %172, %174 : vector<2x32xf32>
    %178 = arith.addf %176, %177 : vector<2x32xf32>
    %179 = math.tanh %178 : vector<2x32xf32>
    %180 = arith.mulf %175, %179 : vector<2x32xf32>
    %c0_68 = arith.constant 0 : index
    %181 = arith.index_cast %158 : i32 to index
    %c0_69 = arith.constant 0 : index
    %c0_70 = arith.constant 0 : index
    %182 = vector.load %arg6[%c0_68, %181, %c0_69, %c0_70] : memref<1x8x2x32xf32, #tpu.memory_space<vmem>>, vector<1x1x2x32xf32>
    %183 = vector.shape_cast %182 : vector<1x1x2x32xf32> to vector<2x32xf32>
    %184 = vector.shape_cast %180 : vector<2x32xf32> to vector<1x1x2x32xf32>
    tpu.vector_store %arg6[%c0_68, %181, %c0_69, %c0_70], %184 {strides = array<i32>} : memref<1x8x2x32xf32, #tpu.memory_space<vmem>>, vector<1x1x2x32xf32>,
    %c5_i32 = arith.constant 5 : i32
    %c2_i32_71 = arith.constant 2 : i32
    %185 = arith.muli %c2_i32_71, %c5_i32 : i32
    %c7_i32_72 = arith.constant 7 : i32
    %186 = arith.subi %c7_i32_72, %185 : i32
    %187 = arith.muli %arg0, %186 : i32
    %188 = arith.addi %c5_i32, %187 : i32
    %c2_i32_73 = arith.constant 2 : i32
    %189 = arith.muli %188, %c2_i32_73 : i32
    %190 = arith.index_cast %189 : i32 to index
    %c0_74 = arith.constant 0 : index
    %191 = vector.load %arg9[%190, %c0_74] : memref<16x128xf32, #tpu.memory_space<vmem>>, vector<2x128xf32>
    %192 = arith.truncf %180 : vector<2x32xf32> to vector<2x32xbf16>
    %cst_75 = arith.constant dense<0.000000e+00> : vector<2x128xf32>
    %193 = tpu.matmul %192, %21, %cst_75 {dimension_numbers = #tpu.dot_dimension_numbers<[1], [0], [0], [1], [0, 0, 1, 1], [], []>} : vector<2x32xbf16>, vector<32x128xbf16>, vector<2x128xf32> -> vector<2x128xf32>
    %194 = arith.addf %191, %193 : vector<2x128xf32>
    %195 = math.tanh %194 : vector<2x128xf32>
    %196 = arith.negf %194 : vector<2x128xf32>
    %197 = math.exp %196 : vector<2x128xf32>
    %cst_76 = arith.constant 1.000000e+00 : f32
    %198 = vector.broadcast %cst_76 : f32 to vector<2x128xf32>
    %199 = arith.addf %198, %197 : vector<2x128xf32>
    %200 = arith.divf %198, %199 : vector<2x128xf32>
    %201 = arith.select %30, %195, %200 : vector<2x128xi1>, vector<2x128xf32>
    %202 = vector.extract_strided_slice %201 {offsets = [0, 0], sizes = [2, 32], strides = [1, 1]} : vector<2x128xf32> to vector<2x32xf32>
    %203 = vector.extract_strided_slice %201 {offsets = [0, 32], sizes = [2, 32], strides = [1, 1]} : vector<2x128xf32> to vector<2x32xf32>
    %204 = vector.extract_strided_slice %201 {offsets = [0, 64], sizes = [2, 32], strides = [1, 1]} : vector<2x128xf32> to vector<2x32xf32>
    %205 = vector.extract_strided_slice %201 {offsets = [0, 96], sizes = [2, 32], strides = [1, 1]} : vector<2x128xf32> to vector<2x32xf32>
    %206 = arith.mulf %203, %178 : vector<2x32xf32>
    %207 = arith.mulf %202, %204 : vector<2x32xf32>
    %208 = arith.addf %206, %207 : vector<2x32xf32>
    %209 = math.tanh %208 : vector<2x32xf32>
    %210 = arith.mulf %205, %209 : vector<2x32xf32>
    %c0_77 = arith.constant 0 : index
    %211 = arith.index_cast %188 : i32 to index
    %c0_78 = arith.constant 0 : index
    %c0_79 = arith.constant 0 : index
    %212 = vector.load %arg6[%c0_77, %211, %c0_78, %c0_79] : memref<1x8x2x32xf32, #tpu.memory_space<vmem>>, vector<1x1x2x32xf32>
    %213 = vector.shape_cast %212 : vector<1x1x2x32xf32> to vector<2x32xf32>
    %214 = vector.shape_cast %210 : vector<2x32xf32> to vector<1x1x2x32xf32>
    tpu.vector_store %arg6[%c0_77, %211, %c0_78, %c0_79], %214 {strides = array<i32>} : memref<1x8x2x32xf32, #tpu.memory_space<vmem>>, vector<1x1x2x32xf32>,
    %c6_i32 = arith.constant 6 : i32
    %c2_i32_80 = arith.constant 2 : i32
    %215 = arith.muli %c2_i32_80, %c6_i32 : i32
    %c7_i32_81 = arith.constant 7 : i32
    %216 = arith.subi %c7_i32_81, %215 : i32
    %217 = arith.muli %arg0, %216 : i32
    %218 = arith.addi %c6_i32, %217 : i32
    %c2_i32_82 = arith.constant 2 : i32
    %219 = arith.muli %218, %c2_i32_82 : i32
    %220 = arith.index_cast %219 : i32 to index
    %c0_83 = arith.constant 0 : index
    %221 = vector.load %arg9[%220, %c0_83] : memref<16x128xf32, #tpu.memory_space<vmem>>, vector<2x128xf32>
    %222 = arith.truncf %210 : vector<2x32xf32> to vector<2x32xbf16>
    %cst_84 = arith.constant dense<0.000000e+00> : vector<2x128xf32>
    %223 = tpu.matmul %222, %21, %cst_84 {dimension_numbers = #tpu.dot_dimension_numbers<[1], [0], [0], [1], [0, 0, 1, 1], [], []>} : vector<2x32xbf16>, vector<32x128xbf16>, vector<2x128xf32> -> vector<2x128xf32>
    %224 = arith.addf %221, %223 : vector<2x128xf32>
    %225 = math.tanh %224 : vector<2x128xf32>
    %226 = arith.negf %224 : vector<2x128xf32>
    %227 = math.exp %226 : vector<2x128xf32>
    %cst_85 = arith.constant 1.000000e+00 : f32
    %228 = vector.broadcast %cst_85 : f32 to vector<2x128xf32>
    %229 = arith.addf %228, %227 : vector<2x128xf32>
    %230 = arith.divf %228, %229 : vector<2x128xf32>
    %231 = arith.select %30, %225, %230 : vector<2x128xi1>, vector<2x128xf32>
    %232 = vector.extract_strided_slice %231 {offsets = [0, 0], sizes = [2, 32], strides = [1, 1]} : vector<2x128xf32> to vector<2x32xf32>
    %233 = vector.extract_strided_slice %231 {offsets = [0, 32], sizes = [2, 32], strides = [1, 1]} : vector<2x128xf32> to vector<2x32xf32>
    %234 = vector.extract_strided_slice %231 {offsets = [0, 64], sizes = [2, 32], strides = [1, 1]} : vector<2x128xf32> to vector<2x32xf32>
    %235 = vector.extract_strided_slice %231 {offsets = [0, 96], sizes = [2, 32], strides = [1, 1]} : vector<2x128xf32> to vector<2x32xf32>
    %236 = arith.mulf %233, %208 : vector<2x32xf32>
    %237 = arith.mulf %232, %234 : vector<2x32xf32>
    %238 = arith.addf %236, %237 : vector<2x32xf32>
    %239 = math.tanh %238 : vector<2x32xf32>
    %240 = arith.mulf %235, %239 : vector<2x32xf32>
    %c0_86 = arith.constant 0 : index
    %241 = arith.index_cast %218 : i32 to index
    %c0_87 = arith.constant 0 : index
    %c0_88 = arith.constant 0 : index
    %242 = vector.load %arg6[%c0_86, %241, %c0_87, %c0_88] : memref<1x8x2x32xf32, #tpu.memory_space<vmem>>, vector<1x1x2x32xf32>
    %243 = vector.shape_cast %242 : vector<1x1x2x32xf32> to vector<2x32xf32>
    %244 = vector.shape_cast %240 : vector<2x32xf32> to vector<1x1x2x32xf32>
    tpu.vector_store %arg6[%c0_86, %241, %c0_87, %c0_88], %244 {strides = array<i32>} : memref<1x8x2x32xf32, #tpu.memory_space<vmem>>, vector<1x1x2x32xf32>,
    %c7_i32_89 = arith.constant 7 : i32
    %c2_i32_90 = arith.constant 2 : i32
    %245 = arith.muli %c2_i32_90, %c7_i32_89 : i32
    %c7_i32_91 = arith.constant 7 : i32
    %246 = arith.subi %c7_i32_91, %245 : i32
    %247 = arith.muli %arg0, %246 : i32
    %248 = arith.addi %c7_i32_89, %247 : i32
    %c2_i32_92 = arith.constant 2 : i32
    %249 = arith.muli %248, %c2_i32_92 : i32
    %250 = arith.index_cast %249 : i32 to index
    %c0_93 = arith.constant 0 : index
    %251 = vector.load %arg9[%250, %c0_93] : memref<16x128xf32, #tpu.memory_space<vmem>>, vector<2x128xf32>
    %252 = arith.truncf %240 : vector<2x32xf32> to vector<2x32xbf16>
    %cst_94 = arith.constant dense<0.000000e+00> : vector<2x128xf32>
    %253 = tpu.matmul %252, %21, %cst_94 {dimension_numbers = #tpu.dot_dimension_numbers<[1], [0], [0], [1], [0, 0, 1, 1], [], []>} : vector<2x32xbf16>, vector<32x128xbf16>, vector<2x128xf32> -> vector<2x128xf32>
    %254 = arith.addf %251, %253 : vector<2x128xf32>
    %255 = math.tanh %254 : vector<2x128xf32>
    %256 = arith.negf %254 : vector<2x128xf32>
    %257 = math.exp %256 : vector<2x128xf32>
    %cst_95 = arith.constant 1.000000e+00 : f32
    %258 = vector.broadcast %cst_95 : f32 to vector<2x128xf32>
    %259 = arith.addf %258, %257 : vector<2x128xf32>
    %260 = arith.divf %258, %259 : vector<2x128xf32>
    %261 = arith.select %30, %255, %260 : vector<2x128xi1>, vector<2x128xf32>
    %262 = vector.extract_strided_slice %261 {offsets = [0, 0], sizes = [2, 32], strides = [1, 1]} : vector<2x128xf32> to vector<2x32xf32>
    %263 = vector.extract_strided_slice %261 {offsets = [0, 32], sizes = [2, 32], strides = [1, 1]} : vector<2x128xf32> to vector<2x32xf32>
    %264 = vector.extract_strided_slice %261 {offsets = [0, 64], sizes = [2, 32], strides = [1, 1]} : vector<2x128xf32> to vector<2x32xf32>
    %265 = vector.extract_strided_slice %261 {offsets = [0, 96], sizes = [2, 32], strides = [1, 1]} : vector<2x128xf32> to vector<2x32xf32>
    %266 = arith.mulf %263, %238 : vector<2x32xf32>
    %267 = arith.mulf %262, %264 : vector<2x32xf32>
    %268 = arith.addf %266, %267 : vector<2x32xf32>
    %269 = math.tanh %268 : vector<2x32xf32>
    %270 = arith.mulf %265, %269 : vector<2x32xf32>
    %c0_96 = arith.constant 0 : index
    %271 = arith.index_cast %248 : i32 to index
    %c0_97 = arith.constant 0 : index
    %c0_98 = arith.constant 0 : index
    %272 = vector.load %arg6[%c0_96, %271, %c0_97, %c0_98] : memref<1x8x2x32xf32, #tpu.memory_space<vmem>>, vector<1x1x2x32xf32>
    %273 = vector.shape_cast %272 : vector<1x1x2x32xf32> to vector<2x32xf32>
    %274 = vector.shape_cast %270 : vector<2x32xf32> to vector<1x1x2x32xf32>
    tpu.vector_store %arg6[%c0_96, %271, %c0_97, %c0_98], %274 {strides = array<i32>} : memref<1x8x2x32xf32, #tpu.memory_space<vmem>>, vector<1x1x2x32xf32>,
    %c8_i32 = arith.constant 8 : i32
    %c0_99 = arith.constant 0 : index
    %c0_100 = arith.constant 0 : index
    %c0_101 = arith.constant 0 : index
    %275 = vector.load %arg7[%c0_99, %c0_100, %c0_101] : memref<1x2x32xf32, #tpu.memory_space<vmem>>, vector<1x2x32xf32>
    %276 = vector.shape_cast %275 : vector<1x2x32xf32> to vector<2x32xf32>
    %277 = vector.shape_cast %270 : vector<2x32xf32> to vector<1x2x32xf32>
    tpu.vector_store %arg7[%c0_99, %c0_100, %c0_101], %277 {strides = array<i32>} : memref<1x2x32xf32, #tpu.memory_space<vmem>>, vector<1x2x32xf32>,
    %c0_102 = arith.constant 0 : index
    %c0_103 = arith.constant 0 : index
    %c0_104 = arith.constant 0 : index
    %278 = vector.load %arg8[%c0_102, %c0_103, %c0_104] : memref<1x2x32xf32, #tpu.memory_space<vmem>>, vector<1x2x32xf32>
    %279 = vector.shape_cast %278 : vector<1x2x32xf32> to vector<2x32xf32>
    %280 = vector.shape_cast %268 : vector<2x32xf32> to vector<1x2x32xf32>
    tpu.vector_store %arg8[%c0_102, %c0_103, %c0_104], %280 {strides = array<i32>} : memref<1x2x32xf32, #tpu.memory_space<vmem>>, vector<1x2x32xf32>,
    return
  }
  func.func @transform_0(%arg0: i32, %arg1: i32) -> (i32, i32, i32) {
    %c2_i32 = arith.constant 2 : i32
    %0 = arith.muli %c2_i32, %arg1 : i32
    %c0_i32 = arith.constant 0 : i32
    %1 = arith.subi %c0_i32, %0 : i32
    %2 = arith.muli %arg0, %1 : i32
    %3 = arith.addi %arg1, %2 : i32
    %c0_i32_0 = arith.constant 0 : i32
    %c0_i32_1 = arith.constant 0 : i32
    %c0_i32_2 = arith.constant 0 : i32
    return %c0_i32_0, %3, %c0_i32_1 : i32, i32, i32
  }
  func.func @transform_1(%arg0: i32, %arg1: i32) -> (i32, i32, i32) {
    %c0_i32 = arith.constant 0 : i32
    %c0_i32_0 = arith.constant 0 : i32
    %c0_i32_1 = arith.constant 0 : i32
    return %arg0, %c0_i32, %c0_i32_0 : i32, i32, i32
  }
  func.func @transform_2(%arg0: i32, %arg1: i32) -> (i32, i32, i32) {
    %c0_i32 = arith.constant 0 : i32
    %c0_i32_0 = arith.constant 0 : i32
    %c0_i32_1 = arith.constant 0 : i32
    return %arg0, %c0_i32, %c0_i32_0 : i32, i32, i32
  }
  func.func @transform_3(%arg0: i32, %arg1: i32) -> (i32, i32, i32) {
    %c0_i32 = arith.constant 0 : i32
    %c0_i32_0 = arith.constant 0 : i32
    %c0_i32_1 = arith.constant 0 : i32
    return %arg0, %c0_i32, %c0_i32_0 : i32, i32, i32
  }
  func.func @transform_4(%arg0: i32, %arg1: i32) -> (i32, i32, i32, i32) {
    %c2_i32 = arith.constant 2 : i32
    %0 = arith.muli %c2_i32, %arg1 : i32
    %c0_i32 = arith.constant 0 : i32
    %1 = arith.subi %c0_i32, %0 : i32
    %2 = arith.muli %arg0, %1 : i32
    %3 = arith.addi %arg1, %2 : i32
    %c0_i32_0 = arith.constant 0 : i32
    %c0_i32_1 = arith.constant 0 : i32
    %c0_i32_2 = arith.constant 0 : i32
    return %arg0, %3, %c0_i32_0, %c0_i32_1 : i32, i32, i32, i32
  }
  func.func @transform_5(%arg0: i32, %arg1: i32) -> (i32, i32, i32) {
    %c0_i32 = arith.constant 0 : i32
    %c0_i32_0 = arith.constant 0 : i32
    %c0_i32_1 = arith.constant 0 : i32
    return %arg0, %c0_i32, %c0_i32_0 : i32, i32, i32
  }
  func.func @transform_6(%arg0: i32, %arg1: i32) -> (i32, i32, i32) {
    %c0_i32 = arith.constant 0 : i32
    %c0_i32_0 = arith.constant 0 : i32
    %c0_i32_1 = arith.constant 0 : i32
    return %arg0, %c0_i32, %c0_i32_0 : i32, i32, i32
  }
}

module attributes {stable_mosaic.version = 11 : i64} {
  func.func @_fc_head_fused_kernel(%arg0: i32, %arg1: memref<16x32xf32, #tpu.memory_space<vmem>>, %arg2: memref<32x64xbf16, #tpu.memory_space<vmem>>, %arg3: memref<1x64xf32, #tpu.memory_space<vmem>>, %arg4: memref<16x64xf32, #tpu.memory_space<vmem>>) attributes {dimension_semantics = [#tpu.dimension_semantics<parallel>], iteration_bounds = array<i64: 1>, scalar_prefetch = 0 : i64, scratch_operands = 0 : i64, tpu.core_type = #tpu.core_type<tc>, window_params = [{transform_indices = @transform_0, window_bounds = array<i64: 16, 32>}, {pipeline_mode = #tpu.pipeline_mode<synchronous>, transform_indices = @transform_1, window_bounds = array<i64: 32, 64>}, {pipeline_mode = #tpu.pipeline_mode<synchronous>, transform_indices = @transform_2, window_bounds = array<i64: 1, 64>}, {transform_indices = @transform_3, window_bounds = array<i64: 16, 64>}]} {
    %c0 = arith.constant 0 : index
    %c0_0 = arith.constant 0 : index
    %0 = vector.load %arg1[%c0, %c0_0] : memref<16x32xf32, #tpu.memory_space<vmem>>, vector<16x32xf32>
    %1 = arith.truncf %0 : vector<16x32xf32> to vector<16x32xbf16>
    %c0_1 = arith.constant 0 : index
    %c0_2 = arith.constant 0 : index
    %2 = vector.load %arg2[%c0_1, %c0_2] : memref<32x64xbf16, #tpu.memory_space<vmem>>, vector<32x64xbf16>
    %cst = arith.constant dense<0.000000e+00> : vector<16x64xf32>
    %3 = tpu.matmul %1, %2, %cst {dimension_numbers = #tpu.dot_dimension_numbers<[1], [0], [0], [1], [0, 0, 1, 1], [], []>} : vector<16x32xbf16>, vector<32x64xbf16>, vector<16x64xf32> -> vector<16x64xf32>
    %c0_3 = arith.constant 0 : index
    %c0_4 = arith.constant 0 : index
    %4 = vector.load %arg3[%c0_3, %c0_4] : memref<1x64xf32, #tpu.memory_space<vmem>>, vector<1x64xf32>
    %5 = vector.broadcast %4 : vector<1x64xf32> to vector<16x64xf32>
    %6 = arith.addf %3, %5 : vector<16x64xf32>
    %cst_5 = arith.constant 0.000000e+00 : f32
    %7 = vector.broadcast %cst_5 : f32 to vector<16x64xf32>
    %8 = arith.maximumf %6, %7 : vector<16x64xf32>
    %cst_6 = arith.constant dense<0xFF800000> : vector<16xf32>
    %9 = vector.multi_reduction <maximumf>, %8, %cst_6 [1] : vector<16x64xf32> to vector<16xf32>
    %10 = vector.shape_cast %9 : vector<16xf32> to vector<16x1xf32>
    %11 = vector.broadcast %10 : vector<16x1xf32> to vector<16x64xf32>
    %12 = arith.subf %8, %11 : vector<16x64xf32>
    %13 = math.exp %12 : vector<16x64xf32>
    %cst_7 = arith.constant dense<0.000000e+00> : vector<16xf32>
    %14 = vector.multi_reduction <add>, %13, %cst_7 [1] : vector<16x64xf32> to vector<16xf32>
    %15 = vector.shape_cast %14 : vector<16xf32> to vector<16x1xf32>
    %16 = math.log %15 : vector<16x1xf32>
    %17 = arith.addf %10, %16 : vector<16x1xf32>
    %18 = vector.broadcast %17 : vector<16x1xf32> to vector<16x64xf32>
    %19 = arith.subf %8, %18 : vector<16x64xf32>
    %c0_8 = arith.constant 0 : index
    %c0_9 = arith.constant 0 : index
    %20 = vector.load %arg4[%c0_8, %c0_9] : memref<16x64xf32, #tpu.memory_space<vmem>>, vector<16x64xf32>
    tpu.vector_store %arg4[%c0_8, %c0_9], %19 {strides = array<i32>} : memref<16x64xf32, #tpu.memory_space<vmem>>, vector<16x64xf32>,
    return
  }
  func.func @transform_0(%arg0: i32) -> (i32, i32) {
    %c0_i32 = arith.constant 0 : i32
    %c0_i32_0 = arith.constant 0 : i32
    return %arg0, %c0_i32 : i32, i32
  }
  func.func @transform_1(%arg0: i32) -> (i32, i32) {
    %c0_i32 = arith.constant 0 : i32
    %c0_i32_0 = arith.constant 0 : i32
    %c0_i32_1 = arith.constant 0 : i32
    return %c0_i32, %c0_i32_0 : i32, i32
  }
  func.func @transform_2(%arg0: i32) -> (i32, i32) {
    %c0_i32 = arith.constant 0 : i32
    %c0_i32_0 = arith.constant 0 : i32
    %c0_i32_1 = arith.constant 0 : i32
    return %c0_i32, %c0_i32_0 : i32, i32
  }
  func.func @transform_3(%arg0: i32) -> (i32, i32) {
    %c0_i32 = arith.constant 0 : i32
    %c0_i32_0 = arith.constant 0 : i32
    return %arg0, %c0_i32 : i32, i32
  }
}

</mosaic_0001>

<llo_original>
// kernel: bilm_forward.7
$region0: #{bilm_forward.7}
  #allocation0 [shape = 'u32[]', space=smem, size = 0x4, offset = 0x4, fixed_abs, tag = 'smem constant byte address 0x4 - core index']
  #allocation1 [shape = 'u32[72,128]{1,0:T(1,128)}', space=vmem, size = 0x9000, scoped, tag = 'internal scratch']
  %s0 = inlined_call_operand.vmem [shape: f32[16,32], index: 0, kind: input, shape index: {}]
  %s1 = inlined_call_operand.vmem [shape: bf16[32,64], index: 1, kind: input, shape index: {}]
  %s2 = inlined_call_operand.vmem [shape: f32[1,64], index: 2, kind: input, shape index: {}]
  %s3 = inlined_call_operand.hbm [shape: f32[16,64], index: 3, kind: output, shape index: {}]
  %s4 = sld [smem:[#allocation0]]
  $region22: #{bilm_forward.7} parent=0
    _
  %s6 = ssub.s32 1, %s4
  %s7 = scalar_select 0, %s6, %s4
  $region1: #{bilm_forward.7} parent=0
    #allocation2 [shape = 'u8[8192]{0}', space=vmem, size = 0x2000, scoped, tag = 'output window, operand 0, single buffered']
    #allocation3 [shape = 's32[1]{0}', space=sflag, size = 0x4, scoped, tag = 'scoped memory for bilm_forward.7']
    %8 = vsyncpa [#allocation3], 0
    // Predicated region
    $region2: #{bilm_forward.7} parent=1 // pred_check
      _
    $region3: #{bilm_forward.7} parent=1 // pred_check_branch
      %10 = sbr.rel (0) target = $region5
    $region4: #{bilm_forward.7} parent=1 // pred_region
      _
    $region5: #{bilm_forward.7} parent=1 // pred_fallthru
      _
    // Predicated region
    $region6: #{bilm_forward.7} parent=1 // pred_check
      _
    $region7: #{bilm_forward.7} parent=1 // pred_check_branch
      %12 = sbr.rel (0) target = $region9
    $region8: #{bilm_forward.7} parent=1 // pred_region
      _
    $region9: #{bilm_forward.7} parent=1 // pred_fallthru
      _
    // Predicated region
    $region10: #{bilm_forward.7} parent=1 // pred_check
      _
    $region11: #{bilm_forward.7} parent=1 // pred_check_branch
      %14 = sbr.rel (0) target = $region13
    $region12: #{bilm_forward.7} parent=1 // pred_region
      _
    $region13: #{bilm_forward.7} parent=1 // pred_fallthru
      _
    %v16 = vld [vmem:[%s0] sm:$0xff]
    %v17 = vld [vmem:[%s0 + $0x8] sm:$0xff]
    %v18 = vpack.c.bf16 %v17, %v16
    %v19 = vld [vmem:[%s1] sm:$0xf]
    %v20 = vld [vmem:[%s1 + $0x4] sm:$0xf]
    %v21 = vld [vmem:[%s1 + $0x8] sm:$0xf]
    %v22 = vld [vmem:[%s1 + $0xc] sm:$0xf]
    %v23 = vld [vmem:[%s2] sm:$0x1]
    %v25 = vperm.slane %v23, 0
    %v31 = vunpack.c.l.b16 %v19
    %v32 = vunpack.c.l.b16 %v20
    %v33 = vunpack.c.l.b16 %v21
    %v34 = vunpack.c.l.b16 %v22
    %v35 = vpack.c.b16 %v32, %v31
    %v36 = vpack.c.b16 %v34, %v33
    %vm39 = vcmask 261120
    %v41 = vsel %vm39, %v18, 0
    %43 = vmatpush.bf16.msra.mxu0 0
    %44 = vmatpush.bf16.msra.mxu0 0
    %45 = vmatpush.bf16.msra.mxu0 0
    %46 = vmatpush.bf16.msra.mxu0 0
    %47 = vmatpush.bf16.msra.mxu0 0
    %48 = vmatpush.bf16.msra.mxu0 0
    %49 = vmatpush.bf16.msra.mxu0 %v36
    %50 = vmatpush.bf16.msra.mxu0 %v35
    %51 = vmatmul.bf16.gmra.mxu0 %v41
    %v52 = vpop.f32.mrf.mxu0
    %v53 = vadd.f32 %v25, %v52
    %v54 = vpop.f32.mrf.mxu0
    %v55 = vadd.f32 %v25, %v54
    %56 = vdwg.mxu0
    %v57 = vmax.f32 %v53, 0.0
    %v58 = vmax.f32 %v55, 0.0
    %vm59 = vcmask 523264
    %v60 = vsel %vm59, %v57, -inf
    %61 = vmax.xlane.f32.xlu0 %v60
    %v62 = vpop.xlane.xlu0 %61
    %v63 = vsel %vm59, %v58, -inf
    %64 = vmax.xlane.f32.xlu0 %v63
    %v65 = vpop.xlane.xlu0 %64
    %v66 = vsub.f32 %v57, %v62
    %v67 = vsub.f32 %v58, %v65
    %v68 = vmul.f32 %v66, 1.442695
    %v69 = vpow.pop %v68
    %v70 = vmul.f32 %v67, 1.442695
    %v71 = vpow.pop %v70
    %v72 = vsel %vm59, %v69, 0.0
    %73 = vadd.xlane.f32.xlu0 %v72
    %v74 = vpop.xlane.xlu0 %73
    %v75 = vsel %vm59, %v71, 0.0
    %76 = vadd.xlane.f32.xlu0 %v75
    %v77 = vpop.xlane.xlu0 %76
    %v78 = vlog2.pop %v74
    %v79 = vmul.f32 %v78, 0.6931472
    %v80 = vlog2.pop %v77
    %v81 = vmul.f32 %v80, 0.6931472
    %v82 = vadd.f32 %v62, %v79
    %v83 = vadd.f32 %v65, %v81
    %v84 = vsub.f32 %v57, %v82
    %v85 = vsub.f32 %v58, %v83
    %86 = vst.msk [vmem:[#allocation2] sm:$0xff] %vm59, %v84
    %87 = vst.msk [vmem:[#allocation2 + $0x8] sm:$0xff] %vm59, %v85
    // Predicated region
    $region14: #{bilm_forward.7} parent=1 // pred_check
      _
    $region15: #{bilm_forward.7} parent=1 // pred_check_branch
      %89 = sbr.rel (0) target = $region17
    $region16: #{bilm_forward.7} parent=1 // pred_region
      %91 = vsyncadd [#allocation3], 0
      %s92 = sshll.u32 [#allocation2], 4
      %s93 = int_to_ptr.vmem [resolvable:$true] %s92
      %s94 = sshll.u32 %s3, 4
      %s95 = int_to_ptr.hbm [resolvable:$true] %s94
      %100 = dma.vmem_to_hbm [thread:$0]  %s93, 256, %s95, [#allocation3], 128, 128, 8
    $region17: #{bilm_forward.7} parent=1 // pred_fallthru
      _
    // Predicated region
    $region18: #{bilm_forward.7} parent=1 // pred_check
      _
    $region19: #{bilm_forward.7} parent=1 // pred_check_branch
      %102 = sbr.rel (0) target = $region21
    $region20: #{bilm_forward.7} parent=1 // pred_region
      %104 = dma.done [#allocation3], 256
    $region21: #{bilm_forward.7} parent=1 // pred_fallthru
      _
    %105 = vsyncpa [#allocation3], 1

// kernel: bilm_forward.5
$region0: #{bilm_forward.5}
  #allocation0 [shape = 'u32[]', space=smem, size = 0x4, offset = 0x4, fixed_abs, tag = 'smem constant byte address 0x4 - core index']
  #allocation1 [shape = 'u32[72,128]{1,0:T(1,128)}', space=vmem, size = 0x9000, scoped, tag = 'internal scratch']
  #allocation2 [shape = 'f32[16,128]{1,0:T(8,128)}', space=vmem, size = 0x2000, scoped, tag = 'scratch operand']
  %s0 = inlined_call_operand.vmem [shape: f32[2,16,32], index: 0, kind: input, shape index: {}]
  %s1 = inlined_call_operand.vmem [shape: bf16[2,64,128], index: 1, kind: input, shape index: {}]
  %s2 = inlined_call_operand.vmem [shape: bf16[2,32,128], index: 2, kind: input, shape index: {}]
  %s3 = inlined_call_operand.vmem [shape: f32[2,1,128], index: 3, kind: input, shape index: {}]
  %s4 = inlined_call_operand.vmem [shape: f32[2,8,2,32], index: 4, kind: output, shape index: {0}]
  %s5 = inlined_call_operand.vmem [shape: f32[2,2,32], index: 5, kind: output, shape index: {1}]
  %s6 = inlined_call_operand.vmem [shape: f32[2,2,32], index: 6, kind: output, shape index: {2}]
  %7 = xla_tuple %s4, %s5, %s6
  %s8 = sld [smem:[#allocation0]]
  $region69: #{bilm_forward.5} parent=0
    _
  %s10 = ssub.s32 1, %s8
  %s11 = scalar_select 0, %s10, %s8
  loop: start=0, step=1, limit=4
  $region2: #{bilm_forward.5} parent=0 // loop_pre_header
    _
  $region3: #{bilm_forward.5} parent=0 // loop_header
    %s13 = sphi 0, %s17
    %p14 = scmp.ge.s32.totalorder %s13, 4
    %s20 = sphi 0, %s32
    %s21 = sphi 0, %s28
    %s22 = sphi 0, %s20
    %s23 = sphi 0, %s21
    %s24 = sphi 0, %s22
    %s25 = sphi 0, %s23
    %s43 = sphi 0, %s45
    %s46 = sphi 0, %s43
    %s47 = sphi 0, %s46
    %s63 = sphi 0, %s47
    %s69 = sphi 0, %s71
    %s72 = sphi 0, %s69
    %s73 = sphi 0, %s72
    %s89 = sphi 0, %s73
    %s95 = sphi 0, %s97
    %s98 = sphi 0, %s95
    %s99 = sphi 0, %s98
    %s115 = sphi 0, %s99
    %s121 = sphi 0, %s123
    %s124 = sphi 0, %s121
    %s125 = sphi 0, %s124
    %s141 = sphi 0, %s125
    %s157 = sphi 0, %s159
    %s160 = sphi 0, %s157
    %s161 = sphi 0, %s160
    %s177 = sphi 0, %s161
    %s183 = sphi 0, %s185
    %s186 = sphi 0, %s183
    %s187 = sphi 0, %s186
    %s203 = sphi 0, %s187
    %s209 = sphi 0, %s211
    %s212 = sphi 0, %s209
    %s213 = sphi 0, %s212
    %s229 = sphi 0, %s213
  $region4: #{bilm_forward.5} parent=0 // loop_header_branch
    %16 = sbr.rel (%p14) target = $region8
  $region5: #{bilm_forward.5} parent=0 // loop_body
    %s18 = ssub.s32 %s13, 1
    %s19 = ssub.s32 %s13, 2
    %s26 = sadd.s32 1, %s21
    %p27 = scmp.ge.s32.totalorder %s26, 1
    %s28 = scalar_select %p27, 0, %s26
    %s29 = sadd.s32 1, %s20
    %s30 = scalar_select %p27, %s29, %s20
    %p31 = scmp.ge.s32.totalorder %s30, 2
    %s32 = scalar_select %p31, 0, %s30
    %s33 = smul.u32 %s21, 2
    %s34 = ssub.s32 0, %s33
    %s35 = smul.u32 %s20, %s34
    %s36 = sadd.s32 %s21, %s35
    %s37 = smul.u32 %s28, 2
    %s38 = ssub.s32 0, %s37
    %s39 = smul.u32 %s32, %s38
    %s40 = sadd.s32 %s28, %s39
    %s41 = ssub.s32 %s36, %s40
    %p42 = scmp.eq.s32.totalorder %s41, 0
    %s44 = sadd.s32 %s43, 1
    %s45 = scalar_select %p42, %s43, %s44
    %p48 = pneg %p42
    %p49 = scmp.eq.s32.totalorder %s13, 1
    %p50 = por %p48, %p49
    %p51 = scmp.ne.s32.totalorder %s43, %s46
    %p52 = scmp.eq.s32.totalorder %s13, 0
    %p53 = por %p51, %p52
    %p54 = scmp.ne.s32.totalorder %s43, %s46
    %p55 = scmp.eq.s32.totalorder %s18, 1
    %p56 = por %p54, %p55
    %p57 = scmp.ne.s32.totalorder %s46, %s47
    %p58 = scmp.eq.s32.totalorder %s18, 0
    %p59 = por %p57, %p58
    %p60 = scmp.ne.s32.totalorder %s46, %s47
    %p61 = scmp.eq.s32.totalorder %s19, 1
    %p62 = por %p60, %p61
    %p64 = scmp.ne.s32.totalorder %s47, %s63
    %p65 = scmp.eq.s32.totalorder %s19, 0
    %p66 = por %p64, %p65
    %s67 = ssub.s32 %s20, %s32
    %p68 = scmp.eq.s32.totalorder %s67, 0
    %s70 = sadd.s32 %s69, 1
    %s71 = scalar_select %p68, %s69, %s70
    %p74 = pneg %p68
    %p75 = scmp.eq.s32.totalorder %s13, 1
    %p76 = por %p74, %p75
    %p77 = scmp.ne.s32.totalorder %s69, %s72
    %p78 = scmp.eq.s32.totalorder %s13, 0
    %p79 = por %p77, %p78
    %p80 = scmp.ne.s32.totalorder %s69, %s72
    %p81 = scmp.eq.s32.totalorder %s18, 1
    %p82 = por %p80, %p81
    %p83 = scmp.ne.s32.totalorder %s72, %s73
    %p84 = scmp.eq.s32.totalorder %s18, 0
    %p85 = por %p83, %p84
    %p86 = scmp.ne.s32.totalorder %s72, %s73
    %p87 = scmp.eq.s32.totalorder %s19, 1
    %p88 = por %p86, %p87
    %p90 = scmp.ne.s32.totalorder %s73, %s89
    %p91 = scmp.eq.s32.totalorder %s19, 0
    %p92 = por %p90, %p91
    %s93 = ssub.s32 %s20, %s32
    %p94 = scmp.eq.s32.totalorder %s93, 0
    %s96 = sadd.s32 %s95, 1
    %s97 = scalar_select %p94, %s95, %s96
    %p100 = pneg %p94
    %p101 = scmp.eq.s32.totalorder %s13, 1
    %p102 = por %p100, %p101
    %p103 = scmp.ne.s32.totalorder %s95, %s98
    %p104 = scmp.eq.s32.totalorder %s13, 0
    %p105 = por %p103, %p104
    %p106 = scmp.ne.s32.totalorder %s95, %s98
    %p107 = scmp.eq.s32.totalorder %s18, 1
    %p108 = por %p106, %p107
    %p109 = scmp.ne.s32.totalorder %s98, %s99
    %p110 = scmp.eq.s32.totalorder %s18, 0
    %p111 = por %p109, %p110
    %p112 = scmp.ne.s32.totalorder %s98, %s99
    %p113 = scmp.eq.s32.totalorder %s19, 1
    %p114 = por %p112, %p113
    %p116 = scmp.ne.s32.totalorder %s99, %s115
    %p117 = scmp.eq.s32.totalorder %s19, 0
    %p118 = por %p116, %p117
    %s119 = ssub.s32 %s20, %s32
    %p120 = scmp.eq.s32.totalorder %s119, 0
    %s122 = sadd.s32 %s121, 1
    %s123 = scalar_select %p120, %s121, %s122
    %p126 = pneg %p120
    %p127 = scmp.eq.s32.totalorder %s13, 1
    %p128 = por %p126, %p127
    %p129 = scmp.ne.s32.totalorder %s121, %s124
    %p130 = scmp.eq.s32.totalorder %s13, 0
    %p131 = por %p129, %p130
    %p132 = scmp.ne.s32.totalorder %s121, %s124
    %p133 = scmp.eq.s32.totalorder %s18, 1
    %p134 = por %p132, %p133
    %p135 = scmp.ne.s32.totalorder %s124, %s125
    %p136 = scmp.eq.s32.totalorder %s18, 0
    %p137 = por %p135, %p136
    %p138 = scmp.ne.s32.totalorder %s124, %s125
    %p139 = scmp.eq.s32.totalorder %s19, 1
    %p140 = por %p138, %p139
    %p142 = scmp.ne.s32.totalorder %s125, %s141
    %p143 = scmp.eq.s32.totalorder %s19, 0
    %p144 = por %p142, %p143
    %s145 = smul.u32 %s21, 2
    %s146 = ssub.s32 0, %s145
    %s147 = smul.u32 %s20, %s146
    %s148 = sadd.s32 %s21, %s147
    %s149 = smul.u32 %s28, 2
    %s150 = ssub.s32 0, %s149
    %s151 = smul.u32 %s32, %s150
    %s152 = sadd.s32 %s28, %s151
    %s153 = ssub.s32 %s20, %s32
    %s154 = ssub.s32 %s148, %s152
    %s155 = sor.u32 %s153, %s154
    %p156 = scmp.eq.s32.totalorder %s155, 0
    %s158 = sadd.s32 %s157, 1
    %s159 = scalar_select %p156, %s157, %s158
    %p162 = pneg %p156
    %p163 = scmp.eq.s32.totalorder %s13, 1
    %p164 = por %p162, %p163
    %p165 = scmp.ne.s32.totalorder %s157, %s160
    %p166 = scmp.eq.s32.totalorder %s13, 0
    %p167 = por %p165, %p166
    %p168 = scmp.ne.s32.totalorder %s157, %s160
    %p169 = scmp.eq.s32.totalorder %s18, 1
    %p170 = por %p168, %p169
    %p171 = scmp.ne.s32.totalorder %s160, %s161
    %p172 = scmp.eq.s32.totalorder %s18, 0
    %p173 = por %p171, %p172
    %p174 = scmp.ne.s32.totalorder %s160, %s161
    %p175 = scmp.eq.s32.totalorder %s19, 1
    %p176 = por %p174, %p175
    %p178 = scmp.ne.s32.totalorder %s161, %s177
    %p179 = scmp.eq.s32.totalorder %s19, 0
    %p180 = por %p178, %p179
    %s181 = ssub.s32 %s20, %s32
    %p182 = scmp.eq.s32.totalorder %s181, 0
    %s184 = sadd.s32 %s183, 1
    %s185 = scalar_select %p182, %s183, %s184
    %p188 = pneg %p182
    %p189 = scmp.eq.s32.totalorder %s13, 1
    %p190 = por %p188, %p189
    %p191 = scmp.ne.s32.totalorder %s183, %s186
    %p192 = scmp.eq.s32.totalorder %s13, 0
    %p193 = por %p191, %p192
    %p194 = scmp.ne.s32.totalorder %s183, %s186
    %p195 = scmp.eq.s32.totalorder %s18, 1
    %p196 = por %p194, %p195
    %p197 = scmp.ne.s32.totalorder %s186, %s187
    %p198 = scmp.eq.s32.totalorder %s18, 0
    %p199 = por %p197, %p198
    %p200 = scmp.ne.s32.totalorder %s186, %s187
    %p201 = scmp.eq.s32.totalorder %s19, 1
    %p202 = por %p200, %p201
    %p204 = scmp.ne.s32.totalorder %s187, %s203
    %p205 = scmp.eq.s32.totalorder %s19, 0
    %p206 = por %p204, %p205
    %s207 = ssub.s32 %s20, %s32
    %p208 = scmp.eq.s32.totalorder %s207, 0
    %s210 = sadd.s32 %s209, 1
    %s211 = scalar_select %p208, %s209, %s210
    %p214 = pneg %p208
    %p215 = scmp.eq.s32.totalorder %s13, 1
    %p216 = por %p214, %p215
    %p217 = scmp.ne.s32.totalorder %s209, %s212
    %p218 = scmp.eq.s32.totalorder %s13, 0
    %p219 = por %p217, %p218
    %p220 = scmp.ne.s32.totalorder %s209, %s212
    %p221 = scmp.eq.s32.totalorder %s18, 1
    %p222 = por %p220, %p221
    %p223 = scmp.ne.s32.totalorder %s212, %s213
    %p224 = scmp.eq.s32.totalorder %s18, 0
    %p225 = por %p223, %p224
    %p226 = scmp.ne.s32.totalorder %s212, %s213
    %p227 = scmp.eq.s32.totalorder %s19, 1
    %p228 = por %p226, %p227
    %p230 = scmp.ne.s32.totalorder %s213, %s229
    %p231 = scmp.eq.s32.totalorder %s19, 0
    %p232 = por %p230, %p231
    %p233 = scmp.le.s32.totalorder 1, %s13
    %p234 = scmp.lt.s32.totalorder %s13, 3
    %p235 = pnand %p233, %p234
    %p236 = pneg %p235
    // Predicated region
    $region9: #{bilm_forward.5} parent=5 // pred_check
      _
    $region10: #{bilm_forward.5} parent=5 // pred_check_branch
      %238 = sbr.rel (%p235) target = $region12
    $region11: #{bilm_forward.5} parent=5 // pred_region
      %s239 = ssub.s32 %s13, 1
    $region12: #{bilm_forward.5} parent=5 // pred_fallthru
      _
    %p240 = scmp.lt.s32.totalorder %s13, 2
    // Predicated region
    $region13: #{bilm_forward.5} parent=5 // pred_check
      %p241 = pneg %p240
    $region14: #{bilm_forward.5} parent=5 // pred_check_branch
      %243 = sbr.rel (%p241) target = $region16
    $region15: #{bilm_forward.5} parent=5 // pred_region
      // Predicated region
      $region17: #{bilm_forward.5} parent=15 // pred_check
        %p244 = pneg %p53
      $region18: #{bilm_forward.5} parent=15 // pred_check_branch
        %246 = sbr.rel (%p244) target = $region20
      $region19: #{bilm_forward.5} parent=15 // pred_region
        %s247 = smul.u32 %s21, 2
        %s248 = ssub.s32 0, %s247
        %s249 = smul.u32 %s20, %s248
        %s250 = sadd.s32 %s21, %s249
        %s251 = smul.u32 2, %s250
        %p252 = scmp.lt.s32.totalorder %s251, 1
        %s253 = scalar_select %p252, %s251, 1
        %s254 = smul.addr %s253, 8
        %s255 = scalar_lea.vmem %s0, %s254
        %s256 = smul.u32 %s21, 2
        %s257 = ssub.s32 0, %s256
        %s258 = smul.u32 %s20, %s257
        %s259 = sadd.s32 %s21, %s258
        %s260 = smul.u32 2, %s259
      $region20: #{bilm_forward.5} parent=15 // pred_fallthru
        _
      // Predicated region
      $region21: #{bilm_forward.5} parent=15 // pred_check
        %p261 = pneg %p79
      $region22: #{bilm_forward.5} parent=15 // pred_check_branch
        %263 = sbr.rel (%p261) target = $region24
      $region23: #{bilm_forward.5} parent=15 // pred_region
        %p264 = scmp.lt.s32.totalorder %s20, 1
        %s265 = scalar_select %p264, %s20, 1
        %s266 = smul.addr %s265, 8
        %s267 = smul.addr %s266, 4
        %s268 = scalar_lea.vmem %s1, %s267
      $region24: #{bilm_forward.5} parent=15 // pred_fallthru
        _
      // Predicated region
      $region25: #{bilm_forward.5} parent=15 // pred_check
        %p269 = pneg %p105
      $region26: #{bilm_forward.5} parent=15 // pred_check_branch
        %271 = sbr.rel (%p269) target = $region28
      $region27: #{bilm_forward.5} parent=15 // pred_region
        %p272 = scmp.lt.s32.totalorder %s20, 1
        %s273 = scalar_select %p272, %s20, 1
        %s274 = smul.addr %s273, 4
        %s275 = smul.addr %s274, 4
        %s276 = scalar_lea.vmem %s2, %s275
      $region28: #{bilm_forward.5} parent=15 // pred_fallthru
        _
      // Predicated region
      $region29: #{bilm_forward.5} parent=15 // pred_check
        %p277 = pneg %p131
      $region30: #{bilm_forward.5} parent=15 // pred_check_branch
        %279 = sbr.rel (%p277) target = $region32
      $region31: #{bilm_forward.5} parent=15 // pred_region
        %p280 = scmp.lt.s32.totalorder %s20, 1
        %s281 = scalar_select %p280, %s20, 1
        %s282 = scalar_lea.vmem %s3, %s281
      $region32: #{bilm_forward.5} parent=15 // pred_fallthru
        _
    $region16: #{bilm_forward.5} parent=5 // pred_fallthru
      _
    %p283 = scmp.le.s32.totalorder 1, %s13
    %p284 = scmp.lt.s32.totalorder %s13, 3
    %p285 = pnand %p283, %p284
    %p286 = pneg %p285
    // Predicated region
    $region33: #{bilm_forward.5} parent=5 // pred_check
      _
    $region34: #{bilm_forward.5} parent=5 // pred_check_branch
      %288 = sbr.rel (%p285) target = $region36
    $region35: #{bilm_forward.5} parent=5 // pred_region
      %s289 = ssub.s32 %s13, 1
      %s290 = smul.u32 %s23, 2
      %s291 = ssub.s32 0, %s290
      %s292 = smul.u32 %s22, %s291
      %s293 = sadd.s32 %s23, %s292
      %s294 = smul.u32 2, %s293
      %p295 = scmp.lt.s32.totalorder %s294, 1
      %s296 = scalar_select %p295, %s294, 1
      %s297 = smul.addr %s296, 8
      %s298 = scalar_lea.vmem %s0, %s297
      %p299 = pneg %p59
      %p300 = pneg %p56
      %p301 = scmp.lt.s32.totalorder %s22, 1
      %s302 = scalar_select %p301, %s22, 1
      %s303 = smul.addr %s302, 8
      %s304 = smul.addr %s303, 4
      %s305 = scalar_lea.vmem %s1, %s304
      %p306 = pneg %p85
      %p307 = pneg %p82
      %p308 = scmp.lt.s32.totalorder %s22, 1
      %s309 = scalar_select %p308, %s22, 1
      %s310 = smul.addr %s309, 4
      %s311 = smul.addr %s310, 4
      %s312 = scalar_lea.vmem %s2, %s311
      %p313 = pneg %p111
      %p314 = pneg %p108
      %p315 = scmp.lt.s32.totalorder %s22, 1
      %s316 = scalar_select %p315, %s22, 1
      %s317 = scalar_lea.vmem %s3, %s316
      %p318 = pneg %p137
      %p319 = pneg %p134
      %p320 = pneg %p173
      %p321 = pneg %p170
      %s322 = smul.u32 %s23, 2
      %s323 = ssub.s32 0, %s322
      %s324 = smul.u32 %s22, %s323
      %s325 = sadd.s32 %s23, %s324
      %s326 = smul.u32 8, %s325
      %p327 = scmp.lt.s32.totalorder %s22, 1
      %s328 = scalar_select %p327, %s22, 1
      %p329 = scmp.lt.s32.totalorder %s326, 7
      %s330 = scalar_select %p329, %s326, 7
      %s331 = smul.addr %s328, 8
      %s332 = sadd.s32 %s330, %s331
      %s333 = smul.addr %s332, 2
      %s334 = scalar_lea.vmem %s4, %s333
      %p335 = pneg %p199
      %p336 = pneg %p196
      %p337 = scmp.lt.s32.totalorder %s22, 1
      %s338 = scalar_select %p337, %s22, 1
      %s339 = smul.addr %s338, 2
      %s340 = scalar_lea.vmem %s5, %s339
      %p341 = pneg %p225
      %p342 = pneg %p222
      %p343 = scmp.lt.s32.totalorder %s22, 1
      %s344 = scalar_select %p343, %s22, 1
      %s345 = smul.addr %s344, 2
      %s346 = scalar_lea.vmem %s6, %s345
      %s347 = smul.u32 %s23, 2
      %s348 = ssub.s32 0, %s347
      %s349 = smul.u32 %s22, %s348
      %s350 = sadd.s32 %s23, %s349
      %s351 = smul.u32 2, %s350
      %p352 = scmp.lt.s32.totalorder %s351, 1
      %s353 = scalar_select %p352, %s351, 1
      %s354 = smul.addr %s353, 8
      %s355 = scalar_lea.vmem %s0, %s354
      %s356 = smul.u32 %s23, 2
      %s357 = ssub.s32 0, %s356
      %s358 = smul.u32 %s22, %s357
      %s359 = sadd.s32 %s23, %s358
      %s360 = smul.u32 2, %s359
      %p361 = scmp.lt.s32.totalorder %s22, 1
      %s362 = scalar_select %p361, %s22, 1
      %s363 = smul.addr %s362, 8
      %s364 = smul.addr %s363, 4
      %s365 = scalar_lea.vmem %s1, %s364
      %p366 = scmp.lt.s32.totalorder %s22, 1
      %s367 = scalar_select %p366, %s22, 1
      %s368 = smul.addr %s367, 4
      %s369 = smul.addr %s368, 4
      %s370 = scalar_lea.vmem %s2, %s369
      %p371 = scmp.lt.s32.totalorder %s22, 1
      %s372 = scalar_select %p371, %s22, 1
      %s373 = scalar_lea.vmem %s3, %s372
      %s374 = smul.u32 %s23, 2
      %s375 = ssub.s32 0, %s374
      %s376 = smul.u32 %s22, %s375
      %s377 = sadd.s32 %s23, %s376
      %s378 = smul.u32 8, %s377
      %p379 = scmp.lt.s32.totalorder %s22, 1
      %s380 = scalar_select %p379, %s22, 1
      %p381 = scmp.lt.s32.totalorder %s378, 7
      %s382 = scalar_select %p381, %s378, 7
      %s383 = smul.addr %s380, 8
      %s384 = sadd.s32 %s382, %s383
      %s385 = smul.addr %s384, 2
      %s386 = scalar_lea.vmem %s4, %s385
      %s387 = smul.u32 %s23, 2
      %s388 = ssub.s32 0, %s387
      %s389 = smul.u32 %s22, %s388
      %s390 = sadd.s32 %s23, %s389
      %s391 = smul.u32 8, %s390
      %p392 = scmp.lt.s32.totalorder %s22, 1
      %s393 = scalar_select %p392, %s22, 1
      %s394 = smul.addr %s393, 2
      %s395 = scalar_lea.vmem %s5, %s394
      %p396 = scmp.lt.s32.totalorder %s22, 1
      %s397 = scalar_select %p396, %s22, 1
      %s398 = smul.addr %s397, 2
      %s399 = scalar_lea.vmem %s6, %s398
      %v401 = vld [vmem:[%s355] sm:$0xff]
      %v402 = vld [vmem:[%s355 + $0x8] sm:$0xff]
      %v403 = vpack.c.bf16 %v402, %v401
      %v404 = vld [vmem:[%s365] sm:$0xf]
      %v405 = vld [vmem:[%s365 + $0x4] sm:$0xf]
      %v406 = vld [vmem:[%s365 + $0x8] sm:$0xf]
      %v407 = vld [vmem:[%s365 + $0xc] sm:$0xf]
      %s408 = scalar_lea.vmem %s355, 16
      %v409 = vld [vmem:[%s408] sm:$0xff]
      %v410 = vld [vmem:[%s408 + $0x8] sm:$0xff]
      %v411 = vpack.c.bf16 %v410, %v409
      %v412 = vld [vmem:[%s365 + $0x10] sm:$0xf]
      %v413 = vld [vmem:[%s365 + $0x14] sm:$0xf]
      %v414 = vld [vmem:[%s365 + $0x18] sm:$0xf]
      %v415 = vld [vmem:[%s365 + $0x1c] sm:$0xf]
      %v420 = vunpack.c.l.b16 %v412
      %v421 = vunpack.c.l.b16 %v413
      %v422 = vunpack.c.l.b16 %v414
      %v423 = vunpack.c.l.b16 %v415
      %v424 = vpack.c.b16 %v421, %v420
      %v425 = vpack.c.b16 %v423, %v422
      %vm428 = vcmask 261120
      %v430 = vsel %vm428, %v411, 0
      %432 = vmatpush.bf16.msra.mxu0 0
      %433 = vmatpush.bf16.msra.mxu0 0
      %434 = vmatpush.bf16.msra.mxu0 0
      %435 = vmatpush.bf16.msra.mxu0 0
      %436 = vmatpush.bf16.msra.mxu0 0
      %437 = vmatpush.bf16.msra.mxu0 0
      %438 = vmatpush.bf16.msra.mxu0 %v425
      %439 = vmatpush.bf16.msra.mxu0 %v424
      %440 = vmatmul.bf16.gmra.mxu0 %v430
      %v441 = vpop.f32.mrf.mxu0
      %v442 = vadd.f32 0.0, %v441
      %v443 = vpop.f32.mrf.mxu0
      %v444 = vadd.f32 0.0, %v443
      %445 = vdwg.mxu0
      %v450 = vunpack.c.l.b16 %v404
      %v451 = vunpack.c.l.b16 %v405
      %v452 = vunpack.c.l.b16 %v406
      %v453 = vunpack.c.l.b16 %v407
      %v454 = vpack.c.b16 %v451, %v450
      %v455 = vpack.c.b16 %v453, %v452
      %v459 = vsel %vm428, %v403, 0
      %461 = vmatpush.bf16.msra.mxu0 0
      %462 = vmatpush.bf16.msra.mxu0 0
      %463 = vmatpush.bf16.msra.mxu0 0
      %464 = vmatpush.bf16.msra.mxu0 0
      %465 = vmatpush.bf16.msra.mxu0 0
      %466 = vmatpush.bf16.msra.mxu0 0
      %467 = vmatpush.bf16.msra.mxu0 %v455
      %468 = vmatpush.bf16.msra.mxu0 %v454
      %469 = vmatmul.bf16.gmra.mxu0 %v459
      %v470 = vpop.f32.mrf.mxu0
      %v471 = vadd.f32 %v442, %v470
      %v472 = vpop.f32.mrf.mxu0
      %v473 = vadd.f32 %v444, %v472
      %474 = vdwg.mxu0
      %v475 = vld [vmem:[%s373] sm:$0x1]
      %v477 = vperm.slane %v475, 0
      %v479 = vadd.f32 %v471, %v477
      %v480 = vadd.f32 %v473, %v477
      %481 = vst [vmem:[#allocation2] sm:$0xff] %v479
      %482 = vst [vmem:[#allocation2 + $0x8] sm:$0xff] %v480
      %v483 = vld [vmem:[%s370] sm:$0xf]
      %v484 = vld [vmem:[%s370 + $0x4] sm:$0xf]
      %v485 = vld [vmem:[%s370 + $0x8] sm:$0xf]
      %v486 = vld [vmem:[%s370 + $0xc] sm:$0xf]
      %p487 = scmp.eq.s32.totalorder %s23, 0
      // Predicated region
      $region37: #{bilm_forward.5} parent=35 // pred_check
        %p488 = pneg %p487
      $region38: #{bilm_forward.5} parent=35 // pred_check_branch
        %490 = sbr.rel (%p488) target = $region40
      $region39: #{bilm_forward.5} parent=35 // pred_region
        %vm491 = vcmask 254976
        %492 = vst.msk [vmem:[%s395] sm:$0x3] %vm491, 0.0
        %493 = vst.msk [vmem:[%s399] sm:$0x3] %vm491, 0.0
      $region40: #{bilm_forward.5} parent=35 // pred_fallthru
        _
      %v494 = vlaneseq
      %v495 = vand.u32 %v494, 127
      %vm496 = vcmp.ge.s32.totalorder %v495, 64
      %vm497 = vcmp.lt.s32.totalorder %v495, 96
      %vm498 = vmand %vm496, %vm497
      %v499 = vld [vmem:[%s395] sm:$0x3]
      %v500 = vld [vmem:[%s399] sm:$0x3]
      %s501 = smul.u32 %s22, 7
      %s502 = smul.u32 %s22, 14
      %s503 = scalar_lea.vmem [#allocation2], %s502
      %v504 = vld [vmem:[%s503] sm:$0x3]
      %v505 = vpack.c.bf16 %v499, %v499
      %v510 = vunpack.c.l.b16 %v483
      %v511 = vunpack.c.l.b16 %v484
      %v512 = vunpack.c.l.b16 %v485
      %v513 = vunpack.c.l.b16 %v486
      %v514 = vpack.c.b16 %v511, %v510
      %v515 = vpack.c.b16 %v513, %v512
      %v519 = vsel %vm428, %v505, 0
      %521 = vmatpush.bf16.msra.mxu0 0
      %522 = vmatpush.bf16.msra.mxu0 0
      %523 = vmatpush.bf16.msra.mxu0 0
      %524 = vmatpush.bf16.msra.mxu0 0
      %525 = vmatpush.bf16.msra.mxu0 0
      %526 = vmatpush.bf16.msra.mxu0 0
      %527 = vmatpush.bf16.msra.mxu0 %v515
      %528 = vmatpush.bf16.msra.mxu0 %v514
      %529 = vmatmul.bf16.gmra.mxu0 %v519
      %v530 = vpop.f32.mrf.mxu0
      %v531 = vadd.f32 0.0, %v530
      %v532 = vpop.f32.mrf.mxu0
      %533 = vdwg.mxu0
      %v534 = vadd.f32 %v504, %v531
      %v535 = vtanh.pop %v534
      %v536 = vxor.u32 %v534, 2147483648
      %v537 = vmul.f32 %v536, 1.442695
      %v538 = vpow.pop %v537
      %v539 = vadd.f32 %v538, 1.0
      %v540 = vrcp.pop %v539
      %v541 = vmul.f32 %v539, %v540
      %v542 = vsub.f32 1.0, %v541
      %v543 = vmul.f32 %v540, %v542
      %v544 = vadd.f32 %v540, %v543
      %vm545 = vweird.f32 %v539
      %vm546 = vweird.f32 %v540
      %vm547 = vmor %vm545, %vm546
      %v548 = vsel %vm547, %v540, %v544
      %v549 = vand.u32 2147483647, %v539
      %vm550 = vcmp.eq.f32.partialorder %v549, 8.507059e+37
      %v551 = vand.u32 %v539, 2147483648
      %v552 = vor.u32 1.1754944e-38, %v551
      %v553 = vsel %vm550, %v552, %v548
      %v554 = vmul.f32 1.0, %v553
      %v555 = vsel %vm498, %v535, %v554
      %557 = vrot.lane.b32.xlu0 %v500, 32
      %v558 = vpop.permute.xlu0 %557
      %v560 = vmul.f32 %v555, %v558
      %562 = vrot.lane.b32.xlu0 %v555, 64
      %v563 = vpop.permute.xlu0 %562
      %v565 = vmul.f32 %v555, %v563
      %567 = vrot.lane.b32.xlu0 %v565, 32
      %v568 = vpop.permute.xlu0 %567
      %v570 = vadd.f32 %v560, %v568
      %v571 = vtanh.pop %v570
      %573 = vrot.lane.b32.xlu0 %v571, 64
      %v574 = vpop.permute.xlu0 %573
      %v576 = vmul.f32 %v555, %v574
      %578 = vrot.lane.b32.xlu0 %v576, 32
      %v579 = vpop.permute.xlu0 %578
      %s581 = smul.u32 %s501, 2
      %s582 = scalar_lea.vmem %s386, %s581
      %vm583 = vcmask 254976
      %584 = vst.msk [vmem:[%s582] sm:$0x3] %vm583, %v579
      %s585 = smul.u32 %s22, 5
      %s586 = sadd.s32 %s585, 1
      %s587 = smul.u32 %s586, 2
      %s588 = scalar_lea.vmem [#allocation2], %s587
      %v589 = vld [vmem:[%s588] sm:$0x3]
      %v590 = vpack.c.bf16 %v576, %v576
      %592 = vrot.lane.b32.xlu0 %v590, 32
      %v593 = vpop.permute.xlu0 %592
      %v595 = vsel %vm428, %v593, 0
      %597 = vmatpush.bf16.msra.mxu0 0
      %598 = vmatpush.bf16.msra.mxu0 0
      %599 = vmatpush.bf16.msra.mxu0 0
      %600 = vmatpush.bf16.msra.mxu0 0
      %601 = vmatpush.bf16.msra.mxu0 0
      %602 = vmatpush.bf16.msra.mxu0 0
      %603 = vmatpush.bf16.msra.mxu0 %v515
      %604 = vmatpush.bf16.msra.mxu0 %v514
      %605 = vmatmul.bf16.gmra.mxu0 %v595
      %v606 = vpop.f32.mrf.mxu0
      %v607 = vadd.f32 0.0, %v606
      %v608 = vpop.f32.mrf.mxu0
      %609 = vdwg.mxu0
      %v610 = vadd.f32 %v589, %v607
      %v611 = vtanh.pop %v610
      %v612 = vxor.u32 %v610, 2147483648
      %v613 = vmul.f32 %v612, 1.442695
      %v614 = vpow.pop %v613
      %v615 = vadd.f32 %v614, 1.0
      %v616 = vrcp.pop %v615
      %v617 = vmul.f32 %v615, %v616
      %v618 = vsub.f32 1.0, %v617
      %v619 = vmul.f32 %v616, %v618
      %v620 = vadd.f32 %v616, %v619
      %vm621 = vweird.f32 %v615
      %vm622 = vweird.f32 %v616
      %vm623 = vmor %vm621, %vm622
      %v624 = vsel %vm623, %v616, %v620
      %v625 = vand.u32 2147483647, %v615
      %vm626 = vcmp.eq.f32.partialorder %v625, 8.507059e+37
      %v627 = vand.u32 %v615, 2147483648
      %v628 = vor.u32 1.1754944e-38, %v627
      %v629 = vsel %vm626, %v628, %v624
      %v630 = vmul.f32 1.0, %v629
      %v631 = vsel %vm498, %v611, %v630
      %v632 = vmul.f32 %v631, %v570
      %634 = vrot.lane.b32.xlu0 %v631, 64
      %v635 = vpop.permute.xlu0 %634
      %v637 = vmul.f32 %v631, %v635
      %639 = vrot.lane.b32.xlu0 %v637, 32
      %v640 = vpop.permute.xlu0 %639
      %v642 = vadd.f32 %v632, %v640
      %v643 = vtanh.pop %v642
      %645 = vrot.lane.b32.xlu0 %v643, 64
      %v646 = vpop.permute.xlu0 %645
      %v648 = vmul.f32 %v631, %v646
      %650 = vrot.lane.b32.xlu0 %v648, 32
      %v651 = vpop.permute.xlu0 %650
      %s653 = scalar_lea.vmem %s386, %s587
      %654 = vst.msk [vmem:[%s653] sm:$0x3] %vm583, %v651
      %s655 = smul.u32 %s22, 3
      %s656 = sadd.s32 %s655, 2
      %s657 = smul.u32 %s656, 2
      %s658 = scalar_lea.vmem [#allocation2], %s657
      %v659 = vld [vmem:[%s658] sm:$0x3]
      %v660 = vpack.c.bf16 %v648, %v648
      %662 = vrot.lane.b32.xlu0 %v660, 32
      %v663 = vpop.permute.xlu0 %662
      %v665 = vsel %vm428, %v663, 0
      %667 = vmatpush.bf16.msra.mxu0 0
      %668 = vmatpush.bf16.msra.mxu0 0
      %669 = vmatpush.bf16.msra.mxu0 0
      %670 = vmatpush.bf16.msra.mxu0 0
      %671 = vmatpush.bf16.msra.mxu0 0
      %672 = vmatpush.bf16.msra.mxu0 0
      %673 = vmatpush.bf16.msra.mxu0 %v515
      %674 = vmatpush.bf16.msra.mxu0 %v514
      %675 = vmatmul.bf16.gmra.mxu0 %v665
      %v676 = vpop.f32.mrf.mxu0
      %v677 = vadd.f32 0.0, %v676
      %v678 = vpop.f32.mrf.mxu0
      %679 = vdwg.mxu0
      %v680 = vadd.f32 %v659, %v677
      %v681 = vtanh.pop %v680
      %v682 = vxor.u32 %v680, 2147483648
      %v683 = vmul.f32 %v682, 1.442695
      %v684 = vpow.pop %v683
      %v685 = vadd.f32 %v684, 1.0
      %v686 = vrcp.pop %v685
      %v687 = vmul.f32 %v685, %v686
      %v688 = vsub.f32 1.0, %v687
      %v689 = vmul.f32 %v686, %v688
      %v690 = vadd.f32 %v686, %v689
      %vm691 = vweird.f32 %v685
      %vm692 = vweird.f32 %v686
      %vm693 = vmor %vm691, %vm692
      %v694 = vsel %vm693, %v686, %v690
      %v695 = vand.u32 2147483647, %v685
      %vm696 = vcmp.eq.f32.partialorder %v695, 8.507059e+37
      %v697 = vand.u32 %v685, 2147483648
      %v698 = vor.u32 1.1754944e-38, %v697
      %v699 = vsel %vm696, %v698, %v694
      %v700 = vmul.f32 1.0, %v699
      %v701 = vsel %vm498, %v681, %v700
      %v702 = vmul.f32 %v701, %v642
      %704 = vrot.lane.b32.xlu0 %v701, 64
      %v705 = vpop.permute.xlu0 %704
      %v707 = vmul.f32 %v701, %v705
      %709 = vrot.lane.b32.xlu0 %v707, 32
      %v710 = vpop.permute.xlu0 %709
      %v712 = vadd.f32 %v702, %v710
      %v713 = vtanh.pop %v712
      %715 = vrot.lane.b32.xlu0 %v713, 64
      %v716 = vpop.permute.xlu0 %715
      %v718 = vmul.f32 %v701, %v716
      %720 = vrot.lane.b32.xlu0 %v718, 32
      %v721 = vpop.permute.xlu0 %720
      %s723 = scalar_lea.vmem %s386, %s657
      %724 = vst.msk [vmem:[%s723] sm:$0x3] %vm583, %v721
      %s725 = sadd.s32 %s22, 3
      %s726 = smul.u32 %s725, 2
      %s727 = scalar_lea.vmem [#allocation2], %s726
      %v728 = vld [vmem:[%s727] sm:$0x3]
      %v729 = vpack.c.bf16 %v718, %v718
      %731 = vrot.lane.b32.xlu0 %v729, 32
      %v732 = vpop.permute.xlu0 %731
      %v734 = vsel %vm428, %v732, 0
      %736 = vmatpush.bf16.msra.mxu0 0
      %737 = vmatpush.bf16.msra.mxu0 0
      %738 = vmatpush.bf16.msra.mxu0 0
      %739 = vmatpush.bf16.msra.mxu0 0
      %740 = vmatpush.bf16.msra.mxu0 0
      %741 = vmatpush.bf16.msra.mxu0 0
      %742 = vmatpush.bf16.msra.mxu0 %v515
      %743 = vmatpush.bf16.msra.mxu0 %v514
      %744 = vmatmul.bf16.gmra.mxu0 %v734
      %v745 = vpop.f32.mrf.mxu0
      %v746 = vadd.f32 0.0, %v745
      %v747 = vpop.f32.mrf.mxu0
      %748 = vdwg.mxu0
      %v749 = vadd.f32 %v728, %v746
      %v750 = vtanh.pop %v749
      %v751 = vxor.u32 %v749, 2147483648
      %v752 = vmul.f32 %v751, 1.442695
      %v753 = vpow.pop %v752
      %v754 = vadd.f32 %v753, 1.0
      %v755 = vrcp.pop %v754
      %v756 = vmul.f32 %v754, %v755
      %v757 = vsub.f32 1.0, %v756
      %v758 = vmul.f32 %v755, %v757
      %v759 = vadd.f32 %v755, %v758
      %vm760 = vweird.f32 %v754
      %vm761 = vweird.f32 %v755
      %vm762 = vmor %vm760, %vm761
      %v763 = vsel %vm762, %v755, %v759
      %v764 = vand.u32 2147483647, %v754
      %vm765 = vcmp.eq.f32.partialorder %v764, 8.507059e+37
      %v766 = vand.u32 %v754, 2147483648
      %v767 = vor.u32 1.1754944e-38, %v766
      %v768 = vsel %vm765, %v767, %v763
      %v769 = vmul.f32 1.0, %v768
      %v770 = vsel %vm498, %v750, %v769
      %v771 = vmul.f32 %v770, %v712
      %773 = vrot.lane.b32.xlu0 %v770, 64
      %v774 = vpop.permute.xlu0 %773
      %v776 = vmul.f32 %v770, %v774
      %778 = vrot.lane.b32.xlu0 %v776, 32
      %v779 = vpop.permute.xlu0 %778
      %v781 = vadd.f32 %v771, %v779
      %v782 = vtanh.pop %v781
      %784 = vrot.lane.b32.xlu0 %v782, 64
      %v785 = vpop.permute.xlu0 %784
      %v787 = vmul.f32 %v770, %v785
      %789 = vrot.lane.b32.xlu0 %v787, 32
      %v790 = vpop.permute.xlu0 %789
      %s792 = scalar_lea.vmem %s386, %s726
      %793 = vst.msk [vmem:[%s792] sm:$0x3] %vm583, %v790
      %s794 = ssub.s32 4, %s22
      %s795 = smul.u32 %s794, 2
      %s796 = scalar_lea.vmem [#allocation2], %s795
      %v797 = vld [vmem:[%s796] sm:$0x3]
      %v798 = vpack.c.bf16 %v787, %v787
      %800 = vrot.lane.b32.xlu0 %v798, 32
      %v801 = vpop.permute.xlu0 %800
      %v803 = vsel %vm428, %v801, 0
      %805 = vmatpush.bf16.msra.mxu0 0
      %806 = vmatpush.bf16.msra.mxu0 0
      %807 = vmatpush.bf16.msra.mxu0 0
      %808 = vmatpush.bf16.msra.mxu0 0
      %809 = vmatpush.bf16.msra.mxu0 0
      %810 = vmatpush.bf16.msra.mxu0 0
      %811 = vmatpush.bf16.msra.mxu0 %v515
      %812 = vmatpush.bf16.msra.mxu0 %v514
      %813 = vmatmul.bf16.gmra.mxu0 %v803
      %v814 = vpop.f32.mrf.mxu0
      %v815 = vadd.f32 0.0, %v814
      %v816 = vpop.f32.mrf.mxu0
      %817 = vdwg.mxu0
      %v818 = vadd.f32 %v797, %v815
      %v819 = vtanh.pop %v818
      %v820 = vxor.u32 %v818, 2147483648
      %v821 = vmul.f32 %v820, 1.442695
      %v822 = vpow.pop %v821
      %v823 = vadd.f32 %v822, 1.0
      %v824 = vrcp.pop %v823
      %v825 = vmul.f32 %v823, %v824
      %v826 = vsub.f32 1.0, %v825
      %v827 = vmul.f32 %v824, %v826
      %v828 = vadd.f32 %v824, %v827
      %vm829 = vweird.f32 %v823
      %vm830 = vweird.f32 %v824
      %vm831 = vmor %vm829, %vm830
      %v832 = vsel %vm831, %v824, %v828
      %v833 = vand.u32 2147483647, %v823
      %vm834 = vcmp.eq.f32.partialorder %v833, 8.507059e+37
      %v835 = vand.u32 %v823, 2147483648
      %v836 = vor.u32 1.1754944e-38, %v835
      %v837 = vsel %vm834, %v836, %v832
      %v838 = vmul.f32 1.0, %v837
      %v839 = vsel %vm498, %v819, %v838
      %v840 = vmul.f32 %v839, %v781
      %842 = vrot.lane.b32.xlu0 %v839, 64
      %v843 = vpop.permute.xlu0 %842
      %v845 = vmul.f32 %v839, %v843
      %847 = vrot.lane.b32.xlu0 %v845, 32
      %v848 = vpop.permute.xlu0 %847
      %v850 = vadd.f32 %v840, %v848
      %v851 = vtanh.pop %v850
      %853 = vrot.lane.b32.xlu0 %v851, 64
      %v854 = vpop.permute.xlu0 %853
      %v856 = vmul.f32 %v839, %v854
      %858 = vrot.lane.b32.xlu0 %v856, 32
      %v859 = vpop.permute.xlu0 %858
      %s861 = scalar_lea.vmem %s386, %s795
      %862 = vst.msk [vmem:[%s861] sm:$0x3] %vm583, %v859
      %s863 = smul.u32 %s22, 4294967293
      %s864 = sadd.s32 %s863, 5
      %s865 = smul.u32 %s864, 2
      %s866 = scalar_lea.vmem [#allocation2], %s865
      %v867 = vld [vmem:[%s866] sm:$0x3]
      %v868 = vpack.c.bf16 %v856, %v856
      %870 = vrot.lane.b32.xlu0 %v868, 32
      %v871 = vpop.permute.xlu0 %870
      %v873 = vsel %vm428, %v871, 0
      %875 = vmatpush.bf16.msra.mxu0 0
      %876 = vmatpush.bf16.msra.mxu0 0
      %877 = vmatpush.bf16.msra.mxu0 0
      %878 = vmatpush.bf16.msra.mxu0 0
      %879 = vmatpush.bf16.msra.mxu0 0
      %880 = vmatpush.bf16.msra.mxu0 0
      %881 = vmatpush.bf16.msra.mxu0 %v515
      %882 = vmatpush.bf16.msra.mxu0 %v514
      %883 = vmatmul.bf16.gmra.mxu0 %v873
      %v884 = vpop.f32.mrf.mxu0
      %v885 = vadd.f32 0.0, %v884
      %v886 = vpop.f32.mrf.mxu0
      %887 = vdwg.mxu0
      %v888 = vadd.f32 %v867, %v885
      %v889 = vtanh.pop %v888
      %v890 = vxor.u32 %v888, 2147483648
      %v891 = vmul.f32 %v890, 1.442695
      %v892 = vpow.pop %v891
      %v893 = vadd.f32 %v892, 1.0
      %v894 = vrcp.pop %v893
      %v895 = vmul.f32 %v893, %v894
      %v896 = vsub.f32 1.0, %v895
      %v897 = vmul.f32 %v894, %v896
      %v898 = vadd.f32 %v894, %v897
      %vm899 = vweird.f32 %v893
      %vm900 = vweird.f32 %v894
      %vm901 = vmor %vm899, %vm900
      %v902 = vsel %vm901, %v894, %v898
      %v903 = vand.u32 2147483647, %v893
      %vm904 = vcmp.eq.f32.partialorder %v903, 8.507059e+37
      %v905 = vand.u32 %v893, 2147483648
      %v906 = vor.u32 1.1754944e-38, %v905
      %v907 = vsel %vm904, %v906, %v902
      %v908 = vmul.f32 1.0, %v907
      %v909 = vsel %vm498, %v889, %v908
      %v910 = vmul.f32 %v909, %v850
      %912 = vrot.lane.b32.xlu0 %v909, 64
      %v913 = vpop.permute.xlu0 %912
      %v915 = vmul.f32 %v909, %v913
      %917 = vrot.lane.b32.xlu0 %v915, 32
      %v918 = vpop.permute.xlu0 %917
      %v920 = vadd.f32 %v910, %v918
      %v921 = vtanh.pop %v920
      %923 = vrot.lane.b32.xlu0 %v921, 64
      %v924 = vpop.permute.xlu0 %923
      %v926 = vmul.f32 %v909, %v924
      %928 = vrot.lane.b32.xlu0 %v926, 32
      %v929 = vpop.permute.xlu0 %928
      %s931 = scalar_lea.vmem %s386, %s865
      %932 = vst.msk [vmem:[%s931] sm:$0x3] %vm583, %v929
      %s933 = smul.u32 %s22, 4294967291
      %s934 = sadd.s32 %s933, 6
      %s935 = smul.u32 %s934, 2
      %s936 = scalar_lea.vmem [#allocation2], %s935
      %v937 = vld [vmem:[%s936] sm:$0x3]
      %v938 = vpack.c.bf16 %v926, %v926
      %940 = vrot.lane.b32.xlu0 %v938, 32
      %v941 = vpop.permute.xlu0 %940
      %v943 = vsel %vm428, %v941, 0
      %945 = vmatpush.bf16.msra.mxu0 0
      %946 = vmatpush.bf16.msra.mxu0 0
      %947 = vmatpush.bf16.msra.mxu0 0
      %948 = vmatpush.bf16.msra.mxu0 0
      %949 = vmatpush.bf16.msra.mxu0 0
      %950 = vmatpush.bf16.msra.mxu0 0
      %951 = vmatpush.bf16.msra.mxu0 %v515
      %952 = vmatpush.bf16.msra.mxu0 %v514
      %953 = vmatmul.bf16.gmra.mxu0 %v943
      %v954 = vpop.f32.mrf.mxu0
      %v955 = vadd.f32 0.0, %v954
      %v956 = vpop.f32.mrf.mxu0
      %957 = vdwg.mxu0
      %v958 = vadd.f32 %v937, %v955
      %v959 = vtanh.pop %v958
      %v960 = vxor.u32 %v958, 2147483648
      %v961 = vmul.f32 %v960, 1.442695
      %v962 = vpow.pop %v961
      %v963 = vadd.f32 %v962, 1.0
      %v964 = vrcp.pop %v963
      %v965 = vmul.f32 %v963, %v964
      %v966 = vsub.f32 1.0, %v965
      %v967 = vmul.f32 %v964, %v966
      %v968 = vadd.f32 %v964, %v967
      %vm969 = vweird.f32 %v963
      %vm970 = vweird.f32 %v964
      %vm971 = vmor %vm969, %vm970
      %v972 = vsel %vm971, %v964, %v968
      %v973 = vand.u32 2147483647, %v963
      %vm974 = vcmp.eq.f32.partialorder %v973, 8.507059e+37
      %v975 = vand.u32 %v963, 2147483648
      %v976 = vor.u32 1.1754944e-38, %v975
      %v977 = vsel %vm974, %v976, %v972
      %v978 = vmul.f32 1.0, %v977
      %v979 = vsel %vm498, %v959, %v978
      %v980 = vmul.f32 %v979, %v920
      %982 = vrot.lane.b32.xlu0 %v979, 64
      %v983 = vpop.permute.xlu0 %982
      %v985 = vmul.f32 %v979, %v983
      %987 = vrot.lane.b32.xlu0 %v985, 32
      %v988 = vpop.permute.xlu0 %987
      %v990 = vadd.f32 %v980, %v988
      %v991 = vtanh.pop %v990
      %993 = vrot.lane.b32.xlu0 %v991, 64
      %v994 = vpop.permute.xlu0 %993
      %v996 = vmul.f32 %v979, %v994
      %998 = vrot.lane.b32.xlu0 %v996, 32
      %v999 = vpop.permute.xlu0 %998
      %s1001 = scalar_lea.vmem %s386, %s935
      %1002 = vst.msk [vmem:[%s1001] sm:$0x3] %vm583, %v999
      %s1003 = smul.u32 %s22, 4294967289
      %s1004 = sadd.s32 %s1003, 7
      %s1005 = smul.u32 %s1004, 2
      %s1006 = scalar_lea.vmem [#allocation2], %s1005
      %v1007 = vld [vmem:[%s1006] sm:$0x3]
      %v1008 = vpack.c.bf16 %v996, %v996
      %1010 = vrot.lane.b32.xlu0 %v1008, 32
      %v1011 = vpop.permute.xlu0 %1010
      %v1013 = vsel %vm428, %v1011, 0
      %1015 = vmatpush.bf16.msra.mxu0 0
      %1016 = vmatpush.bf16.msra.mxu0 0
      %1017 = vmatpush.bf16.msra.mxu0 0
      %1018 = vmatpush.bf16.msra.mxu0 0
      %1019 = vmatpush.bf16.msra.mxu0 0
      %1020 = vmatpush.bf16.msra.mxu0 0
      %1021 = vmatpush.bf16.msra.mxu0 %v515
      %1022 = vmatpush.bf16.msra.mxu0 %v514
      %1023 = vmatmul.bf16.gmra.mxu0 %v1013
      %v1024 = vpop.f32.mrf.mxu0
      %v1025 = vadd.f32 0.0, %v1024
      %v1026 = vpop.f32.mrf.mxu0
      %1027 = vdwg.mxu0
      %v1028 = vadd.f32 %v1007, %v1025
      %v1029 = vtanh.pop %v1028
      %v1030 = vxor.u32 %v1028, 2147483648
      %v1031 = vmul.f32 %v1030, 1.442695
      %v1032 = vpow.pop %v1031
      %v1033 = vadd.f32 %v1032, 1.0
      %v1034 = vrcp.pop %v1033
      %v1035 = vmul.f32 %v1033, %v1034
      %v1036 = vsub.f32 1.0, %v1035
      %v1037 = vmul.f32 %v1034, %v1036
      %v1038 = vadd.f32 %v1034, %v1037
      %vm1039 = vweird.f32 %v1033
      %vm1040 = vweird.f32 %v1034
      %vm1041 = vmor %vm1039, %vm1040
      %v1042 = vsel %vm1041, %v1034, %v1038
      %v1043 = vand.u32 2147483647, %v1033
      %vm1044 = vcmp.eq.f32.partialorder %v1043, 8.507059e+37
      %v1045 = vand.u32 %v1033, 2147483648
      %v1046 = vor.u32 1.1754944e-38, %v1045
      %v1047 = vsel %vm1044, %v1046, %v1042
      %v1048 = vmul.f32 1.0, %v1047
      %v1049 = vsel %vm498, %v1029, %v1048
      %v1050 = vmul.f32 %v1049, %v990
      %1052 = vrot.lane.b32.xlu0 %v1049, 64
      %v1053 = vpop.permute.xlu0 %1052
      %v1055 = vmul.f32 %v1049, %v1053
      %1057 = vrot.lane.b32.xlu0 %v1055, 32
      %v1058 = vpop.permute.xlu0 %1057
      %v1060 = vadd.f32 %v1050, %v1058
      %v1061 = vtanh.pop %v1060
      %1063 = vrot.lane.b32.xlu0 %v1061, 64
      %v1064 = vpop.permute.xlu0 %1063
      %v1066 = vmul.f32 %v1049, %v1064
      %1068 = vrot.lane.b32.xlu0 %v1066, 32
      %v1069 = vpop.permute.xlu0 %1068
      %s1071 = scalar_lea.vmem %s386, %s1005
      %1072 = vst.msk [vmem:[%s1071] sm:$0x3] %vm583, %v1069
      %1073 = vst.msk [vmem:[%s395] sm:$0x3] %vm583, %v1069
      %1075 = vrot.lane.b32.xlu0 %v1060, 96
      %v1076 = vpop.permute.xlu0 %1075
      %1078 = vst.msk [vmem:[%s399] sm:$0x3] %vm583, %v1076
      %s1079 = smul.u32 %s23, 2
      %s1080 = ssub.s32 0, %s1079
      %s1081 = smul.u32 %s22, %s1080
      %s1082 = sadd.s32 %s23, %s1081
      %s1083 = smul.u32 8, %s1082
      %p1084 = scmp.lt.s32.totalorder %s22, 1
      %s1085 = scalar_select %p1084, %s22, 1
      %p1086 = scmp.lt.s32.totalorder %s1083, 7
      %s1087 = scalar_select %p1086, %s1083, 7
      %s1088 = smul.addr %s1085, 8
      %s1089 = sadd.s32 %s1087, %s1088
      %s1090 = smul.addr %s1089, 2
      %s1091 = scalar_lea.vmem %s4, %s1090
      %p1092 = scmp.lt.s32.totalorder %s22, 1
      %s1093 = scalar_select %p1092, %s22, 1
      %s1094 = smul.addr %s1093, 2
      %s1095 = scalar_lea.vmem %s5, %s1094
      %p1096 = scmp.lt.s32.totalorder %s22, 1
      %s1097 = scalar_select %p1096, %s22, 1
      %s1098 = smul.addr %s1097, 2
      %s1099 = scalar_lea.vmem %s6, %s1098
      // Predicated region
      $region41: #{bilm_forward.5} parent=35 // pred_check
        %p1100 = pneg %p170
      $region42: #{bilm_forward.5} parent=35 // pred_check_branch
        %1102 = sbr.rel (%p1100) target = $region44
      $region43: #{bilm_forward.5} parent=35 // pred_region
        %s1103 = smul.u32 %s23, 2
        %s1104 = ssub.s32 0, %s1103
        %s1105 = smul.u32 %s22, %s1104
        %s1106 = sadd.s32 %s23, %s1105
        %s1107 = smul.u32 8, %s1106
      $region44: #{bilm_forward.5} parent=35 // pred_fallthru
        _
      // Predicated region
      $region45: #{bilm_forward.5} parent=35 // pred_check
        %p1108 = pneg %p196
      $region46: #{bilm_forward.5} parent=35 // pred_check_branch
        %1110 = sbr.rel (%p1108) target = $region48
      $region47: #{bilm_forward.5} parent=35 // pred_region
        _
      $region48: #{bilm_forward.5} parent=35 // pred_fallthru
        _
      // Predicated region
      $region49: #{bilm_forward.5} parent=35 // pred_check
        %p1111 = pneg %p222
      $region50: #{bilm_forward.5} parent=35 // pred_check_branch
        %1113 = sbr.rel (%p1111) target = $region52
      $region51: #{bilm_forward.5} parent=35 // pred_region
        _
      $region52: #{bilm_forward.5} parent=35 // pred_fallthru
        _
    $region36: #{bilm_forward.5} parent=5 // pred_fallthru
      _
    %p1114 = scmp.le.s32.totalorder 2, %s13
    // Predicated region
    $region53: #{bilm_forward.5} parent=5 // pred_check
      %p1115 = pneg %p1114
    $region54: #{bilm_forward.5} parent=5 // pred_check_branch
      %1117 = sbr.rel (%p1115) target = $region56
    $region55: #{bilm_forward.5} parent=5 // pred_region
      %s1118 = ssub.s32 %s13, 2
      // Predicated region
      $region57: #{bilm_forward.5} parent=55 // pred_check
        %p1119 = pneg %p176
      $region58: #{bilm_forward.5} parent=55 // pred_check_branch
        %1121 = sbr.rel (%p1119) target = $region60
      $region59: #{bilm_forward.5} parent=55 // pred_region
        %s1122 = smul.u32 %s25, 2
        %s1123 = ssub.s32 0, %s1122
        %s1124 = smul.u32 %s24, %s1123
        %s1125 = sadd.s32 %s25, %s1124
        %s1126 = smul.u32 8, %s1125
        %p1127 = scmp.lt.s32.totalorder %s24, 1
        %s1128 = scalar_select %p1127, %s24, 1
        %p1129 = scmp.lt.s32.totalorder %s1126, 7
        %s1130 = scalar_select %p1129, %s1126, 7
        %s1131 = smul.addr %s1128, 8
        %s1132 = sadd.s32 %s1130, %s1131
        %s1133 = smul.addr %s1132, 2
        %s1134 = scalar_lea.vmem %s4, %s1133
      $region60: #{bilm_forward.5} parent=55 // pred_fallthru
        _
      // Predicated region
      $region61: #{bilm_forward.5} parent=55 // pred_check
        %p1135 = pneg %p202
      $region62: #{bilm_forward.5} parent=55 // pred_check_branch
        %1137 = sbr.rel (%p1135) target = $region64
      $region63: #{bilm_forward.5} parent=55 // pred_region
        %p1138 = scmp.lt.s32.totalorder %s24, 1
        %s1139 = scalar_select %p1138, %s24, 1
        %s1140 = smul.addr %s1139, 2
        %s1141 = scalar_lea.vmem %s5, %s1140
      $region64: #{bilm_forward.5} parent=55 // pred_fallthru
        _
      // Predicated region
      $region65: #{bilm_forward.5} parent=55 // pred_check
        %p1142 = pneg %p228
      $region66: #{bilm_forward.5} parent=55 // pred_check_branch
        %1144 = sbr.rel (%p1142) target = $region68
      $region67: #{bilm_forward.5} parent=55 // pred_region
        %p1145 = scmp.lt.s32.totalorder %s24, 1
        %s1146 = scalar_select %p1145, %s24, 1
        %s1147 = smul.addr %s1146, 2
        %s1148 = scalar_lea.vmem %s6, %s1147
      $region68: #{bilm_forward.5} parent=55 // pred_fallthru
        _
    $region56: #{bilm_forward.5} parent=5 // pred_fallthru
      _
  $region6: #{bilm_forward.5} parent=0 // loop_footer
    %s17 = sadd.s32 1, %s13
  $region7: #{bilm_forward.5} parent=0 // loop_footer_branch
    %12 = sbr.rel target = $region3
  $region8: #{bilm_forward.5} parent=0 // loop_exit
    _

// kernel: bilm_forward.4
$region0: #{bilm_forward.4}
  #allocation0 [shape = 'u32[]', space=smem, size = 0x4, offset = 0x4, fixed_abs, tag = 'smem constant byte address 0x4 - core index']
  #allocation1 [shape = 'u32[72,128]{1,0:T(1,128)}', space=vmem, size = 0x9000, scoped, tag = 'internal scratch']
  #allocation2 [shape = 'f32[16,128]{1,0:T(8,128)}', space=vmem, size = 0x2000, scoped, tag = 'scratch operand']
  %s0 = inlined_call_operand.vmem [shape: f32[1,16,32], index: 0, kind: input, shape index: {}]
  %s1 = inlined_call_operand.vmem [shape: bf16[2,32,128], index: 1, kind: input, shape index: {}]
  %s2 = inlined_call_operand.vmem [shape: bf16[2,32,128], index: 2, kind: input, shape index: {}]
  %s3 = inlined_call_operand.vmem [shape: f32[2,1,128], index: 3, kind: input, shape index: {}]
  %s4 = inlined_call_operand.vmem [shape: f32[2,8,2,32], index: 4, kind: output, shape index: {0}]
  %s5 = inlined_call_operand.vmem [shape: f32[2,2,32], index: 5, kind: output, shape index: {1}]
  %s6 = inlined_call_operand.vmem [shape: f32[2,2,32], index: 6, kind: output, shape index: {2}]
  %7 = xla_tuple %s4, %s5, %s6
  %s8 = sld [smem:[#allocation0]]
  $region69: #{bilm_forward.4} parent=0
    _
  %s10 = ssub.s32 1, %s8
  %s11 = scalar_select 0, %s10, %s8
  loop: start=0, step=1, limit=4
  $region2: #{bilm_forward.4} parent=0 // loop_pre_header
    _
  $region3: #{bilm_forward.4} parent=0 // loop_header
    %s13 = sphi 0, %s17
    %p14 = scmp.ge.s32.totalorder %s13, 4
    %s20 = sphi 0, %s32
    %s21 = sphi 0, %s28
    %s22 = sphi 0, %s20
    %s23 = sphi 0, %s21
    %s24 = sphi 0, %s22
    %s25 = sphi 0, %s23
    %s43 = sphi 0, %s45
    %s46 = sphi 0, %s43
    %s47 = sphi 0, %s46
    %s63 = sphi 0, %s47
    %s69 = sphi 0, %s71
    %s72 = sphi 0, %s69
    %s73 = sphi 0, %s72
    %s89 = sphi 0, %s73
    %s95 = sphi 0, %s97
    %s98 = sphi 0, %s95
    %s99 = sphi 0, %s98
    %s115 = sphi 0, %s99
    %s121 = sphi 0, %s123
    %s124 = sphi 0, %s121
    %s125 = sphi 0, %s124
    %s141 = sphi 0, %s125
    %s157 = sphi 0, %s159
    %s160 = sphi 0, %s157
    %s161 = sphi 0, %s160
    %s177 = sphi 0, %s161
    %s183 = sphi 0, %s185
    %s186 = sphi 0, %s183
    %s187 = sphi 0, %s186
    %s203 = sphi 0, %s187
    %s209 = sphi 0, %s211
    %s212 = sphi 0, %s209
    %s213 = sphi 0, %s212
    %s229 = sphi 0, %s213
  $region4: #{bilm_forward.4} parent=0 // loop_header_branch
    %16 = sbr.rel (%p14) target = $region8
  $region5: #{bilm_forward.4} parent=0 // loop_body
    %s18 = ssub.s32 %s13, 1
    %s19 = ssub.s32 %s13, 2
    %s26 = sadd.s32 1, %s21
    %p27 = scmp.ge.s32.totalorder %s26, 1
    %s28 = scalar_select %p27, 0, %s26
    %s29 = sadd.s32 1, %s20
    %s30 = scalar_select %p27, %s29, %s20
    %p31 = scmp.ge.s32.totalorder %s30, 2
    %s32 = scalar_select %p31, 0, %s30
    %s33 = smul.u32 %s21, 2
    %s34 = ssub.s32 0, %s33
    %s35 = smul.u32 %s20, %s34
    %s36 = sadd.s32 %s21, %s35
    %s37 = smul.u32 %s28, 2
    %s38 = ssub.s32 0, %s37
    %s39 = smul.u32 %s32, %s38
    %s40 = sadd.s32 %s28, %s39
    %s41 = ssub.s32 %s36, %s40
    %p42 = scmp.eq.s32.totalorder %s41, 0
    %s44 = sadd.s32 %s43, 1
    %s45 = scalar_select %p42, %s43, %s44
    %p48 = pneg %p42
    %p49 = scmp.eq.s32.totalorder %s13, 1
    %p50 = por %p48, %p49
    %p51 = scmp.ne.s32.totalorder %s43, %s46
    %p52 = scmp.eq.s32.totalorder %s13, 0
    %p53 = por %p51, %p52
    %p54 = scmp.ne.s32.totalorder %s43, %s46
    %p55 = scmp.eq.s32.totalorder %s18, 1
    %p56 = por %p54, %p55
    %p57 = scmp.ne.s32.totalorder %s46, %s47
    %p58 = scmp.eq.s32.totalorder %s18, 0
    %p59 = por %p57, %p58
    %p60 = scmp.ne.s32.totalorder %s46, %s47
    %p61 = scmp.eq.s32.totalorder %s19, 1
    %p62 = por %p60, %p61
    %p64 = scmp.ne.s32.totalorder %s47, %s63
    %p65 = scmp.eq.s32.totalorder %s19, 0
    %p66 = por %p64, %p65
    %s67 = ssub.s32 %s20, %s32
    %p68 = scmp.eq.s32.totalorder %s67, 0
    %s70 = sadd.s32 %s69, 1
    %s71 = scalar_select %p68, %s69, %s70
    %p74 = pneg %p68
    %p75 = scmp.eq.s32.totalorder %s13, 1
    %p76 = por %p74, %p75
    %p77 = scmp.ne.s32.totalorder %s69, %s72
    %p78 = scmp.eq.s32.totalorder %s13, 0
    %p79 = por %p77, %p78
    %p80 = scmp.ne.s32.totalorder %s69, %s72
    %p81 = scmp.eq.s32.totalorder %s18, 1
    %p82 = por %p80, %p81
    %p83 = scmp.ne.s32.totalorder %s72, %s73
    %p84 = scmp.eq.s32.totalorder %s18, 0
    %p85 = por %p83, %p84
    %p86 = scmp.ne.s32.totalorder %s72, %s73
    %p87 = scmp.eq.s32.totalorder %s19, 1
    %p88 = por %p86, %p87
    %p90 = scmp.ne.s32.totalorder %s73, %s89
    %p91 = scmp.eq.s32.totalorder %s19, 0
    %p92 = por %p90, %p91
    %s93 = ssub.s32 %s20, %s32
    %p94 = scmp.eq.s32.totalorder %s93, 0
    %s96 = sadd.s32 %s95, 1
    %s97 = scalar_select %p94, %s95, %s96
    %p100 = pneg %p94
    %p101 = scmp.eq.s32.totalorder %s13, 1
    %p102 = por %p100, %p101
    %p103 = scmp.ne.s32.totalorder %s95, %s98
    %p104 = scmp.eq.s32.totalorder %s13, 0
    %p105 = por %p103, %p104
    %p106 = scmp.ne.s32.totalorder %s95, %s98
    %p107 = scmp.eq.s32.totalorder %s18, 1
    %p108 = por %p106, %p107
    %p109 = scmp.ne.s32.totalorder %s98, %s99
    %p110 = scmp.eq.s32.totalorder %s18, 0
    %p111 = por %p109, %p110
    %p112 = scmp.ne.s32.totalorder %s98, %s99
    %p113 = scmp.eq.s32.totalorder %s19, 1
    %p114 = por %p112, %p113
    %p116 = scmp.ne.s32.totalorder %s99, %s115
    %p117 = scmp.eq.s32.totalorder %s19, 0
    %p118 = por %p116, %p117
    %s119 = ssub.s32 %s20, %s32
    %p120 = scmp.eq.s32.totalorder %s119, 0
    %s122 = sadd.s32 %s121, 1
    %s123 = scalar_select %p120, %s121, %s122
    %p126 = pneg %p120
    %p127 = scmp.eq.s32.totalorder %s13, 1
    %p128 = por %p126, %p127
    %p129 = scmp.ne.s32.totalorder %s121, %s124
    %p130 = scmp.eq.s32.totalorder %s13, 0
    %p131 = por %p129, %p130
    %p132 = scmp.ne.s32.totalorder %s121, %s124
    %p133 = scmp.eq.s32.totalorder %s18, 1
    %p134 = por %p132, %p133
    %p135 = scmp.ne.s32.totalorder %s124, %s125
    %p136 = scmp.eq.s32.totalorder %s18, 0
    %p137 = por %p135, %p136
    %p138 = scmp.ne.s32.totalorder %s124, %s125
    %p139 = scmp.eq.s32.totalorder %s19, 1
    %p140 = por %p138, %p139
    %p142 = scmp.ne.s32.totalorder %s125, %s141
    %p143 = scmp.eq.s32.totalorder %s19, 0
    %p144 = por %p142, %p143
    %s145 = smul.u32 %s21, 2
    %s146 = ssub.s32 0, %s145
    %s147 = smul.u32 %s20, %s146
    %s148 = sadd.s32 %s21, %s147
    %s149 = smul.u32 %s28, 2
    %s150 = ssub.s32 0, %s149
    %s151 = smul.u32 %s32, %s150
    %s152 = sadd.s32 %s28, %s151
    %s153 = ssub.s32 %s20, %s32
    %s154 = ssub.s32 %s148, %s152
    %s155 = sor.u32 %s153, %s154
    %p156 = scmp.eq.s32.totalorder %s155, 0
    %s158 = sadd.s32 %s157, 1
    %s159 = scalar_select %p156, %s157, %s158
    %p162 = pneg %p156
    %p163 = scmp.eq.s32.totalorder %s13, 1
    %p164 = por %p162, %p163
    %p165 = scmp.ne.s32.totalorder %s157, %s160
    %p166 = scmp.eq.s32.totalorder %s13, 0
    %p167 = por %p165, %p166
    %p168 = scmp.ne.s32.totalorder %s157, %s160
    %p169 = scmp.eq.s32.totalorder %s18, 1
    %p170 = por %p168, %p169
    %p171 = scmp.ne.s32.totalorder %s160, %s161
    %p172 = scmp.eq.s32.totalorder %s18, 0
    %p173 = por %p171, %p172
    %p174 = scmp.ne.s32.totalorder %s160, %s161
    %p175 = scmp.eq.s32.totalorder %s19, 1
    %p176 = por %p174, %p175
    %p178 = scmp.ne.s32.totalorder %s161, %s177
    %p179 = scmp.eq.s32.totalorder %s19, 0
    %p180 = por %p178, %p179
    %s181 = ssub.s32 %s20, %s32
    %p182 = scmp.eq.s32.totalorder %s181, 0
    %s184 = sadd.s32 %s183, 1
    %s185 = scalar_select %p182, %s183, %s184
    %p188 = pneg %p182
    %p189 = scmp.eq.s32.totalorder %s13, 1
    %p190 = por %p188, %p189
    %p191 = scmp.ne.s32.totalorder %s183, %s186
    %p192 = scmp.eq.s32.totalorder %s13, 0
    %p193 = por %p191, %p192
    %p194 = scmp.ne.s32.totalorder %s183, %s186
    %p195 = scmp.eq.s32.totalorder %s18, 1
    %p196 = por %p194, %p195
    %p197 = scmp.ne.s32.totalorder %s186, %s187
    %p198 = scmp.eq.s32.totalorder %s18, 0
    %p199 = por %p197, %p198
    %p200 = scmp.ne.s32.totalorder %s186, %s187
    %p201 = scmp.eq.s32.totalorder %s19, 1
    %p202 = por %p200, %p201
    %p204 = scmp.ne.s32.totalorder %s187, %s203
    %p205 = scmp.eq.s32.totalorder %s19, 0
    %p206 = por %p204, %p205
    %s207 = ssub.s32 %s20, %s32
    %p208 = scmp.eq.s32.totalorder %s207, 0
    %s210 = sadd.s32 %s209, 1
    %s211 = scalar_select %p208, %s209, %s210
    %p214 = pneg %p208
    %p215 = scmp.eq.s32.totalorder %s13, 1
    %p216 = por %p214, %p215
    %p217 = scmp.ne.s32.totalorder %s209, %s212
    %p218 = scmp.eq.s32.totalorder %s13, 0
    %p219 = por %p217, %p218
    %p220 = scmp.ne.s32.totalorder %s209, %s212
    %p221 = scmp.eq.s32.totalorder %s18, 1
    %p222 = por %p220, %p221
    %p223 = scmp.ne.s32.totalorder %s212, %s213
    %p224 = scmp.eq.s32.totalorder %s18, 0
    %p225 = por %p223, %p224
    %p226 = scmp.ne.s32.totalorder %s212, %s213
    %p227 = scmp.eq.s32.totalorder %s19, 1
    %p228 = por %p226, %p227
    %p230 = scmp.ne.s32.totalorder %s213, %s229
    %p231 = scmp.eq.s32.totalorder %s19, 0
    %p232 = por %p230, %p231
    %p233 = scmp.le.s32.totalorder 1, %s13
    %p234 = scmp.lt.s32.totalorder %s13, 3
    %p235 = pnand %p233, %p234
    %p236 = pneg %p235
    // Predicated region
    $region9: #{bilm_forward.4} parent=5 // pred_check
      _
    $region10: #{bilm_forward.4} parent=5 // pred_check_branch
      %238 = sbr.rel (%p235) target = $region12
    $region11: #{bilm_forward.4} parent=5 // pred_region
      %s239 = ssub.s32 %s13, 1
    $region12: #{bilm_forward.4} parent=5 // pred_fallthru
      _
    %p240 = scmp.lt.s32.totalorder %s13, 2
    // Predicated region
    $region13: #{bilm_forward.4} parent=5 // pred_check
      %p241 = pneg %p240
    $region14: #{bilm_forward.4} parent=5 // pred_check_branch
      %243 = sbr.rel (%p241) target = $region16
    $region15: #{bilm_forward.4} parent=5 // pred_region
      // Predicated region
      $region17: #{bilm_forward.4} parent=15 // pred_check
        %p244 = pneg %p53
      $region18: #{bilm_forward.4} parent=15 // pred_check_branch
        %246 = sbr.rel (%p244) target = $region20
      $region19: #{bilm_forward.4} parent=15 // pred_region
        %s247 = smul.u32 %s21, 2
        %s248 = ssub.s32 0, %s247
        %s249 = smul.u32 %s20, %s248
        %s250 = sadd.s32 %s21, %s249
        %s251 = smul.u32 2, %s250
        %p252 = scmp.lt.s32.totalorder %s251, 1
        %s253 = scalar_select %p252, %s251, 1
        %s254 = smul.addr %s253, 8
        %s255 = scalar_lea.vmem %s0, %s254
        %s256 = smul.u32 %s21, 2
        %s257 = ssub.s32 0, %s256
        %s258 = smul.u32 %s20, %s257
        %s259 = sadd.s32 %s21, %s258
        %s260 = smul.u32 2, %s259
      $region20: #{bilm_forward.4} parent=15 // pred_fallthru
        _
      // Predicated region
      $region21: #{bilm_forward.4} parent=15 // pred_check
        %p261 = pneg %p79
      $region22: #{bilm_forward.4} parent=15 // pred_check_branch
        %263 = sbr.rel (%p261) target = $region24
      $region23: #{bilm_forward.4} parent=15 // pred_region
        %p264 = scmp.lt.s32.totalorder %s20, 1
        %s265 = scalar_select %p264, %s20, 1
        %s266 = smul.addr %s265, 4
        %s267 = smul.addr %s266, 4
        %s268 = scalar_lea.vmem %s1, %s267
      $region24: #{bilm_forward.4} parent=15 // pred_fallthru
        _
      // Predicated region
      $region25: #{bilm_forward.4} parent=15 // pred_check
        %p269 = pneg %p105
      $region26: #{bilm_forward.4} parent=15 // pred_check_branch
        %271 = sbr.rel (%p269) target = $region28
      $region27: #{bilm_forward.4} parent=15 // pred_region
        %p272 = scmp.lt.s32.totalorder %s20, 1
        %s273 = scalar_select %p272, %s20, 1
        %s274 = smul.addr %s273, 4
        %s275 = smul.addr %s274, 4
        %s276 = scalar_lea.vmem %s2, %s275
      $region28: #{bilm_forward.4} parent=15 // pred_fallthru
        _
      // Predicated region
      $region29: #{bilm_forward.4} parent=15 // pred_check
        %p277 = pneg %p131
      $region30: #{bilm_forward.4} parent=15 // pred_check_branch
        %279 = sbr.rel (%p277) target = $region32
      $region31: #{bilm_forward.4} parent=15 // pred_region
        %p280 = scmp.lt.s32.totalorder %s20, 1
        %s281 = scalar_select %p280, %s20, 1
        %s282 = scalar_lea.vmem %s3, %s281
      $region32: #{bilm_forward.4} parent=15 // pred_fallthru
        _
    $region16: #{bilm_forward.4} parent=5 // pred_fallthru
      _
    %p283 = scmp.le.s32.totalorder 1, %s13
    %p284 = scmp.lt.s32.totalorder %s13, 3
    %p285 = pnand %p283, %p284
    %p286 = pneg %p285
    // Predicated region
    $region33: #{bilm_forward.4} parent=5 // pred_check
      _
    $region34: #{bilm_forward.4} parent=5 // pred_check_branch
      %288 = sbr.rel (%p285) target = $region36
    $region35: #{bilm_forward.4} parent=5 // pred_region
      %s289 = ssub.s32 %s13, 1
      %s290 = smul.u32 %s23, 2
      %s291 = ssub.s32 0, %s290
      %s292 = smul.u32 %s22, %s291
      %s293 = sadd.s32 %s23, %s292
      %s294 = smul.u32 2, %s293
      %p295 = scmp.lt.s32.totalorder %s294, 1
      %s296 = scalar_select %p295, %s294, 1
      %s297 = smul.addr %s296, 8
      %s298 = scalar_lea.vmem %s0, %s297
      %p299 = pneg %p59
      %p300 = pneg %p56
      %p301 = scmp.lt.s32.totalorder %s22, 1
      %s302 = scalar_select %p301, %s22, 1
      %s303 = smul.addr %s302, 4
      %s304 = smul.addr %s303, 4
      %s305 = scalar_lea.vmem %s1, %s304
      %p306 = pneg %p85
      %p307 = pneg %p82
      %p308 = scmp.lt.s32.totalorder %s22, 1
      %s309 = scalar_select %p308, %s22, 1
      %s310 = smul.addr %s309, 4
      %s311 = smul.addr %s310, 4
      %s312 = scalar_lea.vmem %s2, %s311
      %p313 = pneg %p111
      %p314 = pneg %p108
      %p315 = scmp.lt.s32.totalorder %s22, 1
      %s316 = scalar_select %p315, %s22, 1
      %s317 = scalar_lea.vmem %s3, %s316
      %p318 = pneg %p137
      %p319 = pneg %p134
      %p320 = pneg %p173
      %p321 = pneg %p170
      %s322 = smul.u32 %s23, 2
      %s323 = ssub.s32 0, %s322
      %s324 = smul.u32 %s22, %s323
      %s325 = sadd.s32 %s23, %s324
      %s326 = smul.u32 8, %s325
      %p327 = scmp.lt.s32.totalorder %s22, 1
      %s328 = scalar_select %p327, %s22, 1
      %p329 = scmp.lt.s32.totalorder %s326, 7
      %s330 = scalar_select %p329, %s326, 7
      %s331 = smul.addr %s328, 8
      %s332 = sadd.s32 %s330, %s331
      %s333 = smul.addr %s332, 2
      %s334 = scalar_lea.vmem %s4, %s333
      %p335 = pneg %p199
      %p336 = pneg %p196
      %p337 = scmp.lt.s32.totalorder %s22, 1
      %s338 = scalar_select %p337, %s22, 1
      %s339 = smul.addr %s338, 2
      %s340 = scalar_lea.vmem %s5, %s339
      %p341 = pneg %p225
      %p342 = pneg %p222
      %p343 = scmp.lt.s32.totalorder %s22, 1
      %s344 = scalar_select %p343, %s22, 1
      %s345 = smul.addr %s344, 2
      %s346 = scalar_lea.vmem %s6, %s345
      %s347 = smul.u32 %s23, 2
      %s348 = ssub.s32 0, %s347
      %s349 = smul.u32 %s22, %s348
      %s350 = sadd.s32 %s23, %s349
      %s351 = smul.u32 2, %s350
      %p352 = scmp.lt.s32.totalorder %s351, 1
      %s353 = scalar_select %p352, %s351, 1
      %s354 = smul.addr %s353, 8
      %s355 = scalar_lea.vmem %s0, %s354
      %s356 = smul.u32 %s23, 2
      %s357 = ssub.s32 0, %s356
      %s358 = smul.u32 %s22, %s357
      %s359 = sadd.s32 %s23, %s358
      %s360 = smul.u32 2, %s359
      %p361 = scmp.lt.s32.totalorder %s22, 1
      %s362 = scalar_select %p361, %s22, 1
      %s363 = smul.addr %s362, 4
      %s364 = smul.addr %s363, 4
      %s365 = scalar_lea.vmem %s1, %s364
      %p366 = scmp.lt.s32.totalorder %s22, 1
      %s367 = scalar_select %p366, %s22, 1
      %s368 = smul.addr %s367, 4
      %s369 = smul.addr %s368, 4
      %s370 = scalar_lea.vmem %s2, %s369
      %p371 = scmp.lt.s32.totalorder %s22, 1
      %s372 = scalar_select %p371, %s22, 1
      %s373 = scalar_lea.vmem %s3, %s372
      %s374 = smul.u32 %s23, 2
      %s375 = ssub.s32 0, %s374
      %s376 = smul.u32 %s22, %s375
      %s377 = sadd.s32 %s23, %s376
      %s378 = smul.u32 8, %s377
      %p379 = scmp.lt.s32.totalorder %s22, 1
      %s380 = scalar_select %p379, %s22, 1
      %p381 = scmp.lt.s32.totalorder %s378, 7
      %s382 = scalar_select %p381, %s378, 7
      %s383 = smul.addr %s380, 8
      %s384 = sadd.s32 %s382, %s383
      %s385 = smul.addr %s384, 2
      %s386 = scalar_lea.vmem %s4, %s385
      %s387 = smul.u32 %s23, 2
      %s388 = ssub.s32 0, %s387
      %s389 = smul.u32 %s22, %s388
      %s390 = sadd.s32 %s23, %s389
      %s391 = smul.u32 8, %s390
      %p392 = scmp.lt.s32.totalorder %s22, 1
      %s393 = scalar_select %p392, %s22, 1
      %s394 = smul.addr %s393, 2
      %s395 = scalar_lea.vmem %s5, %s394
      %p396 = scmp.lt.s32.totalorder %s22, 1
      %s397 = scalar_select %p396, %s22, 1
      %s398 = smul.addr %s397, 2
      %s399 = scalar_lea.vmem %s6, %s398
      %v401 = vld [vmem:[%s355] sm:$0xff]
      %v402 = vld [vmem:[%s355 + $0x8] sm:$0xff]
      %v403 = vpack.c.bf16 %v402, %v401
      %v404 = vld [vmem:[%s365] sm:$0xf]
      %v405 = vld [vmem:[%s365 + $0x4] sm:$0xf]
      %v406 = vld [vmem:[%s365 + $0x8] sm:$0xf]
      %v407 = vld [vmem:[%s365 + $0xc] sm:$0xf]
      %v408 = vld [vmem:[%s373] sm:$0x1]
      %v410 = vperm.slane %v408, 0
      %v416 = vunpack.c.l.b16 %v404
      %v417 = vunpack.c.l.b16 %v405
      %v418 = vunpack.c.l.b16 %v406
      %v419 = vunpack.c.l.b16 %v407
      %v420 = vpack.c.b16 %v417, %v416
      %v421 = vpack.c.b16 %v419, %v418
      %vm424 = vcmask 261120
      %v426 = vsel %vm424, %v403, 0
      %428 = vmatpush.bf16.msra.mxu0 0
      %429 = vmatpush.bf16.msra.mxu0 0
      %430 = vmatpush.bf16.msra.mxu0 0
      %431 = vmatpush.bf16.msra.mxu0 0
      %432 = vmatpush.bf16.msra.mxu0 0
      %433 = vmatpush.bf16.msra.mxu0 0
      %434 = vmatpush.bf16.msra.mxu0 %v421
      %435 = vmatpush.bf16.msra.mxu0 %v420
      %436 = vmatmul.bf16.gmra.mxu0 %v426
      %v437 = vpop.f32.mrf.mxu0
      %v438 = vadd.f32 %v410, %v437
      %v439 = vpop.f32.mrf.mxu0
      %v440 = vadd.f32 %v410, %v439
      %441 = vdwg.mxu0
      %442 = vst [vmem:[#allocation2] sm:$0xff] %v438
      %443 = vst [vmem:[#allocation2 + $0x8] sm:$0xff] %v440
      %v444 = vld [vmem:[%s370] sm:$0xf]
      %v445 = vld [vmem:[%s370 + $0x4] sm:$0xf]
      %v446 = vld [vmem:[%s370 + $0x8] sm:$0xf]
      %v447 = vld [vmem:[%s370 + $0xc] sm:$0xf]
      %p448 = scmp.eq.s32.totalorder %s23, 0
      // Predicated region
      $region37: #{bilm_forward.4} parent=35 // pred_check
        %p449 = pneg %p448
      $region38: #{bilm_forward.4} parent=35 // pred_check_branch
        %451 = sbr.rel (%p449) target = $region40
      $region39: #{bilm_forward.4} parent=35 // pred_region
        %vm452 = vcmask 254976
        %453 = vst.msk [vmem:[%s395] sm:$0x3] %vm452, 0.0
        %454 = vst.msk [vmem:[%s399] sm:$0x3] %vm452, 0.0
      $region40: #{bilm_forward.4} parent=35 // pred_fallthru
        _
      %v455 = vlaneseq
      %v456 = vand.u32 %v455, 127
      %vm457 = vcmp.ge.s32.totalorder %v456, 64
      %vm458 = vcmp.lt.s32.totalorder %v456, 96
      %vm459 = vmand %vm457, %vm458
      %v460 = vld [vmem:[%s395] sm:$0x3]
      %v461 = vld [vmem:[%s399] sm:$0x3]
      %s462 = smul.u32 %s22, 7
      %s463 = smul.u32 %s22, 14
      %s464 = scalar_lea.vmem [#allocation2], %s463
      %v465 = vld [vmem:[%s464] sm:$0x3]
      %v466 = vpack.c.bf16 %v460, %v460
      %v471 = vunpack.c.l.b16 %v444
      %v472 = vunpack.c.l.b16 %v445
      %v473 = vunpack.c.l.b16 %v446
      %v474 = vunpack.c.l.b16 %v447
      %v475 = vpack.c.b16 %v472, %v471
      %v476 = vpack.c.b16 %v474, %v473
      %v480 = vsel %vm424, %v466, 0
      %482 = vmatpush.bf16.msra.mxu0 0
      %483 = vmatpush.bf16.msra.mxu0 0
      %484 = vmatpush.bf16.msra.mxu0 0
      %485 = vmatpush.bf16.msra.mxu0 0
      %486 = vmatpush.bf16.msra.mxu0 0
      %487 = vmatpush.bf16.msra.mxu0 0
      %488 = vmatpush.bf16.msra.mxu0 %v476
      %489 = vmatpush.bf16.msra.mxu0 %v475
      %490 = vmatmul.bf16.gmra.mxu0 %v480
      %v491 = vpop.f32.mrf.mxu0
      %v492 = vadd.f32 0.0, %v491
      %v493 = vpop.f32.mrf.mxu0
      %494 = vdwg.mxu0
      %v495 = vadd.f32 %v465, %v492
      %v496 = vtanh.pop %v495
      %v497 = vxor.u32 %v495, 2147483648
      %v498 = vmul.f32 %v497, 1.442695
      %v499 = vpow.pop %v498
      %v500 = vadd.f32 %v499, 1.0
      %v501 = vrcp.pop %v500
      %v502 = vmul.f32 %v500, %v501
      %v503 = vsub.f32 1.0, %v502
      %v504 = vmul.f32 %v501, %v503
      %v505 = vadd.f32 %v501, %v504
      %vm506 = vweird.f32 %v500
      %vm507 = vweird.f32 %v501
      %vm508 = vmor %vm506, %vm507
      %v509 = vsel %vm508, %v501, %v505
      %v510 = vand.u32 2147483647, %v500
      %vm511 = vcmp.eq.f32.partialorder %v510, 8.507059e+37
      %v512 = vand.u32 %v500, 2147483648
      %v513 = vor.u32 1.1754944e-38, %v512
      %v514 = vsel %vm511, %v513, %v509
      %v515 = vmul.f32 1.0, %v514
      %v516 = vsel %vm459, %v496, %v515
      %518 = vrot.lane.b32.xlu0 %v461, 32
      %v519 = vpop.permute.xlu0 %518
      %v521 = vmul.f32 %v516, %v519
      %523 = vrot.lane.b32.xlu0 %v516, 64
      %v524 = vpop.permute.xlu0 %523
      %v526 = vmul.f32 %v516, %v524
      %528 = vrot.lane.b32.xlu0 %v526, 32
      %v529 = vpop.permute.xlu0 %528
      %v531 = vadd.f32 %v521, %v529
      %v532 = vtanh.pop %v531
      %534 = vrot.lane.b32.xlu0 %v532, 64
      %v535 = vpop.permute.xlu0 %534
      %v537 = vmul.f32 %v516, %v535
      %539 = vrot.lane.b32.xlu0 %v537, 32
      %v540 = vpop.permute.xlu0 %539
      %s542 = smul.u32 %s462, 2
      %s543 = scalar_lea.vmem %s386, %s542
      %vm544 = vcmask 254976
      %545 = vst.msk [vmem:[%s543] sm:$0x3] %vm544, %v540
      %s546 = smul.u32 %s22, 5
      %s547 = sadd.s32 %s546, 1
      %s548 = smul.u32 %s547, 2
      %s549 = scalar_lea.vmem [#allocation2], %s548
      %v550 = vld [vmem:[%s549] sm:$0x3]
      %v551 = vpack.c.bf16 %v537, %v537
      %553 = vrot.lane.b32.xlu0 %v551, 32
      %v554 = vpop.permute.xlu0 %553
      %v556 = vsel %vm424, %v554, 0
      %558 = vmatpush.bf16.msra.mxu0 0
      %559 = vmatpush.bf16.msra.mxu0 0
      %560 = vmatpush.bf16.msra.mxu0 0
      %561 = vmatpush.bf16.msra.mxu0 0
      %562 = vmatpush.bf16.msra.mxu0 0
      %563 = vmatpush.bf16.msra.mxu0 0
      %564 = vmatpush.bf16.msra.mxu0 %v476
      %565 = vmatpush.bf16.msra.mxu0 %v475
      %566 = vmatmul.bf16.gmra.mxu0 %v556
      %v567 = vpop.f32.mrf.mxu0
      %v568 = vadd.f32 0.0, %v567
      %v569 = vpop.f32.mrf.mxu0
      %570 = vdwg.mxu0
      %v571 = vadd.f32 %v550, %v568
      %v572 = vtanh.pop %v571
      %v573 = vxor.u32 %v571, 2147483648
      %v574 = vmul.f32 %v573, 1.442695
      %v575 = vpow.pop %v574
      %v576 = vadd.f32 %v575, 1.0
      %v577 = vrcp.pop %v576
      %v578 = vmul.f32 %v576, %v577
      %v579 = vsub.f32 1.0, %v578
      %v580 = vmul.f32 %v577, %v579
      %v581 = vadd.f32 %v577, %v580
      %vm582 = vweird.f32 %v576
      %vm583 = vweird.f32 %v577
      %vm584 = vmor %vm582, %vm583
      %v585 = vsel %vm584, %v577, %v581
      %v586 = vand.u32 2147483647, %v576
      %vm587 = vcmp.eq.f32.partialorder %v586, 8.507059e+37
      %v588 = vand.u32 %v576, 2147483648
      %v589 = vor.u32 1.1754944e-38, %v588
      %v590 = vsel %vm587, %v589, %v585
      %v591 = vmul.f32 1.0, %v590
      %v592 = vsel %vm459, %v572, %v591
      %v593 = vmul.f32 %v592, %v531
      %595 = vrot.lane.b32.xlu0 %v592, 64
      %v596 = vpop.permute.xlu0 %595
      %v598 = vmul.f32 %v592, %v596
      %600 = vrot.lane.b32.xlu0 %v598, 32
      %v601 = vpop.permute.xlu0 %600
      %v603 = vadd.f32 %v593, %v601
      %v604 = vtanh.pop %v603
      %606 = vrot.lane.b32.xlu0 %v604, 64
      %v607 = vpop.permute.xlu0 %606
      %v609 = vmul.f32 %v592, %v607
      %611 = vrot.lane.b32.xlu0 %v609, 32
      %v612 = vpop.permute.xlu0 %611
      %s614 = scalar_lea.vmem %s386, %s548
      %615 = vst.msk [vmem:[%s614] sm:$0x3] %vm544, %v612
      %s616 = smul.u32 %s22, 3
      %s617 = sadd.s32 %s616, 2
      %s618 = smul.u32 %s617, 2
      %s619 = scalar_lea.vmem [#allocation2], %s618
      %v620 = vld [vmem:[%s619] sm:$0x3]
      %v621 = vpack.c.bf16 %v609, %v609
      %623 = vrot.lane.b32.xlu0 %v621, 32
      %v624 = vpop.permute.xlu0 %623
      %v626 = vsel %vm424, %v624, 0
      %628 = vmatpush.bf16.msra.mxu0 0
      %629 = vmatpush.bf16.msra.mxu0 0
      %630 = vmatpush.bf16.msra.mxu0 0
      %631 = vmatpush.bf16.msra.mxu0 0
      %632 = vmatpush.bf16.msra.mxu0 0
      %633 = vmatpush.bf16.msra.mxu0 0
      %634 = vmatpush.bf16.msra.mxu0 %v476
      %635 = vmatpush.bf16.msra.mxu0 %v475
      %636 = vmatmul.bf16.gmra.mxu0 %v626
      %v637 = vpop.f32.mrf.mxu0
      %v638 = vadd.f32 0.0, %v637
      %v639 = vpop.f32.mrf.mxu0
      %640 = vdwg.mxu0
      %v641 = vadd.f32 %v620, %v638
      %v642 = vtanh.pop %v641
      %v643 = vxor.u32 %v641, 2147483648
      %v644 = vmul.f32 %v643, 1.442695
      %v645 = vpow.pop %v644
      %v646 = vadd.f32 %v645, 1.0
      %v647 = vrcp.pop %v646
      %v648 = vmul.f32 %v646, %v647
      %v649 = vsub.f32 1.0, %v648
      %v650 = vmul.f32 %v647, %v649
      %v651 = vadd.f32 %v647, %v650
      %vm652 = vweird.f32 %v646
      %vm653 = vweird.f32 %v647
      %vm654 = vmor %vm652, %vm653
      %v655 = vsel %vm654, %v647, %v651
      %v656 = vand.u32 2147483647, %v646
      %vm657 = vcmp.eq.f32.partialorder %v656, 8.507059e+37
      %v658 = vand.u32 %v646, 2147483648
      %v659 = vor.u32 1.1754944e-38, %v658
      %v660 = vsel %vm657, %v659, %v655
      %v661 = vmul.f32 1.0, %v660
      %v662 = vsel %vm459, %v642, %v661
      %v663 = vmul.f32 %v662, %v603
      %665 = vrot.lane.b32.xlu0 %v662, 64
      %v666 = vpop.permute.xlu0 %665
      %v668 = vmul.f32 %v662, %v666
      %670 = vrot.lane.b32.xlu0 %v668, 32
      %v671 = vpop.permute.xlu0 %670
      %v673 = vadd.f32 %v663, %v671
      %v674 = vtanh.pop %v673
      %676 = vrot.lane.b32.xlu0 %v674, 64
      %v677 = vpop.permute.xlu0 %676
      %v679 = vmul.f32 %v662, %v677
      %681 = vrot.lane.b32.xlu0 %v679, 32
      %v682 = vpop.permute.xlu0 %681
      %s684 = scalar_lea.vmem %s386, %s618
      %685 = vst.msk [vmem:[%s684] sm:$0x3] %vm544, %v682
      %s686 = sadd.s32 %s22, 3
      %s687 = smul.u32 %s686, 2
      %s688 = scalar_lea.vmem [#allocation2], %s687
      %v689 = vld [vmem:[%s688] sm:$0x3]
      %v690 = vpack.c.bf16 %v679, %v679
      %692 = vrot.lane.b32.xlu0 %v690, 32
      %v693 = vpop.permute.xlu0 %692
      %v695 = vsel %vm424, %v693, 0
      %697 = vmatpush.bf16.msra.mxu0 0
      %698 = vmatpush.bf16.msra.mxu0 0
      %699 = vmatpush.bf16.msra.mxu0 0
      %700 = vmatpush.bf16.msra.mxu0 0
      %701 = vmatpush.bf16.msra.mxu0 0
      %702 = vmatpush.bf16.msra.mxu0 0
      %703 = vmatpush.bf16.msra.mxu0 %v476
      %704 = vmatpush.bf16.msra.mxu0 %v475
      %705 = vmatmul.bf16.gmra.mxu0 %v695
      %v706 = vpop.f32.mrf.mxu0
      %v707 = vadd.f32 0.0, %v706
      %v708 = vpop.f32.mrf.mxu0
      %709 = vdwg.mxu0
      %v710 = vadd.f32 %v689, %v707
      %v711 = vtanh.pop %v710
      %v712 = vxor.u32 %v710, 2147483648
      %v713 = vmul.f32 %v712, 1.442695
      %v714 = vpow.pop %v713
      %v715 = vadd.f32 %v714, 1.0
      %v716 = vrcp.pop %v715
      %v717 = vmul.f32 %v715, %v716
      %v718 = vsub.f32 1.0, %v717
      %v719 = vmul.f32 %v716, %v718
      %v720 = vadd.f32 %v716, %v719
      %vm721 = vweird.f32 %v715
      %vm722 = vweird.f32 %v716
      %vm723 = vmor %vm721, %vm722
      %v724 = vsel %vm723, %v716, %v720
      %v725 = vand.u32 2147483647, %v715
      %vm726 = vcmp.eq.f32.partialorder %v725, 8.507059e+37
      %v727 = vand.u32 %v715, 2147483648
      %v728 = vor.u32 1.1754944e-38, %v727
      %v729 = vsel %vm726, %v728, %v724
      %v730 = vmul.f32 1.0, %v729
      %v731 = vsel %vm459, %v711, %v730
      %v732 = vmul.f32 %v731, %v673
      %734 = vrot.lane.b32.xlu0 %v731, 64
      %v735 = vpop.permute.xlu0 %734
      %v737 = vmul.f32 %v731, %v735
      %739 = vrot.lane.b32.xlu0 %v737, 32
      %v740 = vpop.permute.xlu0 %739
      %v742 = vadd.f32 %v732, %v740
      %v743 = vtanh.pop %v742
      %745 = vrot.lane.b32.xlu0 %v743, 64
      %v746 = vpop.permute.xlu0 %745
      %v748 = vmul.f32 %v731, %v746
      %750 = vrot.lane.b32.xlu0 %v748, 32
      %v751 = vpop.permute.xlu0 %750
      %s753 = scalar_lea.vmem %s386, %s687
      %754 = vst.msk [vmem:[%s753] sm:$0x3] %vm544, %v751
      %s755 = ssub.s32 4, %s22
      %s756 = smul.u32 %s755, 2
      %s757 = scalar_lea.vmem [#allocation2], %s756
      %v758 = vld [vmem:[%s757] sm:$0x3]
      %v759 = vpack.c.bf16 %v748, %v748
      %761 = vrot.lane.b32.xlu0 %v759, 32
      %v762 = vpop.permute.xlu0 %761
      %v764 = vsel %vm424, %v762, 0
      %766 = vmatpush.bf16.msra.mxu0 0
      %767 = vmatpush.bf16.msra.mxu0 0
      %768 = vmatpush.bf16.msra.mxu0 0
      %769 = vmatpush.bf16.msra.mxu0 0
      %770 = vmatpush.bf16.msra.mxu0 0
      %771 = vmatpush.bf16.msra.mxu0 0
      %772 = vmatpush.bf16.msra.mxu0 %v476
      %773 = vmatpush.bf16.msra.mxu0 %v475
      %774 = vmatmul.bf16.gmra.mxu0 %v764
      %v775 = vpop.f32.mrf.mxu0
      %v776 = vadd.f32 0.0, %v775
      %v777 = vpop.f32.mrf.mxu0
      %778 = vdwg.mxu0
      %v779 = vadd.f32 %v758, %v776
      %v780 = vtanh.pop %v779
      %v781 = vxor.u32 %v779, 2147483648
      %v782 = vmul.f32 %v781, 1.442695
      %v783 = vpow.pop %v782
      %v784 = vadd.f32 %v783, 1.0
      %v785 = vrcp.pop %v784
      %v786 = vmul.f32 %v784, %v785
      %v787 = vsub.f32 1.0, %v786
      %v788 = vmul.f32 %v785, %v787
      %v789 = vadd.f32 %v785, %v788
      %vm790 = vweird.f32 %v784
      %vm791 = vweird.f32 %v785
      %vm792 = vmor %vm790, %vm791
      %v793 = vsel %vm792, %v785, %v789
      %v794 = vand.u32 2147483647, %v784
      %vm795 = vcmp.eq.f32.partialorder %v794, 8.507059e+37
      %v796 = vand.u32 %v784, 2147483648
      %v797 = vor.u32 1.1754944e-38, %v796
      %v798 = vsel %vm795, %v797, %v793
      %v799 = vmul.f32 1.0, %v798
      %v800 = vsel %vm459, %v780, %v799
      %v801 = vmul.f32 %v800, %v742
      %803 = vrot.lane.b32.xlu0 %v800, 64
      %v804 = vpop.permute.xlu0 %803
      %v806 = vmul.f32 %v800, %v804
      %808 = vrot.lane.b32.xlu0 %v806, 32
      %v809 = vpop.permute.xlu0 %808
      %v811 = vadd.f32 %v801, %v809
      %v812 = vtanh.pop %v811
      %814 = vrot.lane.b32.xlu0 %v812, 64
      %v815 = vpop.permute.xlu0 %814
      %v817 = vmul.f32 %v800, %v815
      %819 = vrot.lane.b32.xlu0 %v817, 32
      %v820 = vpop.permute.xlu0 %819
      %s822 = scalar_lea.vmem %s386, %s756
      %823 = vst.msk [vmem:[%s822] sm:$0x3] %vm544, %v820
      %s824 = smul.u32 %s22, 4294967293
      %s825 = sadd.s32 %s824, 5
      %s826 = smul.u32 %s825, 2
      %s827 = scalar_lea.vmem [#allocation2], %s826
      %v828 = vld [vmem:[%s827] sm:$0x3]
      %v829 = vpack.c.bf16 %v817, %v817
      %831 = vrot.lane.b32.xlu0 %v829, 32
      %v832 = vpop.permute.xlu0 %831
      %v834 = vsel %vm424, %v832, 0
      %836 = vmatpush.bf16.msra.mxu0 0
      %837 = vmatpush.bf16.msra.mxu0 0
      %838 = vmatpush.bf16.msra.mxu0 0
      %839 = vmatpush.bf16.msra.mxu0 0
      %840 = vmatpush.bf16.msra.mxu0 0
      %841 = vmatpush.bf16.msra.mxu0 0
      %842 = vmatpush.bf16.msra.mxu0 %v476
      %843 = vmatpush.bf16.msra.mxu0 %v475
      %844 = vmatmul.bf16.gmra.mxu0 %v834
      %v845 = vpop.f32.mrf.mxu0
      %v846 = vadd.f32 0.0, %v845
      %v847 = vpop.f32.mrf.mxu0
      %848 = vdwg.mxu0
      %v849 = vadd.f32 %v828, %v846
      %v850 = vtanh.pop %v849
      %v851 = vxor.u32 %v849, 2147483648
      %v852 = vmul.f32 %v851, 1.442695
      %v853 = vpow.pop %v852
      %v854 = vadd.f32 %v853, 1.0
      %v855 = vrcp.pop %v854
      %v856 = vmul.f32 %v854, %v855
      %v857 = vsub.f32 1.0, %v856
      %v858 = vmul.f32 %v855, %v857
      %v859 = vadd.f32 %v855, %v858
      %vm860 = vweird.f32 %v854
      %vm861 = vweird.f32 %v855
      %vm862 = vmor %vm860, %vm861
      %v863 = vsel %vm862, %v855, %v859
      %v864 = vand.u32 2147483647, %v854
      %vm865 = vcmp.eq.f32.partialorder %v864, 8.507059e+37
      %v866 = vand.u32 %v854, 2147483648
      %v867 = vor.u32 1.1754944e-38, %v866
      %v868 = vsel %vm865, %v867, %v863
      %v869 = vmul.f32 1.0, %v868
      %v870 = vsel %vm459, %v850, %v869
      %v871 = vmul.f32 %v870, %v811
      %873 = vrot.lane.b32.xlu0 %v870, 64
      %v874 = vpop.permute.xlu0 %873
      %v876 = vmul.f32 %v870, %v874
      %878 = vrot.lane.b32.xlu0 %v876, 32
      %v879 = vpop.permute.xlu0 %878
      %v881 = vadd.f32 %v871, %v879
      %v882 = vtanh.pop %v881
      %884 = vrot.lane.b32.xlu0 %v882, 64
      %v885 = vpop.permute.xlu0 %884
      %v887 = vmul.f32 %v870, %v885
      %889 = vrot.lane.b32.xlu0 %v887, 32
      %v890 = vpop.permute.xlu0 %889
      %s892 = scalar_lea.vmem %s386, %s826
      %893 = vst.msk [vmem:[%s892] sm:$0x3] %vm544, %v890
      %s894 = smul.u32 %s22, 4294967291
      %s895 = sadd.s32 %s894, 6
      %s896 = smul.u32 %s895, 2
      %s897 = scalar_lea.vmem [#allocation2], %s896
      %v898 = vld [vmem:[%s897] sm:$0x3]
      %v899 = vpack.c.bf16 %v887, %v887
      %901 = vrot.lane.b32.xlu0 %v899, 32
      %v902 = vpop.permute.xlu0 %901
      %v904 = vsel %vm424, %v902, 0
      %906 = vmatpush.bf16.msra.mxu0 0
      %907 = vmatpush.bf16.msra.mxu0 0
      %908 = vmatpush.bf16.msra.mxu0 0
      %909 = vmatpush.bf16.msra.mxu0 0
      %910 = vmatpush.bf16.msra.mxu0 0
      %911 = vmatpush.bf16.msra.mxu0 0
      %912 = vmatpush.bf16.msra.mxu0 %v476
      %913 = vmatpush.bf16.msra.mxu0 %v475
      %914 = vmatmul.bf16.gmra.mxu0 %v904
      %v915 = vpop.f32.mrf.mxu0
      %v916 = vadd.f32 0.0, %v915
      %v917 = vpop.f32.mrf.mxu0
      %918 = vdwg.mxu0
      %v919 = vadd.f32 %v898, %v916
      %v920 = vtanh.pop %v919
      %v921 = vxor.u32 %v919, 2147483648
      %v922 = vmul.f32 %v921, 1.442695
      %v923 = vpow.pop %v922
      %v924 = vadd.f32 %v923, 1.0
      %v925 = vrcp.pop %v924
      %v926 = vmul.f32 %v924, %v925
      %v927 = vsub.f32 1.0, %v926
      %v928 = vmul.f32 %v925, %v927
      %v929 = vadd.f32 %v925, %v928
      %vm930 = vweird.f32 %v924
      %vm931 = vweird.f32 %v925
      %vm932 = vmor %vm930, %vm931
      %v933 = vsel %vm932, %v925, %v929
      %v934 = vand.u32 2147483647, %v924
      %vm935 = vcmp.eq.f32.partialorder %v934, 8.507059e+37
      %v936 = vand.u32 %v924, 2147483648
      %v937 = vor.u32 1.1754944e-38, %v936
      %v938 = vsel %vm935, %v937, %v933
      %v939 = vmul.f32 1.0, %v938
      %v940 = vsel %vm459, %v920, %v939
      %v941 = vmul.f32 %v940, %v881
      %943 = vrot.lane.b32.xlu0 %v940, 64
      %v944 = vpop.permute.xlu0 %943
      %v946 = vmul.f32 %v940, %v944
      %948 = vrot.lane.b32.xlu0 %v946, 32
      %v949 = vpop.permute.xlu0 %948
      %v951 = vadd.f32 %v941, %v949
      %v952 = vtanh.pop %v951
      %954 = vrot.lane.b32.xlu0 %v952, 64
      %v955 = vpop.permute.xlu0 %954
      %v957 = vmul.f32 %v940, %v955
      %959 = vrot.lane.b32.xlu0 %v957, 32
      %v960 = vpop.permute.xlu0 %959
      %s962 = scalar_lea.vmem %s386, %s896
      %963 = vst.msk [vmem:[%s962] sm:$0x3] %vm544, %v960
      %s964 = smul.u32 %s22, 4294967289
      %s965 = sadd.s32 %s964, 7
      %s966 = smul.u32 %s965, 2
      %s967 = scalar_lea.vmem [#allocation2], %s966
      %v968 = vld [vmem:[%s967] sm:$0x3]
      %v969 = vpack.c.bf16 %v957, %v957
      %971 = vrot.lane.b32.xlu0 %v969, 32
      %v972 = vpop.permute.xlu0 %971
      %v974 = vsel %vm424, %v972, 0
      %976 = vmatpush.bf16.msra.mxu0 0
      %977 = vmatpush.bf16.msra.mxu0 0
      %978 = vmatpush.bf16.msra.mxu0 0
      %979 = vmatpush.bf16.msra.mxu0 0
      %980 = vmatpush.bf16.msra.mxu0 0
      %981 = vmatpush.bf16.msra.mxu0 0
      %982 = vmatpush.bf16.msra.mxu0 %v476
      %983 = vmatpush.bf16.msra.mxu0 %v475
      %984 = vmatmul.bf16.gmra.mxu0 %v974
      %v985 = vpop.f32.mrf.mxu0
      %v986 = vadd.f32 0.0, %v985
      %v987 = vpop.f32.mrf.mxu0
      %988 = vdwg.mxu0
      %v989 = vadd.f32 %v968, %v986
      %v990 = vtanh.pop %v989
      %v991 = vxor.u32 %v989, 2147483648
      %v992 = vmul.f32 %v991, 1.442695
      %v993 = vpow.pop %v992
      %v994 = vadd.f32 %v993, 1.0
      %v995 = vrcp.pop %v994
      %v996 = vmul.f32 %v994, %v995
      %v997 = vsub.f32 1.0, %v996
      %v998 = vmul.f32 %v995, %v997
      %v999 = vadd.f32 %v995, %v998
      %vm1000 = vweird.f32 %v994
      %vm1001 = vweird.f32 %v995
      %vm1002 = vmor %vm1000, %vm1001
      %v1003 = vsel %vm1002, %v995, %v999
      %v1004 = vand.u32 2147483647, %v994
      %vm1005 = vcmp.eq.f32.partialorder %v1004, 8.507059e+37
      %v1006 = vand.u32 %v994, 2147483648
      %v1007 = vor.u32 1.1754944e-38, %v1006
      %v1008 = vsel %vm1005, %v1007, %v1003
      %v1009 = vmul.f32 1.0, %v1008
      %v1010 = vsel %vm459, %v990, %v1009
      %v1011 = vmul.f32 %v1010, %v951
      %1013 = vrot.lane.b32.xlu0 %v1010, 64
      %v1014 = vpop.permute.xlu0 %1013
      %v1016 = vmul.f32 %v1010, %v1014
      %1018 = vrot.lane.b32.xlu0 %v1016, 32
      %v1019 = vpop.permute.xlu0 %1018
      %v1021 = vadd.f32 %v1011, %v1019
      %v1022 = vtanh.pop %v1021
      %1024 = vrot.lane.b32.xlu0 %v1022, 64
      %v1025 = vpop.permute.xlu0 %1024
      %v1027 = vmul.f32 %v1010, %v1025
      %1029 = vrot.lane.b32.xlu0 %v1027, 32
      %v1030 = vpop.permute.xlu0 %1029
      %s1032 = scalar_lea.vmem %s386, %s966
      %1033 = vst.msk [vmem:[%s1032] sm:$0x3] %vm544, %v1030
      %1034 = vst.msk [vmem:[%s395] sm:$0x3] %vm544, %v1030
      %1036 = vrot.lane.b32.xlu0 %v1021, 96
      %v1037 = vpop.permute.xlu0 %1036
      %1039 = vst.msk [vmem:[%s399] sm:$0x3] %vm544, %v1037
      %s1040 = smul.u32 %s23, 2
      %s1041 = ssub.s32 0, %s1040
      %s1042 = smul.u32 %s22, %s1041
      %s1043 = sadd.s32 %s23, %s1042
      %s1044 = smul.u32 8, %s1043
      %p1045 = scmp.lt.s32.totalorder %s22, 1
      %s1046 = scalar_select %p1045, %s22, 1
      %p1047 = scmp.lt.s32.totalorder %s1044, 7
      %s1048 = scalar_select %p1047, %s1044, 7
      %s1049 = smul.addr %s1046, 8
      %s1050 = sadd.s32 %s1048, %s1049
      %s1051 = smul.addr %s1050, 2
      %s1052 = scalar_lea.vmem %s4, %s1051
      %p1053 = scmp.lt.s32.totalorder %s22, 1
      %s1054 = scalar_select %p1053, %s22, 1
      %s1055 = smul.addr %s1054, 2
      %s1056 = scalar_lea.vmem %s5, %s1055
      %p1057 = scmp.lt.s32.totalorder %s22, 1
      %s1058 = scalar_select %p1057, %s22, 1
      %s1059 = smul.addr %s1058, 2
      %s1060 = scalar_lea.vmem %s6, %s1059
      // Predicated region
      $region41: #{bilm_forward.4} parent=35 // pred_check
        %p1061 = pneg %p170
      $region42: #{bilm_forward.4} parent=35 // pred_check_branch
        %1063 = sbr.rel (%p1061) target = $region44
      $region43: #{bilm_forward.4} parent=35 // pred_region
        %s1064 = smul.u32 %s23, 2
        %s1065 = ssub.s32 0, %s1064
        %s1066 = smul.u32 %s22, %s1065
        %s1067 = sadd.s32 %s23, %s1066
        %s1068 = smul.u32 8, %s1067
      $region44: #{bilm_forward.4} parent=35 // pred_fallthru
        _
      // Predicated region
      $region45: #{bilm_forward.4} parent=35 // pred_check
        %p1069 = pneg %p196
      $region46: #{bilm_forward.4} parent=35 // pred_check_branch
        %1071 = sbr.rel (%p1069) target = $region48
      $region47: #{bilm_forward.4} parent=35 // pred_region
        _
      $region48: #{bilm_forward.4} parent=35 // pred_fallthru
        _
      // Predicated region
      $region49: #{bilm_forward.4} parent=35 // pred_check
        %p1072 = pneg %p222
      $region50: #{bilm_forward.4} parent=35 // pred_check_branch
        %1074 = sbr.rel (%p1072) target = $region52
      $region51: #{bilm_forward.4} parent=35 // pred_region
        _
      $region52: #{bilm_forward.4} parent=35 // pred_fallthru
        _
    $region36: #{bilm_forward.4} parent=5 // pred_fallthru
      _
    %p1075 = scmp.le.s32.totalorder 2, %s13
    // Predicated region
    $region53: #{bilm_forward.4} parent=5 // pred_check
      %p1076 = pneg %p1075
    $region54: #{bilm_forward.4} parent=5 // pred_check_branch
      %1078 = sbr.rel (%p1076) target = $region56
    $region55: #{bilm_forward.4} parent=5 // pred_region
      %s1079 = ssub.s32 %s13, 2
      // Predicated region
      $region57: #{bilm_forward.4} parent=55 // pred_check
        %p1080 = pneg %p176
      $region58: #{bilm_forward.4} parent=55 // pred_check_branch
        %1082 = sbr.rel (%p1080) target = $region60
      $region59: #{bilm_forward.4} parent=55 // pred_region
        %s1083 = smul.u32 %s25, 2
        %s1084 = ssub.s32 0, %s1083
        %s1085 = smul.u32 %s24, %s1084
        %s1086 = sadd.s32 %s25, %s1085
        %s1087 = smul.u32 8, %s1086
        %p1088 = scmp.lt.s32.totalorder %s24, 1
        %s1089 = scalar_select %p1088, %s24, 1
        %p1090 = scmp.lt.s32.totalorder %s1087, 7
        %s1091 = scalar_select %p1090, %s1087, 7
        %s1092 = smul.addr %s1089, 8
        %s1093 = sadd.s32 %s1091, %s1092
        %s1094 = smul.addr %s1093, 2
        %s1095 = scalar_lea.vmem %s4, %s1094
      $region60: #{bilm_forward.4} parent=55 // pred_fallthru
        _
      // Predicated region
      $region61: #{bilm_forward.4} parent=55 // pred_check
        %p1096 = pneg %p202
      $region62: #{bilm_forward.4} parent=55 // pred_check_branch
        %1098 = sbr.rel (%p1096) target = $region64
      $region63: #{bilm_forward.4} parent=55 // pred_region
        %p1099 = scmp.lt.s32.totalorder %s24, 1
        %s1100 = scalar_select %p1099, %s24, 1
        %s1101 = smul.addr %s1100, 2
        %s1102 = scalar_lea.vmem %s5, %s1101
      $region64: #{bilm_forward.4} parent=55 // pred_fallthru
        _
      // Predicated region
      $region65: #{bilm_forward.4} parent=55 // pred_check
        %p1103 = pneg %p228
      $region66: #{bilm_forward.4} parent=55 // pred_check_branch
        %1105 = sbr.rel (%p1103) target = $region68
      $region67: #{bilm_forward.4} parent=55 // pred_region
        %p1106 = scmp.lt.s32.totalorder %s24, 1
        %s1107 = scalar_select %p1106, %s24, 1
        %s1108 = smul.addr %s1107, 2
        %s1109 = scalar_lea.vmem %s6, %s1108
      $region68: #{bilm_forward.4} parent=55 // pred_fallthru
        _
    $region56: #{bilm_forward.4} parent=5 // pred_fallthru
      _
  $region6: #{bilm_forward.4} parent=0 // loop_footer
    %s17 = sadd.s32 1, %s13
  $region7: #{bilm_forward.4} parent=0 // loop_footer_branch
    %12 = sbr.rel target = $region3
  $region8: #{bilm_forward.4} parent=0 // loop_exit
    _

</llo_original>
